<compile_context>
chip_gen: v6e
topology: v6e:2x2x1
jax: 0.10.0
libtpu: 0.0.40
codegen_flags: <defaults>
</compile_context>

<pallas_src>
import jax
import jax.numpy as jnp
import numpy as np
from jax.experimental import pallas as pl
from jax.experimental.pallas import tpu as pltpu

GROUPS = 32
EPS = 1e-5


def _const_spec(shape):
    """BlockSpec for a grid-invariant operand: constant index_map, single-buffered."""
    index_map = lambda n: (0,) * len(shape)
    try:
        return pl.BlockSpec(shape, index_map, pipeline_mode=pl.Buffered(1))
    except Exception:  # older Pallas without pipeline_mode / Buffered(1)
        return pl.BlockSpec(shape, index_map)


def _vmem_limit_bytes(total_est_bytes):
    est = int(total_est_bytes * 1.5) + (4 << 20)        # headroom for compiler scratch
    return max(32 << 20, min(est, 56 << 20))            # <=56 MiB: safe on v7x (64 MiB)


# ------------------------- fused GN+SiLU+pad+conv(+skip) ---------------------
def _make_fused_kernel(K, dil, pad, H, W, C, Cout, skip_mode):
    """skip_mode in {"none", "identity", "conv"}. C = channels of the GN'd input."""
    HW = H * W
    Hp, Wp = H + 2 * pad, W + 2 * pad
    taps = [(i, j) for i in range(K) for j in range(K)]

    def gn_silu(x_ref, mavg_ref, gamma_ref, beta_ref):
        # f32 stats, centered (two-pass) variance to avoid E[x^2]-E[x]^2 cancellation.
        x = x_ref[0].astype(jnp.float32)                       # (HW, C)
        csum = jnp.sum(x, axis=0, keepdims=True)               # (1, C)
        # host-precomputed (C, C) same-group/(gs*HW) matrix -> per-channel group mean
        mean_c = jnp.dot(csum, mavg_ref[...], preferred_element_type=jnp.float32)
        d = x - mean_c
        vsum = jnp.sum(d * d, axis=0, keepdims=True)           # (1, C)
        var_c = jnp.dot(vsum, mavg_ref[...], preferred_element_type=jnp.float32)
        scale = jax.lax.rsqrt(var_c + EPS) * gamma_ref[...]
        y = d * scale + beta_ref[...]
        return y * jax.nn.sigmoid(y)                           # SiLU, f32

    def conv(y, w_ref, b_ref, xp_ref):
        # Write GN+SiLU interior once (single f32->bf16 cast); zero only the halo
        # strips (correct for any core/grid index; interior is rewritten each step).
        xp_ref[pad:pad + H, pad:pad + W, :] = y.reshape(H, W, C).astype(xp_ref.dtype)
        if pad > 0:
            zrow = jnp.zeros((pad, Wp, C), xp_ref.dtype)
            zcol = jnp.zeros((H, pad, C), xp_ref.dtype)
            xp_ref[0:pad, :, :] = zrow
            xp_ref[pad + H:Hp, :, :] = zrow
            xp_ref[pad:pad + H, 0:pad, :] = zcol
            xp_ref[pad:pad + H, pad + W:Wp, :] = zcol
        # Tap-accumulated MXU matmuls (no im2col buffer); f32 accumulation.
        acc = jnp.broadcast_to(b_ref[...].astype(jnp.float32), (HW, Cout))
        for t, (i, j) in enumerate(taps):
            patch = xp_ref[i * dil:i * dil + H, j * dil:j * dil + W, :]
            acc = acc + jnp.dot(patch.reshape(HW, C),
                                w_ref[t * C:(t + 1) * C, :],
                                preferred_element_type=jnp.float32)
        return acc

    if skip_mode == "none":
        def kernel(x_ref, mavg_ref, gamma_ref, beta_ref, w_ref, b_ref,
                   o_ref, xp_ref):
            y = gn_silu(x_ref, mavg_ref, gamma_ref, beta_ref)
            acc = conv(y, w_ref, b_ref, xp_ref)
            o_ref[0] = acc.astype(o_ref.dtype)
    elif skip_mode == "identity":
        def kernel(x_ref, res_ref, mavg_ref, gamma_ref, beta_ref, w_ref, b_ref,
                   o_ref, xp_ref):
            y = gn_silu(x_ref, mavg_ref, gamma_ref, beta_ref)
            acc = conv(y, w_ref, b_ref, xp_ref)
            o_ref[0] = (acc + res_ref[0].astype(jnp.float32)).astype(o_ref.dtype)
    else:  # "conv": fused 1x1 skip conv (residual already bf16)
        def kernel(x_ref, res_ref, mavg_ref, gamma_ref, beta_ref, w_ref, b_ref,
                   sw_ref, sb_ref, o_ref, xp_ref):
            y = gn_silu(x_ref, mavg_ref, gamma_ref, beta_ref)
            acc = conv(y, w_ref, b_ref, xp_ref)
            acc = acc + jnp.dot(res_ref[0], sw_ref[...],
                                preferred_element_type=jnp.float32)
            acc = acc + sb_ref[...].astype(jnp.float32)
            o_ref[0] = acc.astype(o_ref.dtype)

    return kernel


def gn_silu_conv(x, mavg, gamma, beta, wmat, bias, *, K, dil, pad, H, W,
                 residual=None, skip_w=None, skip_b=None, out_dtype=jnp.float32):
    """x: (N, H*W, C) spatial-major. residual: (N, H*W, Cres) or None.
    wmat: (K*K*C, Cout) bf16, rows ordered (i, j, c). Returns (N, H*W, Cout)."""
    N, HW, C = x.shape
    Cout = wmat.shape[-1]
    Hp, Wp = H + 2 * pad, W + 2 * pad

    if residual is None:
        skip_mode = "none"
    elif skip_w is None:
        skip_mode = "identity"
    else:
        skip_mode = "conv"
    kernel = _make_fused_kernel(K, dil, pad, H, W, C, Cout, skip_mode)

    in_specs = [pl.BlockSpec((1, HW, C), lambda n: (n, 0, 0))]
    args = [x]
    vmem_est = 2 * HW * C * x.dtype.itemsize                    # x (double-buffered)
    if residual is not None:
        Cres = residual.shape[-1]
        in_specs.append(pl.BlockSpec((1, HW, Cres), lambda n: (n, 0, 0)))
        args.append(residual)
        vmem_est += 2 * HW * Cres * residual.dtype.itemsize
    in_specs += [
        _const_spec((C, C)),                # group-average matrix (f32)
        _const_spec((1, C)),                # gamma
        _const_spec((1, C)),                # beta
        _const_spec((K * K * C, Cout)),     # conv weights (bf16)
        _const_spec((1, Cout)),             # bias
    ]
    args += [mavg, gamma, beta, wmat, bias]
    vmem_est += (C * C + 2 * C + Cout) * 4 + K * K * C * Cout * 2
    if skip_mode == "conv":
        in_specs += [_const_spec((skip_w.shape[0], Cout)), _const_spec((1, Cout))]
        args += [skip_w, skip_b]
        vmem_est += skip_w.shape[0] * Cout * 2 + Cout * 4

    out_item = jnp.dtype(out_dtype).itemsize
    vmem_est += 2 * HW * Cout * out_item                         # output (double-buffered)
    vmem_est += Hp * Wp * C * 2                                  # bf16 padded scratch
    vmem_est += HW * Cout * 4                                    # live f32 accumulator

    return pl.pallas_call(
        kernel,
        out_shape=jax.ShapeDtypeStruct((N, HW, Cout), out_dtype),
        grid=(N,),
        in_specs=in_specs,
        out_specs=pl.BlockSpec((1, HW, Cout), lambda n: (n, 0, 0)),
        scratch_shapes=[pltpu.VMEM((Hp, Wp, C), jnp.bfloat16)],  # padded activation
        compiler_params=pltpu.CompilerParams(
            dimension_semantics=("parallel",),
            vmem_limit_bytes=_vmem_limit_bytes(vmem_est),
        ),
    )(*args)


# ------------------------------- LRB forward --------------------------------
def _group_avg_matrix(C, HW):
    gs = C // GROUPS
    g = np.arange(C) // gs
    M = (g[:, None] == g[None, :]).astype(np.float32) / float(gs * HW)
    return jnp.asarray(M)


def lrb_forward_nhwc(x_nhwc, params):
    # x_nhwc: (N, H, W, Cin) -> (N, H, W, Cout). No layout transposes needed.
    N, H, W, Cin = x_nhwc.shape
    Cout = params["w1"].shape[-1]
    HW = H * W
    xs = x_nhwc.reshape(N, HW, Cin)      # free: NHWC is already spatial-major

    mavg1 = _group_avg_matrix(Cin, HW)
    mavg2 = _group_avg_matrix(Cout, HW)
    g1 = params["gn1_gamma"].reshape(1, Cin)
    bt1 = params["gn1_beta"].reshape(1, Cin)
    g2 = params["gn2_gamma"].reshape(1, Cout)
    bt2 = params["gn2_beta"].reshape(1, Cout)
    # HWIO (K,K,Cin,Cout) -> (K*K*Cin, Cout) matching the tap ordering (i, j, c).
    w1m = params["w1"].reshape(5 * 5 * Cin, Cout).astype(jnp.bfloat16)
    w2m = params["w2"].reshape(3 * 3 * Cout, Cout).astype(jnp.bfloat16)
    b1 = params["b1"].reshape(1, Cout)
    b2 = params["b2"].reshape(1, Cout)

    # Stage 1: GN(32,Cin)+SiLU+Conv5x5(pad=2); bf16 intermediate to HBM.
    h1 = gn_silu_conv(xs, mavg1, g1, bt1, w1m, b1,
                      K=5, dil=1, pad=2, H=H, W=W, out_dtype=jnp.bfloat16)

    # Stage 2: GN(32,Cout)+SiLU+Conv3x3(pad=5,dil=5) + fused skip.
    if params["skip_w"] is None:
        out = gn_silu_conv(h1, mavg2, g2, bt2, w2m, b2,
                           K=3, dil=5, pad=5, H=H, W=W,
                           residual=xs, out_dtype=x_nhwc.dtype)
    else:
        skw = params["skip_w"].reshape(Cin, Cout).astype(jnp.bfloat16)
        skb = params["skip_b"].reshape(1, Cout)
        out = gn_silu_conv(h1, mavg2, g2, bt2, w2m, b2,
                           K=3, dil=5, pad=5, H=H, W=W,
                           residual=xs.astype(jnp.bfloat16),  # skip matmul is bf16
                           skip_w=skw, skip_b=skb, out_dtype=x_nhwc.dtype)
    return out.reshape(N, H, W, Cout)


def lrb_forward(x_nchw, params):
    # x_nchw: (N, Cin, H, W) -> (N, Cout, H, W), matching the PyTorch module.
    # TODO(synk): keep the surrounding model NHWC end-to-end (use lrb_forward_nhwc)
    # to drop these two boundary transposes (full HBM round trips outside the kernels).
    x_nhwc = jnp.transpose(x_nchw, (0, 2, 3, 1))
    out = lrb_forward_nhwc(x_nhwc, params)
    return jnp.transpose(out, (0, 3, 1, 2))


# ----------------------------- pure-JAX reference ----------------------------
def _ref_gn_silu(x, gamma, beta):
    N, C, H, W = x.shape
    xg = x.reshape(N, GROUPS, (C // GROUPS) * H * W)
    mean = xg.mean(-1, keepdims=True)
    var = ((xg - mean) ** 2).mean(-1, keepdims=True)
    xn = ((xg - mean) / jnp.sqrt(var + EPS)).reshape(N, C, H, W)
    y = xn * gamma[None, :, None, None] + beta[None, :, None, None]
    return y * jax.nn.sigmoid(y)


def _ref_conv(x, w_hwio, b, pad, dil):
    y = jax.lax.conv_general_dilated(
        x, w_hwio, window_strides=(1, 1),
        padding=((pad, pad), (pad, pad)),
        rhs_dilation=(dil, dil),
        dimension_numbers=("NCHW", "HWIO", "NCHW"))
    return y + b[None, :, None, None]


def ref_forward(x, p):
    h = _ref_conv(_ref_gn_silu(x, p["gn1_gamma"], p["gn1_beta"]), p["w1"], p["b1"], 2, 1)
    skip = x if p["skip_w"] is None else _ref_conv(x, p["skip_w"], p["skip_b"], 0, 1)
    h = _ref_conv(_ref_gn_silu(h, p["gn2_gamma"], p["gn2_beta"]), p["w2"], p["b2"], 5, 5)
    return h + skip


# ----------------------------------- main ------------------------------------
def make_params(key, cin, cout):
    ks = jax.random.split(key, 8)
    scale = 0.05
    p = {
        "gn1_gamma": 1.0 + 0.1 * jax.random.normal(ks[0], (cin,), jnp.float32),
        "gn1_beta": 0.1 * jax.random.normal(ks[1], (cin,), jnp.float32),
        "w1": scale * jax.random.normal(ks[2], (5, 5, cin, cout), jnp.float32),
        "b1": 0.1 * jax.random.normal(ks[3], (cout,), jnp.float32),
        "gn2_gamma": 1.0 + 0.1 * jax.random.normal(ks[4], (cout,), jnp.float32),
        "gn2_beta": 0.1 * jax.random.normal(ks[5], (cout,), jnp.float32),
        "w2": scale * jax.random.normal(ks[6], (3, 3, cout, cout), jnp.float32),
        "b2": 0.1 * jax.random.normal(ks[7], (cout,), jnp.float32),
    }
    if cin == cout:
        p["skip_w"] = None
        p["skip_b"] = None
    else:
        ks2 = jax.random.split(ks[7], 2)
        p["skip_w"] = scale * jax.random.normal(ks2[0], (1, 1, cin, cout), jnp.float32)
        p["skip_b"] = 0.1 * jax.random.normal(ks2[1], (cout,), jnp.float32)
    return p


if __name__ == "__main__":
    key = jax.random.PRNGKey(0)
    kx, kp, kx2, kp2 = jax.random.split(key, 4)

    # Case 1: in_channels != out_channels -> fused 1x1 skip conv.
    N, Cin, Cout, H, W = 2, 32, 64, 8, 8      # GroupNorm(32, C) needs C % 32 == 0
    x = jax.random.normal(kx, (N, Cin, H, W), jnp.float32)
    params = make_params(kp, Cin, Cout)
    out = jax.block_until_ready(lrb_forward(x, params))
    ref = jax.block_until_ready(ref_forward(x, params))
    assert out.shape == (N, Cout, H, W), out.shape
    # bf16 MXU operands + bf16 intermediate -> slightly looser tolerance than f32.
    np.testing.assert_allclose(np.asarray(out), np.asarray(ref), rtol=2e-2, atol=2e-2)

    # Case 2: in_channels == out_channels -> identity skip.
    x2 = jax.random.normal(kx2, (N, 32, H, W), jnp.float32)
    params2 = make_params(kp2, 32, 32)
    out2 = jax.block_until_ready(lrb_forward(x2, params2))
    ref2 = jax.block_until_ready(ref_forward(x2, params2))
    assert out2.shape == (N, 32, H, W), out2.shape
    np.testing.assert_allclose(np.asarray(out2), np.asarray(ref2), rtol=2e-2, atol=2e-2)

    print("KERNEL_OK")
</pallas_src>

<mosaic_0001>
module attributes {stable_mosaic.version = 11 : i64} {
  func.func @kernel(%arg0: i32, %arg1: memref<1x64x32xf32, #tpu.memory_space<vmem>>, %arg2: memref<32x32xf32, #tpu.memory_space<vmem>>, %arg3: memref<1x32xf32, #tpu.memory_space<vmem>>, %arg4: memref<1x32xf32, #tpu.memory_space<vmem>>, %arg5: memref<800x64xbf16, #tpu.memory_space<vmem>>, %arg6: memref<1x64xf32, #tpu.memory_space<vmem>>, %arg7: memref<1x64x64xbf16, #tpu.memory_space<vmem>>, %arg8: memref<12x12x32xbf16, #tpu.memory_space<vmem>>) attributes {dimension_semantics = [#tpu.dimension_semantics<parallel>], iteration_bounds = array<i64: 2>, scalar_prefetch = 0 : i64, scratch_operands = 1 : i64, tpu.core_type = #tpu.core_type<tc>, window_params = [{transform_indices = @transform_0, window_bounds = array<i64: 1, 64, 32>}, {pipeline_mode = #tpu.pipeline_mode<synchronous>, transform_indices = @transform_1, window_bounds = array<i64: 32, 32>}, {pipeline_mode = #tpu.pipeline_mode<synchronous>, transform_indices = @transform_2, window_bounds = array<i64: 1, 32>}, {pipeline_mode = #tpu.pipeline_mode<synchronous>, transform_indices = @transform_3, window_bounds = array<i64: 1, 32>}, {pipeline_mode = #tpu.pipeline_mode<synchronous>, transform_indices = @transform_4, window_bounds = array<i64: 800, 64>}, {pipeline_mode = #tpu.pipeline_mode<synchronous>, transform_indices = @transform_5, window_bounds = array<i64: 1, 64>}, {transform_indices = @transform_6, window_bounds = array<i64: 1, 64, 64>}]} {
    %c0 = arith.constant 0 : index
    %c0_0 = arith.constant 0 : index
    %c0_1 = arith.constant 0 : index
    %0 = vector.load %arg1[%c0, %c0_0, %c0_1] : memref<1x64x32xf32, #tpu.memory_space<vmem>>, vector<1x64x32xf32>
    %1 = vector.shape_cast %0 : vector<1x64x32xf32> to vector<64x32xf32>
    %cst = arith.constant dense<0.000000e+00> : vector<32xf32>
    %2 = vector.multi_reduction <add>, %1, %cst [0] : vector<64x32xf32> to vector<32xf32>
    %3 = vector.shape_cast %2 : vector<32xf32> to vector<1x32xf32>
    %c0_2 = arith.constant 0 : index
    %c0_3 = arith.constant 0 : index
    %4 = vector.load %arg2[%c0_2, %c0_3] : memref<32x32xf32, #tpu.memory_space<vmem>>, vector<32x32xf32>
    %cst_4 = arith.constant dense<0.000000e+00> : vector<1x32xf32>
    %5 = tpu.matmul %3, %4, %cst_4 {dimension_numbers = #tpu.dot_dimension_numbers<[1], [0], [0], [1], [0, 0, 1, 1], [], []>} : vector<1x32xf32>, vector<32x32xf32>, vector<1x32xf32> -> vector<1x32xf32>
    %6 = vector.broadcast %5 : vector<1x32xf32> to vector<64x32xf32>
    %7 = arith.subf %1, %6 : vector<64x32xf32>
    %8 = arith.mulf %7, %7 : vector<64x32xf32>
    %cst_5 = arith.constant dense<0.000000e+00> : vector<32xf32>
    %9 = vector.multi_reduction <add>, %8, %cst_5 [0] : vector<64x32xf32> to vector<32xf32>
    %10 = vector.shape_cast %9 : vector<32xf32> to vector<1x32xf32>
    %c0_6 = arith.constant 0 : index
    %c0_7 = arith.constant 0 : index
    %11 = vector.load %arg2[%c0_6, %c0_7] : memref<32x32xf32, #tpu.memory_space<vmem>>, vector<32x32xf32>
    %cst_8 = arith.constant dense<0.000000e+00> : vector<1x32xf32>
    %12 = tpu.matmul %10, %11, %cst_8 {dimension_numbers = #tpu.dot_dimension_numbers<[1], [0], [0], [1], [0, 0, 1, 1], [], []>} : vector<1x32xf32>, vector<32x32xf32>, vector<1x32xf32> -> vector<1x32xf32>
    %cst_9 = arith.constant 9.99999974E-6 : f32
    %13 = vector.broadcast %cst_9 : f32 to vector<1x32xf32>
    %14 = arith.addf %12, %13 : vector<1x32xf32>
    %15 = math.rsqrt %14 : vector<1x32xf32>
    %c0_10 = arith.constant 0 : index
    %c0_11 = arith.constant 0 : index
    %16 = vector.load %arg3[%c0_10, %c0_11] : memref<1x32xf32, #tpu.memory_space<vmem>>, vector<1x32xf32>
    %17 = arith.mulf %15, %16 : vector<1x32xf32>
    %18 = vector.broadcast %17 : vector<1x32xf32> to vector<64x32xf32>
    %19 = arith.mulf %7, %18 : vector<64x32xf32>
    %c0_12 = arith.constant 0 : index
    %c0_13 = arith.constant 0 : index
    %20 = vector.load %arg4[%c0_12, %c0_13] : memref<1x32xf32, #tpu.memory_space<vmem>>, vector<1x32xf32>
    %21 = vector.broadcast %20 : vector<1x32xf32> to vector<64x32xf32>
    %22 = arith.addf %19, %21 : vector<64x32xf32>
    %23 = arith.negf %22 : vector<64x32xf32>
    %24 = math.exp %23 : vector<64x32xf32>
    %cst_14 = arith.constant 1.000000e+00 : f32
    %25 = vector.broadcast %cst_14 : f32 to vector<64x32xf32>
    %26 = arith.addf %25, %24 : vector<64x32xf32>
    %27 = arith.divf %25, %26 : vector<64x32xf32>
    %28 = arith.mulf %22, %27 : vector<64x32xf32>
    %29 = vector.shape_cast %28 : vector<64x32xf32> to vector<8x8x32xf32>
    %30 = arith.truncf %29 : vector<8x8x32xf32> to vector<8x8x32xbf16>
    %c2 = arith.constant 2 : index
    %c2_15 = arith.constant 2 : index
    %c0_16 = arith.constant 0 : index
    %31 = vector.load %arg8[%c2, %c2_15, %c0_16] : memref<12x12x32xbf16, #tpu.memory_space<vmem>>, vector<8x8x32xbf16>
    tpu.vector_store %arg8[%c2, %c2_15, %c0_16], %30 {strides = array<i32>} : memref<12x12x32xbf16, #tpu.memory_space<vmem>>, vector<8x8x32xbf16>,
    %cst_17 = arith.constant 0.000000e+00 : bf16
    %32 = vector.broadcast %cst_17 : bf16 to vector<2x12x32xbf16>
    %cst_18 = arith.constant 0.000000e+00 : bf16
    %33 = vector.broadcast %cst_18 : bf16 to vector<8x2x32xbf16>
    %c0_19 = arith.constant 0 : index
    %c0_20 = arith.constant 0 : index
    %c0_21 = arith.constant 0 : index
    %34 = vector.load %arg8[%c0_19, %c0_20, %c0_21] : memref<12x12x32xbf16, #tpu.memory_space<vmem>>, vector<2x12x32xbf16>
    tpu.vector_store %arg8[%c0_19, %c0_20, %c0_21], %32 {strides = array<i32>} : memref<12x12x32xbf16, #tpu.memory_space<vmem>>, vector<2x12x32xbf16>,
    %c10 = arith.constant 10 : index
    %c0_22 = arith.constant 0 : index
    %c0_23 = arith.constant 0 : index
    %35 = vector.load %arg8[%c10, %c0_22, %c0_23] : memref<12x12x32xbf16, #tpu.memory_space<vmem>>, vector<2x12x32xbf16>
    tpu.vector_store %arg8[%c10, %c0_22, %c0_23], %32 {strides = array<i32>} : memref<12x12x32xbf16, #tpu.memory_space<vmem>>, vector<2x12x32xbf16>,
    %c2_24 = arith.constant 2 : index
    %c0_25 = arith.constant 0 : index
    %c0_26 = arith.constant 0 : index
    %36 = vector.load %arg8[%c2_24, %c0_25, %c0_26] : memref<12x12x32xbf16, #tpu.memory_space<vmem>>, vector<8x2x32xbf16>
    tpu.vector_store %arg8[%c2_24, %c0_25, %c0_26], %33 {strides = array<i32>} : memref<12x12x32xbf16, #tpu.memory_space<vmem>>, vector<8x2x32xbf16>,
    %c2_27 = arith.constant 2 : index
    %c10_28 = arith.constant 10 : index
    %c0_29 = arith.constant 0 : index
    %37 = vector.load %arg8[%c2_27, %c10_28, %c0_29] : memref<12x12x32xbf16, #tpu.memory_space<vmem>>, vector<8x2x32xbf16>
    tpu.vector_store %arg8[%c2_27, %c10_28, %c0_29], %33 {strides = array<i32>} : memref<12x12x32xbf16, #tpu.memory_space<vmem>>, vector<8x2x32xbf16>,
    %c0_30 = arith.constant 0 : index
    %c0_31 = arith.constant 0 : index
    %38 = vector.load %arg6[%c0_30, %c0_31] : memref<1x64xf32, #tpu.memory_space<vmem>>, vector<1x64xf32>
    %39 = vector.shape_cast %38 : vector<1x64xf32> to vector<1x64xf32>
    %40 = vector.broadcast %39 : vector<1x64xf32> to vector<64x64xf32>
    %c0_32 = arith.constant 0 : index
    %c0_33 = arith.constant 0 : index
    %c0_34 = arith.constant 0 : index
    %41 = vector.load %arg8[%c0_32, %c0_33, %c0_34] : memref<12x12x32xbf16, #tpu.memory_space<vmem>>, vector<8x8x32xbf16>
    %42 = vector.shape_cast %41 : vector<8x8x32xbf16> to vector<64x32xbf16>
    %c0_35 = arith.constant 0 : index
    %c0_36 = arith.constant 0 : index
    %43 = vector.load %arg5[%c0_35, %c0_36] : memref<800x64xbf16, #tpu.memory_space<vmem>>, vector<32x64xbf16>
    %cst_37 = arith.constant dense<0.000000e+00> : vector<64x64xf32>
    %44 = tpu.matmul %42, %43, %cst_37 {dimension_numbers = #tpu.dot_dimension_numbers<[1], [0], [0], [1], [0, 0, 1, 1], [], []>} : vector<64x32xbf16>, vector<32x64xbf16>, vector<64x64xf32> -> vector<64x64xf32>
    %45 = arith.addf %40, %44 : vector<64x64xf32>
    %c0_38 = arith.constant 0 : index
    %c1 = arith.constant 1 : index
    %c0_39 = arith.constant 0 : index
    %46 = vector.load %arg8[%c0_38, %c1, %c0_39] : memref<12x12x32xbf16, #tpu.memory_space<vmem>>, vector<8x8x32xbf16>
    %47 = vector.shape_cast %46 : vector<8x8x32xbf16> to vector<64x32xbf16>
    %c32 = arith.constant 32 : index
    %c0_40 = arith.constant 0 : index
    %48 = vector.load %arg5[%c32, %c0_40] : memref<800x64xbf16, #tpu.memory_space<vmem>>, vector<32x64xbf16>
    %cst_41 = arith.constant dense<0.000000e+00> : vector<64x64xf32>
    %49 = tpu.matmul %47, %48, %cst_41 {dimension_numbers = #tpu.dot_dimension_numbers<[1], [0], [0], [1], [0, 0, 1, 1], [], []>} : vector<64x32xbf16>, vector<32x64xbf16>, vector<64x64xf32> -> vector<64x64xf32>
    %50 = arith.addf %45, %49 : vector<64x64xf32>
    %c0_42 = arith.constant 0 : index
    %c2_43 = arith.constant 2 : index
    %c0_44 = arith.constant 0 : index
    %51 = vector.load %arg8[%c0_42, %c2_43, %c0_44] : memref<12x12x32xbf16, #tpu.memory_space<vmem>>, vector<8x8x32xbf16>
    %52 = vector.shape_cast %51 : vector<8x8x32xbf16> to vector<64x32xbf16>
    %c64 = arith.constant 64 : index
    %c0_45 = arith.constant 0 : index
    %53 = vector.load %arg5[%c64, %c0_45] : memref<800x64xbf16, #tpu.memory_space<vmem>>, vector<32x64xbf16>
    %cst_46 = arith.constant dense<0.000000e+00> : vector<64x64xf32>
    %54 = tpu.matmul %52, %53, %cst_46 {dimension_numbers = #tpu.dot_dimension_numbers<[1], [0], [0], [1], [0, 0, 1, 1], [], []>} : vector<64x32xbf16>, vector<32x64xbf16>, vector<64x64xf32> -> vector<64x64xf32>
    %55 = arith.addf %50, %54 : vector<64x64xf32>
    %c0_47 = arith.constant 0 : index
    %c3 = arith.constant 3 : index
    %c0_48 = arith.constant 0 : index
    %56 = vector.load %arg8[%c0_47, %c3, %c0_48] : memref<12x12x32xbf16, #tpu.memory_space<vmem>>, vector<8x8x32xbf16>
    %57 = vector.shape_cast %56 : vector<8x8x32xbf16> to vector<64x32xbf16>
    %c96 = arith.constant 96 : index
    %c0_49 = arith.constant 0 : index
    %58 = vector.load %arg5[%c96, %c0_49] : memref<800x64xbf16, #tpu.memory_space<vmem>>, vector<32x64xbf16>
    %cst_50 = arith.constant dense<0.000000e+00> : vector<64x64xf32>
    %59 = tpu.matmul %57, %58, %cst_50 {dimension_numbers = #tpu.dot_dimension_numbers<[1], [0], [0], [1], [0, 0, 1, 1], [], []>} : vector<64x32xbf16>, vector<32x64xbf16>, vector<64x64xf32> -> vector<64x64xf32>
    %60 = arith.addf %55, %59 : vector<64x64xf32>
    %c0_51 = arith.constant 0 : index
    %c4 = arith.constant 4 : index
    %c0_52 = arith.constant 0 : index
    %61 = vector.load %arg8[%c0_51, %c4, %c0_52] : memref<12x12x32xbf16, #tpu.memory_space<vmem>>, vector<8x8x32xbf16>
    %62 = vector.shape_cast %61 : vector<8x8x32xbf16> to vector<64x32xbf16>
    %c128 = arith.constant 128 : index
    %c0_53 = arith.constant 0 : index
    %63 = vector.load %arg5[%c128, %c0_53] : memref<800x64xbf16, #tpu.memory_space<vmem>>, vector<32x64xbf16>
    %cst_54 = arith.constant dense<0.000000e+00> : vector<64x64xf32>
    %64 = tpu.matmul %62, %63, %cst_54 {dimension_numbers = #tpu.dot_dimension_numbers<[1], [0], [0], [1], [0, 0, 1, 1], [], []>} : vector<64x32xbf16>, vector<32x64xbf16>, vector<64x64xf32> -> vector<64x64xf32>
    %65 = arith.addf %60, %64 : vector<64x64xf32>
    %c1_55 = arith.constant 1 : index
    %c0_56 = arith.constant 0 : index
    %c0_57 = arith.constant 0 : index
    %66 = vector.load %arg8[%c1_55, %c0_56, %c0_57] : memref<12x12x32xbf16, #tpu.memory_space<vmem>>, vector<8x8x32xbf16>
    %67 = vector.shape_cast %66 : vector<8x8x32xbf16> to vector<64x32xbf16>
    %c160 = arith.constant 160 : index
    %c0_58 = arith.constant 0 : index
    %68 = vector.load %arg5[%c160, %c0_58] : memref<800x64xbf16, #tpu.memory_space<vmem>>, vector<32x64xbf16>
    %cst_59 = arith.constant dense<0.000000e+00> : vector<64x64xf32>
    %69 = tpu.matmul %67, %68, %cst_59 {dimension_numbers = #tpu.dot_dimension_numbers<[1], [0], [0], [1], [0, 0, 1, 1], [], []>} : vector<64x32xbf16>, vector<32x64xbf16>, vector<64x64xf32> -> vector<64x64xf32>
    %70 = arith.addf %65, %69 : vector<64x64xf32>
    %c1_60 = arith.constant 1 : index
    %c1_61 = arith.constant 1 : index
    %c0_62 = arith.constant 0 : index
    %71 = vector.load %arg8[%c1_60, %c1_61, %c0_62] : memref<12x12x32xbf16, #tpu.memory_space<vmem>>, vector<8x8x32xbf16>
    %72 = vector.shape_cast %71 : vector<8x8x32xbf16> to vector<64x32xbf16>
    %c192 = arith.constant 192 : index
    %c0_63 = arith.constant 0 : index
    %73 = vector.load %arg5[%c192, %c0_63] : memref<800x64xbf16, #tpu.memory_space<vmem>>, vector<32x64xbf16>
    %cst_64 = arith.constant dense<0.000000e+00> : vector<64x64xf32>
    %74 = tpu.matmul %72, %73, %cst_64 {dimension_numbers = #tpu.dot_dimension_numbers<[1], [0], [0], [1], [0, 0, 1, 1], [], []>} : vector<64x32xbf16>, vector<32x64xbf16>, vector<64x64xf32> -> vector<64x64xf32>
    %75 = arith.addf %70, %74 : vector<64x64xf32>
    %c1_65 = arith.constant 1 : index
    %c2_66 = arith.constant 2 : index
    %c0_67 = arith.constant 0 : index
    %76 = vector.load %arg8[%c1_65, %c2_66, %c0_67] : memref<12x12x32xbf16, #tpu.memory_space<vmem>>, vector<8x8x32xbf16>
    %77 = vector.shape_cast %76 : vector<8x8x32xbf16> to vector<64x32xbf16>
    %c224 = arith.constant 224 : index
    %c0_68 = arith.constant 0 : index
    %78 = vector.load %arg5[%c224, %c0_68] : memref<800x64xbf16, #tpu.memory_space<vmem>>, vector<32x64xbf16>
    %cst_69 = arith.constant dense<0.000000e+00> : vector<64x64xf32>
    %79 = tpu.matmul %77, %78, %cst_69 {dimension_numbers = #tpu.dot_dimension_numbers<[1], [0], [0], [1], [0, 0, 1, 1], [], []>} : vector<64x32xbf16>, vector<32x64xbf16>, vector<64x64xf32> -> vector<64x64xf32>
    %80 = arith.addf %75, %79 : vector<64x64xf32>
    %c1_70 = arith.constant 1 : index
    %c3_71 = arith.constant 3 : index
    %c0_72 = arith.constant 0 : index
    %81 = vector.load %arg8[%c1_70, %c3_71, %c0_72] : memref<12x12x32xbf16, #tpu.memory_space<vmem>>, vector<8x8x32xbf16>
    %82 = vector.shape_cast %81 : vector<8x8x32xbf16> to vector<64x32xbf16>
    %c256 = arith.constant 256 : index
    %c0_73 = arith.constant 0 : index
    %83 = vector.load %arg5[%c256, %c0_73] : memref<800x64xbf16, #tpu.memory_space<vmem>>, vector<32x64xbf16>
    %cst_74 = arith.constant dense<0.000000e+00> : vector<64x64xf32>
    %84 = tpu.matmul %82, %83, %cst_74 {dimension_numbers = #tpu.dot_dimension_numbers<[1], [0], [0], [1], [0, 0, 1, 1], [], []>} : vector<64x32xbf16>, vector<32x64xbf16>, vector<64x64xf32> -> vector<64x64xf32>
    %85 = arith.addf %80, %84 : vector<64x64xf32>
    %c1_75 = arith.constant 1 : index
    %c4_76 = arith.constant 4 : index
    %c0_77 = arith.constant 0 : index
    %86 = vector.load %arg8[%c1_75, %c4_76, %c0_77] : memref<12x12x32xbf16, #tpu.memory_space<vmem>>, vector<8x8x32xbf16>
    %87 = vector.shape_cast %86 : vector<8x8x32xbf16> to vector<64x32xbf16>
    %c288 = arith.constant 288 : index
    %c0_78 = arith.constant 0 : index
    %88 = vector.load %arg5[%c288, %c0_78] : memref<800x64xbf16, #tpu.memory_space<vmem>>, vector<32x64xbf16>
    %cst_79 = arith.constant dense<0.000000e+00> : vector<64x64xf32>
    %89 = tpu.matmul %87, %88, %cst_79 {dimension_numbers = #tpu.dot_dimension_numbers<[1], [0], [0], [1], [0, 0, 1, 1], [], []>} : vector<64x32xbf16>, vector<32x64xbf16>, vector<64x64xf32> -> vector<64x64xf32>
    %90 = arith.addf %85, %89 : vector<64x64xf32>
    %c2_80 = arith.constant 2 : index
    %c0_81 = arith.constant 0 : index
    %c0_82 = arith.constant 0 : index
    %91 = vector.load %arg8[%c2_80, %c0_81, %c0_82] : memref<12x12x32xbf16, #tpu.memory_space<vmem>>, vector<8x8x32xbf16>
    %92 = vector.shape_cast %91 : vector<8x8x32xbf16> to vector<64x32xbf16>
    %c320 = arith.constant 320 : index
    %c0_83 = arith.constant 0 : index
    %93 = vector.load %arg5[%c320, %c0_83] : memref<800x64xbf16, #tpu.memory_space<vmem>>, vector<32x64xbf16>
    %cst_84 = arith.constant dense<0.000000e+00> : vector<64x64xf32>
    %94 = tpu.matmul %92, %93, %cst_84 {dimension_numbers = #tpu.dot_dimension_numbers<[1], [0], [0], [1], [0, 0, 1, 1], [], []>} : vector<64x32xbf16>, vector<32x64xbf16>, vector<64x64xf32> -> vector<64x64xf32>
    %95 = arith.addf %90, %94 : vector<64x64xf32>
    %c2_85 = arith.constant 2 : index
    %c1_86 = arith.constant 1 : index
    %c0_87 = arith.constant 0 : index
    %96 = vector.load %arg8[%c2_85, %c1_86, %c0_87] : memref<12x12x32xbf16, #tpu.memory_space<vmem>>, vector<8x8x32xbf16>
    %97 = vector.shape_cast %96 : vector<8x8x32xbf16> to vector<64x32xbf16>
    %c352 = arith.constant 352 : index
    %c0_88 = arith.constant 0 : index
    %98 = vector.load %arg5[%c352, %c0_88] : memref<800x64xbf16, #tpu.memory_space<vmem>>, vector<32x64xbf16>
    %cst_89 = arith.constant dense<0.000000e+00> : vector<64x64xf32>
    %99 = tpu.matmul %97, %98, %cst_89 {dimension_numbers = #tpu.dot_dimension_numbers<[1], [0], [0], [1], [0, 0, 1, 1], [], []>} : vector<64x32xbf16>, vector<32x64xbf16>, vector<64x64xf32> -> vector<64x64xf32>
    %100 = arith.addf %95, %99 : vector<64x64xf32>
    %c2_90 = arith.constant 2 : index
    %c2_91 = arith.constant 2 : index
    %c0_92 = arith.constant 0 : index
    %101 = vector.load %arg8[%c2_90, %c2_91, %c0_92] : memref<12x12x32xbf16, #tpu.memory_space<vmem>>, vector<8x8x32xbf16>
    %102 = vector.shape_cast %101 : vector<8x8x32xbf16> to vector<64x32xbf16>
    %c384 = arith.constant 384 : index
    %c0_93 = arith.constant 0 : index
    %103 = vector.load %arg5[%c384, %c0_93] : memref<800x64xbf16, #tpu.memory_space<vmem>>, vector<32x64xbf16>
    %cst_94 = arith.constant dense<0.000000e+00> : vector<64x64xf32>
    %104 = tpu.matmul %102, %103, %cst_94 {dimension_numbers = #tpu.dot_dimension_numbers<[1], [0], [0], [1], [0, 0, 1, 1], [], []>} : vector<64x32xbf16>, vector<32x64xbf16>, vector<64x64xf32> -> vector<64x64xf32>
    %105 = arith.addf %100, %104 : vector<64x64xf32>
    %c2_95 = arith.constant 2 : index
    %c3_96 = arith.constant 3 : index
    %c0_97 = arith.constant 0 : index
    %106 = vector.load %arg8[%c2_95, %c3_96, %c0_97] : memref<12x12x32xbf16, #tpu.memory_space<vmem>>, vector<8x8x32xbf16>
    %107 = vector.shape_cast %106 : vector<8x8x32xbf16> to vector<64x32xbf16>
    %c416 = arith.constant 416 : index
    %c0_98 = arith.constant 0 : index
    %108 = vector.load %arg5[%c416, %c0_98] : memref<800x64xbf16, #tpu.memory_space<vmem>>, vector<32x64xbf16>
    %cst_99 = arith.constant dense<0.000000e+00> : vector<64x64xf32>
    %109 = tpu.matmul %107, %108, %cst_99 {dimension_numbers = #tpu.dot_dimension_numbers<[1], [0], [0], [1], [0, 0, 1, 1], [], []>} : vector<64x32xbf16>, vector<32x64xbf16>, vector<64x64xf32> -> vector<64x64xf32>
    %110 = arith.addf %105, %109 : vector<64x64xf32>
    %c2_100 = arith.constant 2 : index
    %c4_101 = arith.constant 4 : index
    %c0_102 = arith.constant 0 : index
    %111 = vector.load %arg8[%c2_100, %c4_101, %c0_102] : memref<12x12x32xbf16, #tpu.memory_space<vmem>>, vector<8x8x32xbf16>
    %112 = vector.shape_cast %111 : vector<8x8x32xbf16> to vector<64x32xbf16>
    %c448 = arith.constant 448 : index
    %c0_103 = arith.constant 0 : index
    %113 = vector.load %arg5[%c448, %c0_103] : memref<800x64xbf16, #tpu.memory_space<vmem>>, vector<32x64xbf16>
    %cst_104 = arith.constant dense<0.000000e+00> : vector<64x64xf32>
    %114 = tpu.matmul %112, %113, %cst_104 {dimension_numbers = #tpu.dot_dimension_numbers<[1], [0], [0], [1], [0, 0, 1, 1], [], []>} : vector<64x32xbf16>, vector<32x64xbf16>, vector<64x64xf32> -> vector<64x64xf32>
    %115 = arith.addf %110, %114 : vector<64x64xf32>
    %c3_105 = arith.constant 3 : index
    %c0_106 = arith.constant 0 : index
    %c0_107 = arith.constant 0 : index
    %116 = vector.load %arg8[%c3_105, %c0_106, %c0_107] : memref<12x12x32xbf16, #tpu.memory_space<vmem>>, vector<8x8x32xbf16>
    %117 = vector.shape_cast %116 : vector<8x8x32xbf16> to vector<64x32xbf16>
    %c480 = arith.constant 480 : index
    %c0_108 = arith.constant 0 : index
    %118 = vector.load %arg5[%c480, %c0_108] : memref<800x64xbf16, #tpu.memory_space<vmem>>, vector<32x64xbf16>
    %cst_109 = arith.constant dense<0.000000e+00> : vector<64x64xf32>
    %119 = tpu.matmul %117, %118, %cst_109 {dimension_numbers = #tpu.dot_dimension_numbers<[1], [0], [0], [1], [0, 0, 1, 1], [], []>} : vector<64x32xbf16>, vector<32x64xbf16>, vector<64x64xf32> -> vector<64x64xf32>
    %120 = arith.addf %115, %119 : vector<64x64xf32>
    %c3_110 = arith.constant 3 : index
    %c1_111 = arith.constant 1 : index
    %c0_112 = arith.constant 0 : index
    %121 = vector.load %arg8[%c3_110, %c1_111, %c0_112] : memref<12x12x32xbf16, #tpu.memory_space<vmem>>, vector<8x8x32xbf16>
    %122 = vector.shape_cast %121 : vector<8x8x32xbf16> to vector<64x32xbf16>
    %c512 = arith.constant 512 : index
    %c0_113 = arith.constant 0 : index
    %123 = vector.load %arg5[%c512, %c0_113] : memref<800x64xbf16, #tpu.memory_space<vmem>>, vector<32x64xbf16>
    %cst_114 = arith.constant dense<0.000000e+00> : vector<64x64xf32>
    %124 = tpu.matmul %122, %123, %cst_114 {dimension_numbers = #tpu.dot_dimension_numbers<[1], [0], [0], [1], [0, 0, 1, 1], [], []>} : vector<64x32xbf16>, vector<32x64xbf16>, vector<64x64xf32> -> vector<64x64xf32>
    %125 = arith.addf %120, %124 : vector<64x64xf32>
    %c3_115 = arith.constant 3 : index
    %c2_116 = arith.constant 2 : index
    %c0_117 = arith.constant 0 : index
    %126 = vector.load %arg8[%c3_115, %c2_116, %c0_117] : memref<12x12x32xbf16, #tpu.memory_space<vmem>>, vector<8x8x32xbf16>
    %127 = vector.shape_cast %126 : vector<8x8x32xbf16> to vector<64x32xbf16>
    %c544 = arith.constant 544 : index
    %c0_118 = arith.constant 0 : index
    %128 = vector.load %arg5[%c544, %c0_118] : memref<800x64xbf16, #tpu.memory_space<vmem>>, vector<32x64xbf16>
    %cst_119 = arith.constant dense<0.000000e+00> : vector<64x64xf32>
    %129 = tpu.matmul %127, %128, %cst_119 {dimension_numbers = #tpu.dot_dimension_numbers<[1], [0], [0], [1], [0, 0, 1, 1], [], []>} : vector<64x32xbf16>, vector<32x64xbf16>, vector<64x64xf32> -> vector<64x64xf32>
    %130 = arith.addf %125, %129 : vector<64x64xf32>
    %c3_120 = arith.constant 3 : index
    %c3_121 = arith.constant 3 : index
    %c0_122 = arith.constant 0 : index
    %131 = vector.load %arg8[%c3_120, %c3_121, %c0_122] : memref<12x12x32xbf16, #tpu.memory_space<vmem>>, vector<8x8x32xbf16>
    %132 = vector.shape_cast %131 : vector<8x8x32xbf16> to vector<64x32xbf16>
    %c576 = arith.constant 576 : index
    %c0_123 = arith.constant 0 : index
    %133 = vector.load %arg5[%c576, %c0_123] : memref<800x64xbf16, #tpu.memory_space<vmem>>, vector<32x64xbf16>
    %cst_124 = arith.constant dense<0.000000e+00> : vector<64x64xf32>
    %134 = tpu.matmul %132, %133, %cst_124 {dimension_numbers = #tpu.dot_dimension_numbers<[1], [0], [0], [1], [0, 0, 1, 1], [], []>} : vector<64x32xbf16>, vector<32x64xbf16>, vector<64x64xf32> -> vector<64x64xf32>
    %135 = arith.addf %130, %134 : vector<64x64xf32>
    %c3_125 = arith.constant 3 : index
    %c4_126 = arith.constant 4 : index
    %c0_127 = arith.constant 0 : index
    %136 = vector.load %arg8[%c3_125, %c4_126, %c0_127] : memref<12x12x32xbf16, #tpu.memory_space<vmem>>, vector<8x8x32xbf16>
    %137 = vector.shape_cast %136 : vector<8x8x32xbf16> to vector<64x32xbf16>
    %c608 = arith.constant 608 : index
    %c0_128 = arith.constant 0 : index
    %138 = vector.load %arg5[%c608, %c0_128] : memref<800x64xbf16, #tpu.memory_space<vmem>>, vector<32x64xbf16>
    %cst_129 = arith.constant dense<0.000000e+00> : vector<64x64xf32>
    %139 = tpu.matmul %137, %138, %cst_129 {dimension_numbers = #tpu.dot_dimension_numbers<[1], [0], [0], [1], [0, 0, 1, 1], [], []>} : vector<64x32xbf16>, vector<32x64xbf16>, vector<64x64xf32> -> vector<64x64xf32>
    %140 = arith.addf %135, %139 : vector<64x64xf32>
    %c4_130 = arith.constant 4 : index
    %c0_131 = arith.constant 0 : index
    %c0_132 = arith.constant 0 : index
    %141 = vector.load %arg8[%c4_130, %c0_131, %c0_132] : memref<12x12x32xbf16, #tpu.memory_space<vmem>>, vector<8x8x32xbf16>
    %142 = vector.shape_cast %141 : vector<8x8x32xbf16> to vector<64x32xbf16>
    %c640 = arith.constant 640 : index
    %c0_133 = arith.constant 0 : index
    %143 = vector.load %arg5[%c640, %c0_133] : memref<800x64xbf16, #tpu.memory_space<vmem>>, vector<32x64xbf16>
    %cst_134 = arith.constant dense<0.000000e+00> : vector<64x64xf32>
    %144 = tpu.matmul %142, %143, %cst_134 {dimension_numbers = #tpu.dot_dimension_numbers<[1], [0], [0], [1], [0, 0, 1, 1], [], []>} : vector<64x32xbf16>, vector<32x64xbf16>, vector<64x64xf32> -> vector<64x64xf32>
    %145 = arith.addf %140, %144 : vector<64x64xf32>
    %c4_135 = arith.constant 4 : index
    %c1_136 = arith.constant 1 : index
    %c0_137 = arith.constant 0 : index
    %146 = vector.load %arg8[%c4_135, %c1_136, %c0_137] : memref<12x12x32xbf16, #tpu.memory_space<vmem>>, vector<8x8x32xbf16>
    %147 = vector.shape_cast %146 : vector<8x8x32xbf16> to vector<64x32xbf16>
    %c672 = arith.constant 672 : index
    %c0_138 = arith.constant 0 : index
    %148 = vector.load %arg5[%c672, %c0_138] : memref<800x64xbf16, #tpu.memory_space<vmem>>, vector<32x64xbf16>
    %cst_139 = arith.constant dense<0.000000e+00> : vector<64x64xf32>
    %149 = tpu.matmul %147, %148, %cst_139 {dimension_numbers = #tpu.dot_dimension_numbers<[1], [0], [0], [1], [0, 0, 1, 1], [], []>} : vector<64x32xbf16>, vector<32x64xbf16>, vector<64x64xf32> -> vector<64x64xf32>
    %150 = arith.addf %145, %149 : vector<64x64xf32>
    %c4_140 = arith.constant 4 : index
    %c2_141 = arith.constant 2 : index
    %c0_142 = arith.constant 0 : index
    %151 = vector.load %arg8[%c4_140, %c2_141, %c0_142] : memref<12x12x32xbf16, #tpu.memory_space<vmem>>, vector<8x8x32xbf16>
    %152 = vector.shape_cast %151 : vector<8x8x32xbf16> to vector<64x32xbf16>
    %c704 = arith.constant 704 : index
    %c0_143 = arith.constant 0 : index
    %153 = vector.load %arg5[%c704, %c0_143] : memref<800x64xbf16, #tpu.memory_space<vmem>>, vector<32x64xbf16>
    %cst_144 = arith.constant dense<0.000000e+00> : vector<64x64xf32>
    %154 = tpu.matmul %152, %153, %cst_144 {dimension_numbers = #tpu.dot_dimension_numbers<[1], [0], [0], [1], [0, 0, 1, 1], [], []>} : vector<64x32xbf16>, vector<32x64xbf16>, vector<64x64xf32> -> vector<64x64xf32>
    %155 = arith.addf %150, %154 : vector<64x64xf32>
    %c4_145 = arith.constant 4 : index
    %c3_146 = arith.constant 3 : index
    %c0_147 = arith.constant 0 : index
    %156 = vector.load %arg8[%c4_145, %c3_146, %c0_147] : memref<12x12x32xbf16, #tpu.memory_space<vmem>>, vector<8x8x32xbf16>
    %157 = vector.shape_cast %156 : vector<8x8x32xbf16> to vector<64x32xbf16>
    %c736 = arith.constant 736 : index
    %c0_148 = arith.constant 0 : index
    %158 = vector.load %arg5[%c736, %c0_148] : memref<800x64xbf16, #tpu.memory_space<vmem>>, vector<32x64xbf16>
    %cst_149 = arith.constant dense<0.000000e+00> : vector<64x64xf32>
    %159 = tpu.matmul %157, %158, %cst_149 {dimension_numbers = #tpu.dot_dimension_numbers<[1], [0], [0], [1], [0, 0, 1, 1], [], []>} : vector<64x32xbf16>, vector<32x64xbf16>, vector<64x64xf32> -> vector<64x64xf32>
    %160 = arith.addf %155, %159 : vector<64x64xf32>
    %c4_150 = arith.constant 4 : index
    %c4_151 = arith.constant 4 : index
    %c0_152 = arith.constant 0 : index
    %161 = vector.load %arg8[%c4_150, %c4_151, %c0_152] : memref<12x12x32xbf16, #tpu.memory_space<vmem>>, vector<8x8x32xbf16>
    %162 = vector.shape_cast %161 : vector<8x8x32xbf16> to vector<64x32xbf16>
    %c768 = arith.constant 768 : index
    %c0_153 = arith.constant 0 : index
    %163 = vector.load %arg5[%c768, %c0_153] : memref<800x64xbf16, #tpu.memory_space<vmem>>, vector<32x64xbf16>
    %cst_154 = arith.constant dense<0.000000e+00> : vector<64x64xf32>
    %164 = tpu.matmul %162, %163, %cst_154 {dimension_numbers = #tpu.dot_dimension_numbers<[1], [0], [0], [1], [0, 0, 1, 1], [], []>} : vector<64x32xbf16>, vector<32x64xbf16>, vector<64x64xf32> -> vector<64x64xf32>
    %165 = arith.addf %160, %164 : vector<64x64xf32>
    %166 = arith.truncf %165 : vector<64x64xf32> to vector<64x64xbf16>
    %c0_155 = arith.constant 0 : index
    %c0_156 = arith.constant 0 : index
    %c0_157 = arith.constant 0 : index
    %167 = vector.load %arg7[%c0_155, %c0_156, %c0_157] : memref<1x64x64xbf16, #tpu.memory_space<vmem>>, vector<1x64x64xbf16>
    %168 = vector.shape_cast %167 : vector<1x64x64xbf16> to vector<64x64xbf16>
    %169 = vector.shape_cast %166 : vector<64x64xbf16> to vector<1x64x64xbf16>
    tpu.vector_store %arg7[%c0_155, %c0_156, %c0_157], %169 {strides = array<i32>} : memref<1x64x64xbf16, #tpu.memory_space<vmem>>, vector<1x64x64xbf16>,
    return
  }
  func.func @transform_0(%arg0: i32) -> (i32, i32, i32) {
    %c0_i32 = arith.constant 0 : i32
    %c0_i32_0 = arith.constant 0 : i32
    %c0_i32_1 = arith.constant 0 : i32
    return %arg0, %c0_i32, %c0_i32_0 : i32, i32, i32
  }
  func.func @transform_1(%arg0: i32) -> (i32, i32) {
    %c0_i32 = arith.constant 0 : i32
    %c0_i32_0 = arith.constant 0 : i32
    %c0_i32_1 = arith.constant 0 : i32
    return %c0_i32, %c0_i32_0 : i32, i32
  }
  func.func @transform_2(%arg0: i32) -> (i32, i32) {
    %c0_i32 = arith.constant 0 : i32
    %c0_i32_0 = arith.constant 0 : i32
    %c0_i32_1 = arith.constant 0 : i32
    return %c0_i32, %c0_i32_0 : i32, i32
  }
  func.func @transform_3(%arg0: i32) -> (i32, i32) {
    %c0_i32 = arith.constant 0 : i32
    %c0_i32_0 = arith.constant 0 : i32
    %c0_i32_1 = arith.constant 0 : i32
    return %c0_i32, %c0_i32_0 : i32, i32
  }
  func.func @transform_4(%arg0: i32) -> (i32, i32) {
    %c0_i32 = arith.constant 0 : i32
    %c0_i32_0 = arith.constant 0 : i32
    %c0_i32_1 = arith.constant 0 : i32
    return %c0_i32, %c0_i32_0 : i32, i32
  }
  func.func @transform_5(%arg0: i32) -> (i32, i32) {
    %c0_i32 = arith.constant 0 : i32
    %c0_i32_0 = arith.constant 0 : i32
    %c0_i32_1 = arith.constant 0 : i32
    return %c0_i32, %c0_i32_0 : i32, i32
  }
  func.func @transform_6(%arg0: i32) -> (i32, i32, i32) {
    %c0_i32 = arith.constant 0 : i32
    %c0_i32_0 = arith.constant 0 : i32
    %c0_i32_1 = arith.constant 0 : i32
    return %arg0, %c0_i32, %c0_i32_0 : i32, i32, i32
  }
}

</mosaic_0001>

<llo_original>
// kernel: tpu_custom_call.1
$region0: #{tpu_custom_call.1}
  #allocation0 [shape = 'u32[]', space=smem, size = 0x4, offset = 0x4, fixed_abs, tag = 'smem constant byte address 0x4 - core index']
  #allocation1 [shape = 'u32[144,128]{1,0:T(1,128)}', space=vmem, size = 0x12000, scoped, tag = 'internal scratch']
  #allocation2 [shape = 'bf16[12,12,32]{2,1,0:T(8,128)(2,1)}', space=vmem, size = 0xc000, scoped, tag = 'scratch operand']
  %s0 = inlined_call_operand.vmem [shape: f32[2,64,32], index: 0, kind: input, shape index: {}]
  %s1 = inlined_call_operand.vmem [shape: f32[32,32], index: 1, kind: input, shape index: {}]
  %s2 = inlined_call_operand.vmem [shape: f32[1,32], index: 2, kind: input, shape index: {}]
  %s3 = inlined_call_operand.vmem [shape: f32[1,32], index: 3, kind: input, shape index: {}]
  %s4 = inlined_call_operand.vmem [shape: bf16[800,64], index: 4, kind: input, shape index: {}]
  %s5 = inlined_call_operand.vmem [shape: f32[1,64], index: 5, kind: input, shape index: {}]
  %s6 = inlined_call_operand.hbm [shape: bf16[2,64,64], index: 6, kind: output, shape index: {}]
  %s7 = sld [smem:[#allocation0]]
  $region57: #{tpu_custom_call.1} parent=0
    _
  %s9 = ssub.s32 1, %s7
  %s10 = scalar_select 0, %s9, %s7
  $region1: #{tpu_custom_call.1} parent=0
    #allocation3 [shape = 'u8[32768]{0}', space=vmem, size = 0x8000, scoped, tag = 'output window, operand 0']
    #allocation4 [shape = 's32[2]{0}', space=sflag, size = 0x8, scoped, tag = 'scoped memory for tpu_custom_call.1']
    %11 = vsyncpa [#allocation4], 0
    %s12 = scalar_lea.sflag [#allocation4], 1
    %13 = vsyncpa %s12, 0
    loop: start=0, step=1, limit=4
    $region2: #{tpu_custom_call.1} parent=1 // loop_pre_header
      _
    $region3: #{tpu_custom_call.1} parent=1 // loop_header
      %s15 = sphi 0, %s19
      %p16 = scmp.ge.s32.totalorder %s15, 4
      %s25 = sphi 0, %s27
      %s28 = sphi 0, %s25
      %s29 = sphi 0, %s28
      %s45 = sphi 0, %s29
      %s49 = sphi 0, %s49
      %s51 = sphi 0, %s49
      %s52 = sphi 0, %s51
      %s66 = sphi 0, %s52
      %s70 = sphi 0, %s70
      %s72 = sphi 0, %s70
      %s73 = sphi 0, %s72
      %s87 = sphi 0, %s73
      %s91 = sphi 0, %s91
      %s93 = sphi 0, %s91
      %s94 = sphi 0, %s93
      %s108 = sphi 0, %s94
      %s112 = sphi 0, %s112
      %s114 = sphi 0, %s112
      %s115 = sphi 0, %s114
      %s129 = sphi 0, %s115
      %s133 = sphi 0, %s133
      %s135 = sphi 0, %s133
      %s136 = sphi 0, %s135
      %s150 = sphi 0, %s136
      %s156 = sphi 0, %s158
      %s159 = sphi 0, %s156
      %s160 = sphi 0, %s159
      %s176 = sphi 0, %s160
    $region4: #{tpu_custom_call.1} parent=1 // loop_header_branch
      %18 = sbr.rel (%p16) target = $region8
    $region5: #{tpu_custom_call.1} parent=1 // loop_body
      %s20 = ssub.s32 %s15, 1
      %s21 = ssub.s32 %s15, 2
      %s22 = sadd.s32 %s15, 1
      %s23 = ssub.s32 %s15, %s22
      %p24 = scmp.eq.s32.totalorder %s23, 0
      %s26 = sadd.s32 %s25, 1
      %s27 = scalar_select %p24, %s25, %s26
      %p30 = pneg %p24
      %p31 = scmp.eq.s32.totalorder %s15, 1
      %p32 = por %p30, %p31
      %p33 = scmp.ne.s32.totalorder %s25, %s28
      %p34 = scmp.eq.s32.totalorder %s15, 0
      %p35 = por %p33, %p34
      %p36 = scmp.ne.s32.totalorder %s25, %s28
      %p37 = scmp.eq.s32.totalorder %s20, 1
      %p38 = por %p36, %p37
      %p39 = scmp.ne.s32.totalorder %s28, %s29
      %p40 = scmp.eq.s32.totalorder %s20, 0
      %p41 = por %p39, %p40
      %p42 = scmp.ne.s32.totalorder %s28, %s29
      %p43 = scmp.eq.s32.totalorder %s21, 1
      %p44 = por %p42, %p43
      %p46 = scmp.ne.s32.totalorder %s29, %s45
      %p47 = scmp.eq.s32.totalorder %s21, 0
      %p48 = por %p46, %p47
      %s50 = sadd.s32 %s49, 1
      %p53 = scmp.eq.s32.totalorder %s15, 1
      %p54 = scmp.ne.s32.totalorder %s49, %s51
      %p55 = scmp.eq.s32.totalorder %s15, 0
      %p56 = por %p54, %p55
      %p57 = scmp.ne.s32.totalorder %s49, %s51
      %p58 = scmp.eq.s32.totalorder %s20, 1
      %p59 = por %p57, %p58
      %p60 = scmp.ne.s32.totalorder %s51, %s52
      %p61 = scmp.eq.s32.totalorder %s20, 0
      %p62 = por %p60, %p61
      %p63 = scmp.ne.s32.totalorder %s51, %s52
      %p64 = scmp.eq.s32.totalorder %s21, 1
      %p65 = por %p63, %p64
      %p67 = scmp.ne.s32.totalorder %s52, %s66
      %p68 = scmp.eq.s32.totalorder %s21, 0
      %p69 = por %p67, %p68
      %s71 = sadd.s32 %s70, 1
      %p74 = scmp.eq.s32.totalorder %s15, 1
      %p75 = scmp.ne.s32.totalorder %s70, %s72
      %p76 = scmp.eq.s32.totalorder %s15, 0
      %p77 = por %p75, %p76
      %p78 = scmp.ne.s32.totalorder %s70, %s72
      %p79 = scmp.eq.s32.totalorder %s20, 1
      %p80 = por %p78, %p79
      %p81 = scmp.ne.s32.totalorder %s72, %s73
      %p82 = scmp.eq.s32.totalorder %s20, 0
      %p83 = por %p81, %p82
      %p84 = scmp.ne.s32.totalorder %s72, %s73
      %p85 = scmp.eq.s32.totalorder %s21, 1
      %p86 = por %p84, %p85
      %p88 = scmp.ne.s32.totalorder %s73, %s87
      %p89 = scmp.eq.s32.totalorder %s21, 0
      %p90 = por %p88, %p89
      %s92 = sadd.s32 %s91, 1
      %p95 = scmp.eq.s32.totalorder %s15, 1
      %p96 = scmp.ne.s32.totalorder %s91, %s93
      %p97 = scmp.eq.s32.totalorder %s15, 0
      %p98 = por %p96, %p97
      %p99 = scmp.ne.s32.totalorder %s91, %s93
      %p100 = scmp.eq.s32.totalorder %s20, 1
      %p101 = por %p99, %p100
      %p102 = scmp.ne.s32.totalorder %s93, %s94
      %p103 = scmp.eq.s32.totalorder %s20, 0
      %p104 = por %p102, %p103
      %p105 = scmp.ne.s32.totalorder %s93, %s94
      %p106 = scmp.eq.s32.totalorder %s21, 1
      %p107 = por %p105, %p106
      %p109 = scmp.ne.s32.totalorder %s94, %s108
      %p110 = scmp.eq.s32.totalorder %s21, 0
      %p111 = por %p109, %p110
      %s113 = sadd.s32 %s112, 1
      %p116 = scmp.eq.s32.totalorder %s15, 1
      %p117 = scmp.ne.s32.totalorder %s112, %s114
      %p118 = scmp.eq.s32.totalorder %s15, 0
      %p119 = por %p117, %p118
      %p120 = scmp.ne.s32.totalorder %s112, %s114
      %p121 = scmp.eq.s32.totalorder %s20, 1
      %p122 = por %p120, %p121
      %p123 = scmp.ne.s32.totalorder %s114, %s115
      %p124 = scmp.eq.s32.totalorder %s20, 0
      %p125 = por %p123, %p124
      %p126 = scmp.ne.s32.totalorder %s114, %s115
      %p127 = scmp.eq.s32.totalorder %s21, 1
      %p128 = por %p126, %p127
      %p130 = scmp.ne.s32.totalorder %s115, %s129
      %p131 = scmp.eq.s32.totalorder %s21, 0
      %p132 = por %p130, %p131
      %s134 = sadd.s32 %s133, 1
      %p137 = scmp.eq.s32.totalorder %s15, 1
      %p138 = scmp.ne.s32.totalorder %s133, %s135
      %p139 = scmp.eq.s32.totalorder %s15, 0
      %p140 = por %p138, %p139
      %p141 = scmp.ne.s32.totalorder %s133, %s135
      %p142 = scmp.eq.s32.totalorder %s20, 1
      %p143 = por %p141, %p142
      %p144 = scmp.ne.s32.totalorder %s135, %s136
      %p145 = scmp.eq.s32.totalorder %s20, 0
      %p146 = por %p144, %p145
      %p147 = scmp.ne.s32.totalorder %s135, %s136
      %p148 = scmp.eq.s32.totalorder %s21, 1
      %p149 = por %p147, %p148
      %p151 = scmp.ne.s32.totalorder %s136, %s150
      %p152 = scmp.eq.s32.totalorder %s21, 0
      %p153 = por %p151, %p152
      %s154 = ssub.s32 %s15, %s22
      %p155 = scmp.eq.s32.totalorder %s154, 0
      %s157 = sadd.s32 %s156, 1
      %s158 = scalar_select %p155, %s156, %s157
      %p161 = pneg %p155
      %p162 = scmp.eq.s32.totalorder %s15, 1
      %p163 = por %p161, %p162
      %p164 = scmp.ne.s32.totalorder %s156, %s159
      %p165 = scmp.eq.s32.totalorder %s15, 0
      %p166 = por %p164, %p165
      %p167 = scmp.ne.s32.totalorder %s156, %s159
      %p168 = scmp.eq.s32.totalorder %s20, 1
      %p169 = por %p167, %p168
      %p170 = scmp.ne.s32.totalorder %s159, %s160
      %p171 = scmp.eq.s32.totalorder %s20, 0
      %p172 = por %p170, %p171
      %p173 = scmp.ne.s32.totalorder %s159, %s160
      %p174 = scmp.eq.s32.totalorder %s21, 1
      %p175 = por %p173, %p174
      %p177 = scmp.ne.s32.totalorder %s160, %s176
      %p178 = scmp.eq.s32.totalorder %s21, 0
      %p179 = por %p177, %p178
      %p180 = scmp.le.s32.totalorder 1, %s15
      %p181 = scmp.lt.s32.totalorder %s15, 3
      %p182 = pnand %p180, %p181
      %p183 = pneg %p182
      // Predicated region
      $region9: #{tpu_custom_call.1} parent=5 // pred_check
        _
      $region10: #{tpu_custom_call.1} parent=5 // pred_check_branch
        %185 = sbr.rel (%p182) target = $region12
      $region11: #{tpu_custom_call.1} parent=5 // pred_region
        %s186 = ssub.s32 %s15, 1
        // Predicated region
        $region13: #{tpu_custom_call.1} parent=11 // pred_check
          %p187 = pneg %p62
        $region14: #{tpu_custom_call.1} parent=11 // pred_check_branch
          %189 = sbr.rel (%p187) target = $region16
        $region15: #{tpu_custom_call.1} parent=11 // pred_region
          _
        $region16: #{tpu_custom_call.1} parent=11 // pred_fallthru
          _
        // Predicated region
        $region17: #{tpu_custom_call.1} parent=11 // pred_check
          %p190 = pneg %p83
        $region18: #{tpu_custom_call.1} parent=11 // pred_check_branch
          %192 = sbr.rel (%p190) target = $region20
        $region19: #{tpu_custom_call.1} parent=11 // pred_region
          _
        $region20: #{tpu_custom_call.1} parent=11 // pred_fallthru
          _
        // Predicated region
        $region21: #{tpu_custom_call.1} parent=11 // pred_check
          %p193 = pneg %p104
        $region22: #{tpu_custom_call.1} parent=11 // pred_check_branch
          %195 = sbr.rel (%p193) target = $region24
        $region23: #{tpu_custom_call.1} parent=11 // pred_region
          _
        $region24: #{tpu_custom_call.1} parent=11 // pred_fallthru
          _
        // Predicated region
        $region25: #{tpu_custom_call.1} parent=11 // pred_check
          %p196 = pneg %p125
        $region26: #{tpu_custom_call.1} parent=11 // pred_check_branch
          %198 = sbr.rel (%p196) target = $region28
        $region27: #{tpu_custom_call.1} parent=11 // pred_region
          _
        $region28: #{tpu_custom_call.1} parent=11 // pred_fallthru
          _
        // Predicated region
        $region29: #{tpu_custom_call.1} parent=11 // pred_check
          %p199 = pneg %p146
        $region30: #{tpu_custom_call.1} parent=11 // pred_check_branch
          %201 = sbr.rel (%p199) target = $region32
        $region31: #{tpu_custom_call.1} parent=11 // pred_region
          _
        $region32: #{tpu_custom_call.1} parent=11 // pred_fallthru
          _
      $region12: #{tpu_custom_call.1} parent=5 // pred_fallthru
        _
      %p202 = scmp.lt.s32.totalorder %s15, 2
      // Predicated region
      $region33: #{tpu_custom_call.1} parent=5 // pred_check
        %p203 = pneg %p202
      $region34: #{tpu_custom_call.1} parent=5 // pred_check_branch
        %205 = sbr.rel (%p203) target = $region36
      $region35: #{tpu_custom_call.1} parent=5 // pred_region
        // Predicated region
        $region37: #{tpu_custom_call.1} parent=35 // pred_check
          %p206 = pneg %p35
        $region38: #{tpu_custom_call.1} parent=35 // pred_check_branch
          %208 = sbr.rel (%p206) target = $region40
        $region39: #{tpu_custom_call.1} parent=35 // pred_region
          %p209 = scmp.lt.s32.totalorder %s15, 1
          %s210 = scalar_select %p209, %s15, 1
          %s211 = smul.addr %s210, 8
          %s212 = smul.addr %s211, 8
          %s213 = scalar_lea.vmem %s0, %s212
        $region40: #{tpu_custom_call.1} parent=35 // pred_fallthru
          _
      $region36: #{tpu_custom_call.1} parent=5 // pred_fallthru
        _
      %p214 = scmp.le.s32.totalorder 1, %s15
      %p215 = scmp.lt.s32.totalorder %s15, 3
      %p216 = pnand %p214, %p215
      %p217 = pneg %p216
      // Predicated region
      $region41: #{tpu_custom_call.1} parent=5 // pred_check
        _
      $region42: #{tpu_custom_call.1} parent=5 // pred_check_branch
        %219 = sbr.rel (%p216) target = $region44
      $region43: #{tpu_custom_call.1} parent=5 // pred_region
        %s220 = ssub.s32 %s15, 1
        %p221 = scmp.lt.s32.totalorder %s20, 1
        %s222 = scalar_select %p221, %s20, 1
        %s223 = smul.addr %s222, 8
        %s224 = smul.addr %s223, 8
        %s225 = scalar_lea.vmem %s0, %s224
        %p226 = pneg %p41
        %p227 = pneg %p38
        %p228 = pneg %p62
        %p229 = pneg %p59
        %p230 = pneg %p83
        %p231 = pneg %p80
        %p232 = pneg %p104
        %p233 = pneg %p101
        %p234 = pneg %p125
        %p235 = pneg %p122
        %p236 = pneg %p146
        %p237 = pneg %p143
        %p238 = pneg %p172
        %p239 = pneg %p169
        %s240 = sand.u32 %s159, 1
        %s241 = scalar_lea.sflag [#allocation4], %s240
        %s242 = sand.u32 %s159, 1
        %s243 = smul.addr %s242, 32
        %s244 = scalar_lea.vmem [#allocation3], %s243
        %p245 = scmp.lt.s32.totalorder %s20, 1
        %s246 = scalar_select %p245, %s20, 1
        %s247 = smul.addr %s246, 8
        %s248 = smul.addr %s247, 8
        %s249 = scalar_lea.vmem %s0, %s248
        %v251 = vld [vmem:[%s249] sm:$0xff]
        %v252 = vld [vmem:[%s249 + $0x8] sm:$0xff]
        %v253 = vld [vmem:[%s249 + $0x10] sm:$0xff]
        %v254 = vld [vmem:[%s249 + $0x18] sm:$0xff]
        %v255 = vld [vmem:[%s249 + $0x20] sm:$0xff]
        %v256 = vld [vmem:[%s249 + $0x28] sm:$0xff]
        %v257 = vld [vmem:[%s249 + $0x30] sm:$0xff]
        %v258 = vld [vmem:[%s249 + $0x38] sm:$0xff]
        %vm259 = vcmask 261120
        %v260 = vsel %vm259, %v251, 0.0
        %v261 = vsel %vm259, %v252, 0.0
        %v262 = vadd.f32 %v260, %v261
        %v263 = vsel %vm259, %v253, 0.0
        %v264 = vadd.f32 %v262, %v263
        %v265 = vsel %vm259, %v254, 0.0
        %v266 = vadd.f32 %v264, %v265
        %v267 = vsel %vm259, %v255, 0.0
        %v268 = vadd.f32 %v266, %v267
        %v269 = vsel %vm259, %v256, 0.0
        %v270 = vadd.f32 %v268, %v269
        %v271 = vsel %vm259, %v257, 0.0
        %v272 = vadd.f32 %v270, %v271
        %v273 = vsel %vm259, %v258, 0.0
        %v274 = vadd.f32 %v272, %v273
        %v275 = vrot.slane %v274, 4
        %v276 = vadd.f32 %v274, %v275
        %v277 = vrot.slane %v276, 2
        %v278 = vadd.f32 %v276, %v277
        %v279 = vrot.slane %v278, 1
        %v280 = vadd.f32 %v278, %v279
        %v281 = vld [vmem:[%s1] sm:$0xff]
        %v282 = vld [vmem:[%s1 + $0x8] sm:$0xff]
        %v283 = vld [vmem:[%s1 + $0x10] sm:$0xff]
        %v284 = vld [vmem:[%s1 + $0x18] sm:$0xff]
        %v286 = vsel %vm259, %v280, 0
        %288 = vmatprep.subr.mxu0 0.0
        %289 = vmatpush1.msra.mxu0 0.0
        %290 = vmatprep.subr.mxu0 0.0
        %291 = vmatpush1.msra.mxu0 0.0
        %292 = vmatprep.subr.mxu0 0.0
        %293 = vmatpush1.msra.mxu0 0.0
        %294 = vmatprep.subr.mxu0 0.0
        %295 = vmatpush1.msra.mxu0 0.0
        %296 = vmatprep.subr.mxu0 0.0
        %297 = vmatpush1.msra.mxu0 0.0
        %298 = vmatprep.subr.mxu0 0.0
        %299 = vmatpush1.msra.mxu0 0.0
        %300 = vmatprep.subr.mxu0 0.0
        %301 = vmatpush1.msra.mxu0 0.0
        %302 = vmatprep.subr.mxu0 0.0
        %303 = vmatpush1.msra.mxu0 0.0
        %304 = vmatprep.subr.mxu0 0.0
        %305 = vmatpush1.msra.mxu0 0.0
        %306 = vmatprep.subr.mxu0 0.0
        %307 = vmatpush1.msra.mxu0 0.0
        %308 = vmatprep.subr.mxu0 0.0
        %309 = vmatpush1.msra.mxu0 0.0
        %310 = vmatprep.subr.mxu0 0.0
        %311 = vmatpush1.msra.mxu0 0.0
        %312 = vmatprep.subr.mxu0 0.0
        %313 = vmatpush1.msra.mxu0 %v284
        %314 = vmatprep.subr.mxu0 0.0
        %315 = vmatpush1.msra.mxu0 %v283
        %316 = vmatprep.subr.mxu0 0.0
        %317 = vmatpush1.msra.mxu0 %v282
        %318 = vmatprep.subr.mxu0 0.0
        %319 = vmatpush1.msra.mxu0 %v281
        %320 = vmatprep.subr.mxu0 0.0
        %321 = vmatpush2.msra.mxu0 0.0
        %322 = vmatprep.subr.mxu0 0.0
        %323 = vmatpush2.msra.mxu0 0.0
        %324 = vmatprep.subr.mxu0 0.0
        %325 = vmatpush2.msra.mxu0 0.0
        %326 = vmatprep.subr.mxu0 0.0
        %327 = vmatpush2.msra.mxu0 0.0
        %328 = vmatprep.subr.mxu0 0.0
        %329 = vmatpush2.msra.mxu0 0.0
        %330 = vmatprep.subr.mxu0 0.0
        %331 = vmatpush2.msra.mxu0 0.0
        %332 = vmatprep.subr.mxu0 0.0
        %333 = vmatpush2.msra.mxu0 0.0
        %334 = vmatprep.subr.mxu0 0.0
        %335 = vmatpush2.msra.mxu0 0.0
        %336 = vmatprep.subr.mxu0 0.0
        %337 = vmatpush2.msra.mxu0 0.0
        %338 = vmatprep.subr.mxu0 0.0
        %339 = vmatpush2.msra.mxu0 0.0
        %340 = vmatprep.subr.mxu0 0.0
        %341 = vmatpush2.msra.mxu0 0.0
        %342 = vmatprep.subr.mxu0 0.0
        %343 = vmatpush2.msra.mxu0 0.0
        %344 = vmatprep.subr.mxu0 0.0
        %345 = vmatpush2.msra.mxu0 0.0
        %346 = vmatprep.subr.mxu0 0.0
        %347 = vmatpush2.msra.mxu0 0.0
        %348 = vmatprep.subr.mxu0 0.0
        %349 = vmatpush2.msra.mxu0 0.0
        %350 = vmatprep.subr.mxu0 0.0
        %351 = vmatpush2.msra.mxu0 0.0
        %352 = vmatprep.mubr.f32.mxu0 0.0
        %353 = vmatmul.mubr.f32.gmra.mxu0 %v286
        %v354 = vpop.f32.mrf.mxu0
        %v355 = vadd.f32 0.0, %v354
        %v356 = vpop.f32.mrf.mxu0
        %357 = vdwg.mxu0
        %v358 = vlaneseq
        %v359 = vshrl.u32 %v358, 7
        %v360 = vsub.s32 0, %v359
        %v361 = vrot.slane %v355, %v360
        %v362 = vsub.f32 %v251, %v361
        %v363 = vsub.f32 %v252, %v361
        %v364 = vsub.f32 %v253, %v361
        %v365 = vsub.f32 %v254, %v361
        %v366 = vsub.f32 %v255, %v361
        %v367 = vsub.f32 %v256, %v361
        %v368 = vsub.f32 %v257, %v361
        %v369 = vsub.f32 %v258, %v361
        %v370 = vmul.f32 %v362, %v362
        %v371 = vmul.f32 %v363, %v363
        %v372 = vmul.f32 %v364, %v364
        %v373 = vmul.f32 %v365, %v365
        %v374 = vmul.f32 %v366, %v366
        %v375 = vmul.f32 %v367, %v367
        %v376 = vmul.f32 %v368, %v368
        %v377 = vmul.f32 %v369, %v369
        %v378 = vsel %vm259, %v370, 0.0
        %v379 = vsel %vm259, %v371, 0.0
        %v380 = vadd.f32 %v378, %v379
        %v381 = vsel %vm259, %v372, 0.0
        %v382 = vadd.f32 %v380, %v381
        %v383 = vsel %vm259, %v373, 0.0
        %v384 = vadd.f32 %v382, %v383
        %v385 = vsel %vm259, %v374, 0.0
        %v386 = vadd.f32 %v384, %v385
        %v387 = vsel %vm259, %v375, 0.0
        %v388 = vadd.f32 %v386, %v387
        %v389 = vsel %vm259, %v376, 0.0
        %v390 = vadd.f32 %v388, %v389
        %v391 = vsel %vm259, %v377, 0.0
        %v392 = vadd.f32 %v390, %v391
        %v393 = vrot.slane %v392, 4
        %v394 = vadd.f32 %v392, %v393
        %v395 = vrot.slane %v394, 2
        %v396 = vadd.f32 %v394, %v395
        %v397 = vrot.slane %v396, 1
        %v398 = vadd.f32 %v396, %v397
        %v400 = vsel %vm259, %v398, 0
        %402 = vmatprep.subr.mxu0 0.0
        %403 = vmatpush1.msra.mxu0 0.0
        %404 = vmatprep.subr.mxu0 0.0
        %405 = vmatpush1.msra.mxu0 0.0
        %406 = vmatprep.subr.mxu0 0.0
        %407 = vmatpush1.msra.mxu0 0.0
        %408 = vmatprep.subr.mxu0 0.0
        %409 = vmatpush1.msra.mxu0 0.0
        %410 = vmatprep.subr.mxu0 0.0
        %411 = vmatpush1.msra.mxu0 0.0
        %412 = vmatprep.subr.mxu0 0.0
        %413 = vmatpush1.msra.mxu0 0.0
        %414 = vmatprep.subr.mxu0 0.0
        %415 = vmatpush1.msra.mxu0 0.0
        %416 = vmatprep.subr.mxu0 0.0
        %417 = vmatpush1.msra.mxu0 0.0
        %418 = vmatprep.subr.mxu0 0.0
        %419 = vmatpush1.msra.mxu0 0.0
        %420 = vmatprep.subr.mxu0 0.0
        %421 = vmatpush1.msra.mxu0 0.0
        %422 = vmatprep.subr.mxu0 0.0
        %423 = vmatpush1.msra.mxu0 0.0
        %424 = vmatprep.subr.mxu0 0.0
        %425 = vmatpush1.msra.mxu0 0.0
        %426 = vmatprep.subr.mxu0 0.0
        %427 = vmatpush1.msra.mxu0 %v284
        %428 = vmatprep.subr.mxu0 0.0
        %429 = vmatpush1.msra.mxu0 %v283
        %430 = vmatprep.subr.mxu0 0.0
        %431 = vmatpush1.msra.mxu0 %v282
        %432 = vmatprep.subr.mxu0 0.0
        %433 = vmatpush1.msra.mxu0 %v281
        %434 = vmatprep.subr.mxu0 0.0
        %435 = vmatpush2.msra.mxu0 0.0
        %436 = vmatprep.subr.mxu0 0.0
        %437 = vmatpush2.msra.mxu0 0.0
        %438 = vmatprep.subr.mxu0 0.0
        %439 = vmatpush2.msra.mxu0 0.0
        %440 = vmatprep.subr.mxu0 0.0
        %441 = vmatpush2.msra.mxu0 0.0
        %442 = vmatprep.subr.mxu0 0.0
        %443 = vmatpush2.msra.mxu0 0.0
        %444 = vmatprep.subr.mxu0 0.0
        %445 = vmatpush2.msra.mxu0 0.0
        %446 = vmatprep.subr.mxu0 0.0
        %447 = vmatpush2.msra.mxu0 0.0
        %448 = vmatprep.subr.mxu0 0.0
        %449 = vmatpush2.msra.mxu0 0.0
        %450 = vmatprep.subr.mxu0 0.0
        %451 = vmatpush2.msra.mxu0 0.0
        %452 = vmatprep.subr.mxu0 0.0
        %453 = vmatpush2.msra.mxu0 0.0
        %454 = vmatprep.subr.mxu0 0.0
        %455 = vmatpush2.msra.mxu0 0.0
        %456 = vmatprep.subr.mxu0 0.0
        %457 = vmatpush2.msra.mxu0 0.0
        %458 = vmatprep.subr.mxu0 0.0
        %459 = vmatpush2.msra.mxu0 0.0
        %460 = vmatprep.subr.mxu0 0.0
        %461 = vmatpush2.msra.mxu0 0.0
        %462 = vmatprep.subr.mxu0 0.0
        %463 = vmatpush2.msra.mxu0 0.0
        %464 = vmatprep.subr.mxu0 0.0
        %465 = vmatpush2.msra.mxu0 0.0
        %466 = vmatprep.mubr.f32.mxu0 0.0
        %467 = vmatmul.mubr.f32.gmra.mxu0 %v400
        %v468 = vpop.f32.mrf.mxu0
        %v469 = vadd.f32 1e-05, %v468
        %v470 = vpop.f32.mrf.mxu0
        %471 = vdwg.mxu0
        %v472 = vrsqrt.pop %v469
        %v473 = vld [vmem:[%s2] sm:$0x1]
        %v474 = vmul.f32 %v472, %v473
        %v475 = vlaneseq
        %v476 = vshrl.u32 %v475, 7
        %v477 = vsub.s32 0, %v476
        %v478 = vrot.slane %v474, %v477
        %v479 = vmul.f32 %v362, %v478
        %v480 = vmul.f32 %v363, %v478
        %v481 = vmul.f32 %v364, %v478
        %v482 = vmul.f32 %v365, %v478
        %v483 = vmul.f32 %v366, %v478
        %v484 = vmul.f32 %v367, %v478
        %v485 = vmul.f32 %v368, %v478
        %v486 = vmul.f32 %v369, %v478
        %v487 = vld [vmem:[%s3] sm:$0x1]
        %v489 = vlaneseq
        %v490 = vshrl.u32 %v489, 7
        %v491 = vsub.s32 0, %v490
        %v492 = vrot.slane %v487, %v491
        %v494 = vadd.f32 %v479, %v492
        %v495 = vadd.f32 %v480, %v492
        %v496 = vadd.f32 %v481, %v492
        %v497 = vadd.f32 %v482, %v492
        %v498 = vadd.f32 %v483, %v492
        %v499 = vadd.f32 %v484, %v492
        %v500 = vadd.f32 %v485, %v492
        %v501 = vadd.f32 %v486, %v492
        %v502 = vxor.u32 %v494, 2147483648
        %v503 = vxor.u32 %v495, 2147483648
        %v504 = vxor.u32 %v496, 2147483648
        %v505 = vxor.u32 %v497, 2147483648
        %v506 = vxor.u32 %v498, 2147483648
        %v507 = vxor.u32 %v499, 2147483648
        %v508 = vxor.u32 %v500, 2147483648
        %v509 = vxor.u32 %v501, 2147483648
        %v510 = vmul.f32 %v502, 1.442695
        %v511 = vpow.pop %v510
        %v512 = vmul.f32 %v503, 1.442695
        %v513 = vpow.pop %v512
        %v514 = vmul.f32 %v504, 1.442695
        %v515 = vpow.pop %v514
        %v516 = vmul.f32 %v505, 1.442695
        %v517 = vpow.pop %v516
        %v518 = vmul.f32 %v506, 1.442695
        %v519 = vpow.pop %v518
        %v520 = vmul.f32 %v507, 1.442695
        %v521 = vpow.pop %v520
        %v522 = vmul.f32 %v508, 1.442695
        %v523 = vpow.pop %v522
        %v524 = vmul.f32 %v509, 1.442695
        %v525 = vpow.pop %v524
        %v526 = vadd.f32 %v511, 1.0
        %v527 = vadd.f32 %v513, 1.0
        %v528 = vadd.f32 %v515, 1.0
        %v529 = vadd.f32 %v517, 1.0
        %v530 = vadd.f32 %v519, 1.0
        %v531 = vadd.f32 %v521, 1.0
        %v532 = vadd.f32 %v523, 1.0
        %v533 = vadd.f32 %v525, 1.0
        %v534 = vrcp.pop %v526
        %v535 = vmul.f32 1.0, %v534
        %v536 = vrcp.pop %v527
        %v537 = vmul.f32 1.0, %v536
        %v538 = vrcp.pop %v528
        %v539 = vmul.f32 1.0, %v538
        %v540 = vrcp.pop %v529
        %v541 = vmul.f32 1.0, %v540
        %v542 = vrcp.pop %v530
        %v543 = vmul.f32 1.0, %v542
        %v544 = vrcp.pop %v531
        %v545 = vmul.f32 1.0, %v544
        %v546 = vrcp.pop %v532
        %v547 = vmul.f32 1.0, %v546
        %v548 = vrcp.pop %v533
        %v549 = vmul.f32 1.0, %v548
        %v550 = vmul.f32 %v494, %v535
        %v551 = vmul.f32 %v495, %v537
        %v552 = vmul.f32 %v496, %v539
        %v553 = vmul.f32 %v497, %v541
        %v554 = vmul.f32 %v498, %v543
        %v555 = vmul.f32 %v499, %v545
        %v556 = vmul.f32 %v500, %v547
        %v557 = vmul.f32 %v501, %v549
        %v558 = vpack.c.bf16 %v550, %v550
        %v559 = vpack.c.bf16 %v551, %v551
        %v560 = vpack.c.bf16 %v552, %v552
        %v561 = vpack.c.bf16 %v553, %v553
        %v562 = vpack.c.bf16 %v554, %v554
        %v563 = vpack.c.bf16 %v555, %v555
        %v564 = vpack.c.bf16 %v556, %v556
        %v565 = vpack.c.bf16 %v557, %v557
        %v574 = vunpack.c.l.b16 %v558
        %v575 = vunpack.c.l.b16 %v559
        %v576 = vunpack.c.l.b16 %v560
        %v577 = vunpack.c.l.b16 %v561
        %v578 = vunpack.c.l.b16 %v562
        %v579 = vunpack.c.l.b16 %v563
        %v580 = vunpack.c.l.b16 %v564
        %v581 = vunpack.c.l.b16 %v565
        %v582 = vpack.c.b16 %v574, %v574
        %v583 = vpack.c.b16 %v575, %v575
        %v584 = vpack.c.b16 %v576, %v576
        %v585 = vpack.c.b16 %v577, %v577
        %v586 = vpack.c.b16 %v578, %v578
        %v587 = vpack.c.b16 %v579, %v579
        %v588 = vpack.c.b16 %v580, %v580
        %v589 = vpack.c.b16 %v581, %v581
        %v590 = vrot.slane %v582, 7
        %v591 = vrot.slane %v590, 4
        %v592 = vrot.slane %v583, 7
        %v593 = vrot.slane %v592, 4
        %v594 = vrot.slane %v584, 7
        %v595 = vrot.slane %v594, 4
        %v596 = vrot.slane %v585, 7
        %v597 = vrot.slane %v596, 4
        %v598 = vrot.slane %v586, 7
        %v599 = vrot.slane %v598, 4
        %v600 = vrot.slane %v587, 7
        %v601 = vrot.slane %v600, 4
        %v602 = vrot.slane %v588, 7
        %v603 = vrot.slane %v602, 4
        %v604 = vrot.slane %v589, 7
        %v605 = vrot.slane %v604, 4
        %s622 = scalar_lea.vmem [#allocation2], 16
        %vm623 = vcmask 257025
        %624 = vst.msk [vmem:[%s622] sm:$0xe] %vm623, %v590
        %vm625 = vcmask 253952
        %626 = vst.msk [vmem:[%s622 + $0x4] sm:$0x1] %vm625, %v591
        %627 = vst.msk [vmem:[%s622 + $0x8] sm:$0xe] %vm623, %v592
        %628 = vst.msk [vmem:[%s622 + $0xc] sm:$0x1] %vm625, %v593
        %629 = vst.msk [vmem:[%s622 + $0x10] sm:$0xe] %vm623, %v594
        %630 = vst.msk [vmem:[%s622 + $0x14] sm:$0x1] %vm625, %v595
        %631 = vst.msk [vmem:[%s622 + $0x18] sm:$0xe] %vm623, %v596
        %632 = vst.msk [vmem:[%s622 + $0x1c] sm:$0x1] %vm625, %v597
        %633 = vst.msk [vmem:[%s622 + $0x20] sm:$0xe] %vm623, %v598
        %634 = vst.msk [vmem:[%s622 + $0x24] sm:$0x1] %vm625, %v599
        %635 = vst.msk [vmem:[%s622 + $0x28] sm:$0xe] %vm623, %v600
        %636 = vst.msk [vmem:[%s622 + $0x2c] sm:$0x1] %vm625, %v601
        %637 = vst.msk [vmem:[%s622 + $0x30] sm:$0xe] %vm623, %v602
        %638 = vst.msk [vmem:[%s622 + $0x34] sm:$0x1] %vm625, %v603
        %639 = vst.msk [vmem:[%s622 + $0x38] sm:$0xe] %vm623, %v604
        %640 = vst.msk [vmem:[%s622 + $0x3c] sm:$0x1] %vm625, %v605
        %vm641 = vcmask 257024
        %642 = vst.msk [vmem:[#allocation2] sm:$0xf] %vm641, 0
        %vm643 = vcmask 254976
        %644 = vst.msk [vmem:[#allocation2 + $0x4] sm:$0x3] %vm643, 0
        %645 = vst.msk [vmem:[#allocation2 + $0x8] sm:$0xf] %vm641, 0
        %646 = vst.msk [vmem:[#allocation2 + $0xc] sm:$0x3] %vm643, 0
        %s647 = scalar_lea.vmem [#allocation2], 80
        %648 = vst.msk [vmem:[%s647] sm:$0xf] %vm641, 0
        %649 = vst.msk [vmem:[%s647 + $0x4] sm:$0x3] %vm643, 0
        %650 = vst.msk [vmem:[%s647 + $0x8] sm:$0xf] %vm641, 0
        %651 = vst.msk [vmem:[%s647 + $0xc] sm:$0x3] %vm643, 0
        %652 = vst.msk [vmem:[%s622] sm:$0x1] %vm625, 0
        %653 = vst.msk [vmem:[%s622 + $0x8] sm:$0x1] %vm625, 0
        %654 = vst.msk [vmem:[%s622 + $0x10] sm:$0x1] %vm625, 0
        %655 = vst.msk [vmem:[%s622 + $0x18] sm:$0x1] %vm625, 0
        %656 = vst.msk [vmem:[%s622 + $0x20] sm:$0x1] %vm625, 0
        %657 = vst.msk [vmem:[%s622 + $0x28] sm:$0x1] %vm625, 0
        %658 = vst.msk [vmem:[%s622 + $0x30] sm:$0x1] %vm625, 0
        %659 = vst.msk [vmem:[%s622 + $0x38] sm:$0x1] %vm625, 0
        %vm660 = vcmask 254977
        %661 = vst.msk [vmem:[%s622 + $0x4] sm:$0x2] %vm660, 0
        %662 = vst.msk [vmem:[%s622 + $0xc] sm:$0x2] %vm660, 0
        %663 = vst.msk [vmem:[%s622 + $0x14] sm:$0x2] %vm660, 0
        %664 = vst.msk [vmem:[%s622 + $0x1c] sm:$0x2] %vm660, 0
        %665 = vst.msk [vmem:[%s622 + $0x24] sm:$0x2] %vm660, 0
        %666 = vst.msk [vmem:[%s622 + $0x2c] sm:$0x2] %vm660, 0
        %667 = vst.msk [vmem:[%s622 + $0x34] sm:$0x2] %vm660, 0
        %668 = vst.msk [vmem:[%s622 + $0x3c] sm:$0x2] %vm660, 0
        %v669 = vld [vmem:[%s5] sm:$0x1]
        %v671 = vlaneseq
        %v672 = vshrl.u32 %v671, 7
        %v673 = vsub.s32 0, %v672
        %v674 = vrot.slane %v669, %v673
        %v676 = vld [vmem:[#allocation2] sm:$0xf]
        %v677 = vld [vmem:[#allocation2 + $0x8] sm:$0xf]
        %v678 = vld [vmem:[#allocation2 + $0x10] sm:$0xf]
        %v679 = vld [vmem:[#allocation2 + $0x18] sm:$0xf]
        %v680 = vld [vmem:[#allocation2 + $0x20] sm:$0xf]
        %v681 = vld [vmem:[#allocation2 + $0x28] sm:$0xf]
        %v682 = vld [vmem:[#allocation2 + $0x30] sm:$0xf]
        %v683 = vld [vmem:[#allocation2 + $0x38] sm:$0xf]
        %v684 = vld [vmem:[%s4] sm:$0xf]
        %v685 = vld [vmem:[%s4 + $0x4] sm:$0xf]
        %v686 = vld [vmem:[%s4 + $0x8] sm:$0xf]
        %v687 = vld [vmem:[%s4 + $0xc] sm:$0xf]
        %v696 = vunpack.c.l.b16 %v676
        %v697 = vunpack.c.l.b16 %v677
        %v698 = vunpack.c.l.b16 %v678
        %v699 = vunpack.c.l.b16 %v679
        %v700 = vunpack.c.l.b16 %v680
        %v701 = vunpack.c.l.b16 %v681
        %v702 = vunpack.c.l.b16 %v682
        %v703 = vunpack.c.l.b16 %v683
        %v704 = vpack.c.b16 %v697, %v696
        %v705 = vpack.c.b16 %v699, %v698
        %v706 = vpack.c.b16 %v701, %v700
        %v707 = vpack.c.b16 %v703, %v702
        %v712 = vunpack.c.l.b16 %v684
        %v713 = vunpack.c.l.b16 %v685
        %v714 = vunpack.c.l.b16 %v686
        %v715 = vunpack.c.l.b16 %v687
        %v716 = vpack.c.b16 %v713, %v712
        %v717 = vpack.c.b16 %v715, %v714
        %v721 = vsel %vm259, %v704, 0
        %v724 = vsel %vm259, %v705, 0
        %v727 = vsel %vm259, %v706, 0
        %v730 = vsel %vm259, %v707, 0
        %732 = vmatprep.subr.bf16.mxu0 0
        %733 = vmatpush1.bf16.msra.mxu0 0
        %734 = vmatprep.subr.bf16.mxu0 0
        %735 = vmatpush1.bf16.msra.mxu0 0
        %736 = vmatprep.subr.bf16.mxu0 0
        %737 = vmatpush1.bf16.msra.mxu0 0
        %738 = vmatprep.subr.bf16.mxu0 0
        %739 = vmatpush1.bf16.msra.mxu0 0
        %740 = vmatprep.subr.bf16.mxu0 0
        %741 = vmatpush1.bf16.msra.mxu0 0
        %742 = vmatprep.subr.bf16.mxu0 0
        %743 = vmatpush1.bf16.msra.mxu0 0
        %744 = vmatprep.subr.bf16.mxu0 0
        %745 = vmatpush1.bf16.msra.mxu0 %v717
        %746 = vmatprep.subr.bf16.mxu0 0
        %747 = vmatpush1.bf16.msra.mxu0 %v716
        %748 = vmatprep.subr.bf16.mxu0 0
        %749 = vmatpush2.bf16.msra.mxu0 0
        %750 = vmatprep.subr.bf16.mxu0 0
        %751 = vmatpush2.bf16.msra.mxu0 0
        %752 = vmatprep.subr.bf16.mxu0 0
        %753 = vmatpush2.bf16.msra.mxu0 0
        %754 = vmatprep.subr.bf16.mxu0 0
        %755 = vmatpush2.bf16.msra.mxu0 0
        %756 = vmatprep.subr.bf16.mxu0 0
        %757 = vmatpush2.bf16.msra.mxu0 0
        %758 = vmatprep.subr.bf16.mxu0 0
        %759 = vmatpush2.bf16.msra.mxu0 0
        %760 = vmatprep.subr.bf16.mxu0 0
        %761 = vmatpush2.bf16.msra.mxu0 0
        %762 = vmatprep.subr.bf16.mxu0 0
        %763 = vmatpush2.bf16.msra.mxu0 0
        %764 = vmatprep.mubr.bf16.mxu0 0
        %765 = vmatmul.mubr.bf16.gmra.mxu0 %v721
        %v766 = vpop.f32.mrf.mxu0
        %v767 = vadd.f32 0.0, %v766
        %v768 = vpop.f32.mrf.mxu0
        %v769 = vpop.f32.mrf.mxu0
        %v770 = vadd.f32 0.0, %v769
        %v771 = vpop.f32.mrf.mxu0
        %772 = vmatprep.mubr.bf16.mxu0 0
        %773 = vmatmul.mubr.bf16.gmra.mxu0 %v724
        %v774 = vpop.f32.mrf.mxu0
        %v775 = vadd.f32 0.0, %v774
        %v776 = vpop.f32.mrf.mxu0
        %v777 = vpop.f32.mrf.mxu0
        %v778 = vadd.f32 0.0, %v777
        %v779 = vpop.f32.mrf.mxu0
        %780 = vmatprep.mubr.bf16.mxu0 0
        %781 = vmatmul.mubr.bf16.gmra.mxu0 %v727
        %v782 = vpop.f32.mrf.mxu0
        %v783 = vadd.f32 0.0, %v782
        %v784 = vpop.f32.mrf.mxu0
        %v785 = vpop.f32.mrf.mxu0
        %v786 = vadd.f32 0.0, %v785
        %v787 = vpop.f32.mrf.mxu0
        %788 = vmatprep.mubr.bf16.mxu0 0
        %789 = vmatmul.mubr.bf16.gmra.mxu0 %v730
        %v790 = vpop.f32.mrf.mxu0
        %v791 = vadd.f32 0.0, %v790
        %v792 = vpop.f32.mrf.mxu0
        %v793 = vpop.f32.mrf.mxu0
        %v794 = vadd.f32 0.0, %v793
        %v795 = vpop.f32.mrf.mxu0
        %796 = vdwg.mxu0
        %v797 = vadd.f32 %v674, %v767
        %v798 = vadd.f32 %v674, %v770
        %v799 = vadd.f32 %v674, %v775
        %v800 = vadd.f32 %v674, %v778
        %v801 = vadd.f32 %v674, %v783
        %v802 = vadd.f32 %v674, %v786
        %v803 = vadd.f32 %v674, %v791
        %v804 = vadd.f32 %v674, %v794
        %v805 = vld [vmem:[#allocation2] sm:$0xf]
        %v806 = vld [vmem:[#allocation2 + $0x4] sm:$0x1]
        %v807 = vld [vmem:[#allocation2 + $0x8] sm:$0xf]
        %v808 = vld [vmem:[#allocation2 + $0xc] sm:$0x1]
        %v809 = vld [vmem:[#allocation2 + $0x10] sm:$0xf]
        %v810 = vld [vmem:[#allocation2 + $0x14] sm:$0x1]
        %v811 = vld [vmem:[#allocation2 + $0x18] sm:$0xf]
        %v812 = vld [vmem:[#allocation2 + $0x1c] sm:$0x1]
        %v813 = vld [vmem:[#allocation2 + $0x20] sm:$0xf]
        %v814 = vld [vmem:[#allocation2 + $0x24] sm:$0x1]
        %v815 = vld [vmem:[#allocation2 + $0x28] sm:$0xf]
        %v816 = vld [vmem:[#allocation2 + $0x2c] sm:$0x1]
        %v817 = vld [vmem:[#allocation2 + $0x30] sm:$0xf]
        %v818 = vld [vmem:[#allocation2 + $0x34] sm:$0x1]
        %v819 = vld [vmem:[#allocation2 + $0x38] sm:$0xf]
        %v820 = vld [vmem:[#allocation2 + $0x3c] sm:$0x1]
        %vm821 = vsmask.f32 3328
        %vm822 = vsmask.f32 7440
        %vm823 = vmor %vm821, %vm822
        %v825 = vshrl.u32 %v805, 16
        %v827 = vrot.slane %v825, 4
        %v828 = vshll.u32 %v805, 16
        %v830 = vrot.slane %v828, 5
        %v831 = vor.u32 %v827, %v830
        %v832 = vrot.slane %v831, 4
        %v834 = vshll.u32 %v806, 16
        %v836 = vrot.slane %v834, 5
        %v837 = vsel %vm823, %v832, %v836
        %v839 = vshrl.u32 %v807, 16
        %v841 = vrot.slane %v839, 4
        %v842 = vshll.u32 %v807, 16
        %v844 = vrot.slane %v842, 5
        %v845 = vor.u32 %v841, %v844
        %v846 = vrot.slane %v845, 4
        %v848 = vshll.u32 %v808, 16
        %v850 = vrot.slane %v848, 5
        %v851 = vsel %vm823, %v846, %v850
        %v853 = vshrl.u32 %v809, 16
        %v855 = vrot.slane %v853, 4
        %v856 = vshll.u32 %v809, 16
        %v858 = vrot.slane %v856, 5
        %v859 = vor.u32 %v855, %v858
        %v860 = vrot.slane %v859, 4
        %v862 = vshll.u32 %v810, 16
        %v864 = vrot.slane %v862, 5
        %v865 = vsel %vm823, %v860, %v864
        %v867 = vshrl.u32 %v811, 16
        %v869 = vrot.slane %v867, 4
        %v870 = vshll.u32 %v811, 16
        %v872 = vrot.slane %v870, 5
        %v873 = vor.u32 %v869, %v872
        %v874 = vrot.slane %v873, 4
        %v876 = vshll.u32 %v812, 16
        %v878 = vrot.slane %v876, 5
        %v879 = vsel %vm823, %v874, %v878
        %v881 = vshrl.u32 %v813, 16
        %v883 = vrot.slane %v881, 4
        %v884 = vshll.u32 %v813, 16
        %v886 = vrot.slane %v884, 5
        %v887 = vor.u32 %v883, %v886
        %v888 = vrot.slane %v887, 4
        %v890 = vshll.u32 %v814, 16
        %v892 = vrot.slane %v890, 5
        %v893 = vsel %vm823, %v888, %v892
        %v895 = vshrl.u32 %v815, 16
        %v897 = vrot.slane %v895, 4
        %v898 = vshll.u32 %v815, 16
        %v900 = vrot.slane %v898, 5
        %v901 = vor.u32 %v897, %v900
        %v902 = vrot.slane %v901, 4
        %v904 = vshll.u32 %v816, 16
        %v906 = vrot.slane %v904, 5
        %v907 = vsel %vm823, %v902, %v906
        %v909 = vshrl.u32 %v817, 16
        %v911 = vrot.slane %v909, 4
        %v912 = vshll.u32 %v817, 16
        %v914 = vrot.slane %v912, 5
        %v915 = vor.u32 %v911, %v914
        %v916 = vrot.slane %v915, 4
        %v918 = vshll.u32 %v818, 16
        %v920 = vrot.slane %v918, 5
        %v921 = vsel %vm823, %v916, %v920
        %v923 = vshrl.u32 %v819, 16
        %v925 = vrot.slane %v923, 4
        %v926 = vshll.u32 %v819, 16
        %v928 = vrot.slane %v926, 5
        %v929 = vor.u32 %v925, %v928
        %v930 = vrot.slane %v929, 4
        %v932 = vshll.u32 %v820, 16
        %v934 = vrot.slane %v932, 5
        %v935 = vsel %vm823, %v930, %v934
        %v936 = vld [vmem:[%s4 + $0x10] sm:$0xf]
        %v937 = vld [vmem:[%s4 + $0x14] sm:$0xf]
        %v938 = vld [vmem:[%s4 + $0x18] sm:$0xf]
        %v939 = vld [vmem:[%s4 + $0x1c] sm:$0xf]
        %v940 = vunpack.c.l.b16 %v837
        %v941 = vunpack.c.l.b16 %v851
        %v942 = vunpack.c.l.b16 %v865
        %v943 = vunpack.c.l.b16 %v879
        %v944 = vunpack.c.l.b16 %v893
        %v945 = vunpack.c.l.b16 %v907
        %v946 = vunpack.c.l.b16 %v921
        %v947 = vunpack.c.l.b16 %v935
        %v948 = vpack.c.b16 %v941, %v940
        %v949 = vpack.c.b16 %v943, %v942
        %v950 = vpack.c.b16 %v945, %v944
        %v951 = vpack.c.b16 %v947, %v946
        %v956 = vunpack.c.l.b16 %v936
        %v957 = vunpack.c.l.b16 %v937
        %v958 = vunpack.c.l.b16 %v938
        %v959 = vunpack.c.l.b16 %v939
        %v960 = vpack.c.b16 %v957, %v956
        %v961 = vpack.c.b16 %v959, %v958
        %v965 = vsel %vm259, %v948, 0
        %v968 = vsel %vm259, %v949, 0
        %v971 = vsel %vm259, %v950, 0
        %v974 = vsel %vm259, %v951, 0
        %976 = vmatprep.subr.bf16.mxu0 0
        %977 = vmatpush1.bf16.msra.mxu0 0
        %978 = vmatprep.subr.bf16.mxu0 0
        %979 = vmatpush1.bf16.msra.mxu0 0
        %980 = vmatprep.subr.bf16.mxu0 0
        %981 = vmatpush1.bf16.msra.mxu0 0
        %982 = vmatprep.subr.bf16.mxu0 0
        %983 = vmatpush1.bf16.msra.mxu0 0
        %984 = vmatprep.subr.bf16.mxu0 0
        %985 = vmatpush1.bf16.msra.mxu0 0
        %986 = vmatprep.subr.bf16.mxu0 0
        %987 = vmatpush1.bf16.msra.mxu0 0
        %988 = vmatprep.subr.bf16.mxu0 0
        %989 = vmatpush1.bf16.msra.mxu0 %v961
        %990 = vmatprep.subr.bf16.mxu0 0
        %991 = vmatpush1.bf16.msra.mxu0 %v960
        %992 = vmatprep.subr.bf16.mxu0 0
        %993 = vmatpush2.bf16.msra.mxu0 0
        %994 = vmatprep.subr.bf16.mxu0 0
        %995 = vmatpush2.bf16.msra.mxu0 0
        %996 = vmatprep.subr.bf16.mxu0 0
        %997 = vmatpush2.bf16.msra.mxu0 0
        %998 = vmatprep.subr.bf16.mxu0 0
        %999 = vmatpush2.bf16.msra.mxu0 0
        %1000 = vmatprep.subr.bf16.mxu0 0
        %1001 = vmatpush2.bf16.msra.mxu0 0
        %1002 = vmatprep.subr.bf16.mxu0 0
        %1003 = vmatpush2.bf16.msra.mxu0 0
        %1004 = vmatprep.subr.bf16.mxu0 0
        %1005 = vmatpush2.bf16.msra.mxu0 0
        %1006 = vmatprep.subr.bf16.mxu0 0
        %1007 = vmatpush2.bf16.msra.mxu0 0
        %1008 = vmatprep.mubr.bf16.mxu0 0
        %1009 = vmatmul.mubr.bf16.gmra.mxu0 %v965
        %v1010 = vpop.f32.mrf.mxu0
        %v1011 = vadd.f32 0.0, %v1010
        %v1012 = vpop.f32.mrf.mxu0
        %v1013 = vpop.f32.mrf.mxu0
        %v1014 = vadd.f32 0.0, %v1013
        %v1015 = vpop.f32.mrf.mxu0
        %1016 = vmatprep.mubr.bf16.mxu0 0
        %1017 = vmatmul.mubr.bf16.gmra.mxu0 %v968
        %v1018 = vpop.f32.mrf.mxu0
        %v1019 = vadd.f32 0.0, %v1018
        %v1020 = vpop.f32.mrf.mxu0
        %v1021 = vpop.f32.mrf.mxu0
        %v1022 = vadd.f32 0.0, %v1021
        %v1023 = vpop.f32.mrf.mxu0
        %1024 = vmatprep.mubr.bf16.mxu0 0
        %1025 = vmatmul.mubr.bf16.gmra.mxu0 %v971
        %v1026 = vpop.f32.mrf.mxu0
        %v1027 = vadd.f32 0.0, %v1026
        %v1028 = vpop.f32.mrf.mxu0
        %v1029 = vpop.f32.mrf.mxu0
        %v1030 = vadd.f32 0.0, %v1029
        %v1031 = vpop.f32.mrf.mxu0
        %1032 = vmatprep.mubr.bf16.mxu0 0
        %1033 = vmatmul.mubr.bf16.gmra.mxu0 %v974
        %v1034 = vpop.f32.mrf.mxu0
        %v1035 = vadd.f32 0.0, %v1034
        %v1036 = vpop.f32.mrf.mxu0
        %v1037 = vpop.f32.mrf.mxu0
        %v1038 = vadd.f32 0.0, %v1037
        %v1039 = vpop.f32.mrf.mxu0
        %1040 = vdwg.mxu0
        %v1041 = vadd.f32 %v797, %v1011
        %v1042 = vadd.f32 %v798, %v1014
        %v1043 = vadd.f32 %v799, %v1019
        %v1044 = vadd.f32 %v800, %v1022
        %v1045 = vadd.f32 %v801, %v1027
        %v1046 = vadd.f32 %v802, %v1030
        %v1047 = vadd.f32 %v803, %v1035
        %v1048 = vadd.f32 %v804, %v1038
        %v1049 = vld [vmem:[#allocation2] sm:$0xe]
        %v1050 = vld [vmem:[#allocation2 + $0x8] sm:$0xe]
        %v1051 = vld [vmem:[#allocation2 + $0x10] sm:$0xe]
        %v1052 = vld [vmem:[#allocation2 + $0x18] sm:$0xe]
        %v1053 = vld [vmem:[#allocation2 + $0x20] sm:$0xe]
        %v1054 = vld [vmem:[#allocation2 + $0x28] sm:$0xe]
        %v1055 = vld [vmem:[#allocation2 + $0x30] sm:$0xe]
        %v1056 = vld [vmem:[#allocation2 + $0x38] sm:$0xe]
        %vm1073 = vcmask 1042432
        %vm1074 = vcmask 1046532
        %vm1075 = vmor %vm1073, %vm1074
        %v1076 = vrot.slane %v1049, 5
        %v1077 = vrot.slane %v1076, 4
        %v1078 = vrot.slane %v806, 5
        %v1079 = vsel %vm1075, %v1077, %v1078
        %v1080 = vrot.slane %v1050, 5
        %v1081 = vrot.slane %v1080, 4
        %v1082 = vrot.slane %v808, 5
        %v1083 = vsel %vm1075, %v1081, %v1082
        %v1084 = vrot.slane %v1051, 5
        %v1085 = vrot.slane %v1084, 4
        %v1086 = vrot.slane %v810, 5
        %v1087 = vsel %vm1075, %v1085, %v1086
        %v1088 = vrot.slane %v1052, 5
        %v1089 = vrot.slane %v1088, 4
        %v1090 = vrot.slane %v812, 5
        %v1091 = vsel %vm1075, %v1089, %v1090
        %v1092 = vrot.slane %v1053, 5
        %v1093 = vrot.slane %v1092, 4
        %v1094 = vrot.slane %v814, 5
        %v1095 = vsel %vm1075, %v1093, %v1094
        %v1096 = vrot.slane %v1054, 5
        %v1097 = vrot.slane %v1096, 4
        %v1098 = vrot.slane %v816, 5
        %v1099 = vsel %vm1075, %v1097, %v1098
        %v1100 = vrot.slane %v1055, 5
        %v1101 = vrot.slane %v1100, 4
        %v1102 = vrot.slane %v818, 5
        %v1103 = vsel %vm1075, %v1101, %v1102
        %v1104 = vrot.slane %v1056, 5
        %v1105 = vrot.slane %v1104, 4
        %v1106 = vrot.slane %v820, 5
        %v1107 = vsel %vm1075, %v1105, %v1106
        %v1108 = vld [vmem:[%s4 + $0x20] sm:$0xf]
        %v1109 = vld [vmem:[%s4 + $0x24] sm:$0xf]
        %v1110 = vld [vmem:[%s4 + $0x28] sm:$0xf]
        %v1111 = vld [vmem:[%s4 + $0x2c] sm:$0xf]
        %v1112 = vunpack.c.l.b16 %v1079
        %v1113 = vunpack.c.l.b16 %v1083
        %v1114 = vunpack.c.l.b16 %v1087
        %v1115 = vunpack.c.l.b16 %v1091
        %v1116 = vunpack.c.l.b16 %v1095
        %v1117 = vunpack.c.l.b16 %v1099
        %v1118 = vunpack.c.l.b16 %v1103
        %v1119 = vunpack.c.l.b16 %v1107
        %v1120 = vpack.c.b16 %v1113, %v1112
        %v1121 = vpack.c.b16 %v1115, %v1114
        %v1122 = vpack.c.b16 %v1117, %v1116
        %v1123 = vpack.c.b16 %v1119, %v1118
        %v1128 = vunpack.c.l.b16 %v1108
        %v1129 = vunpack.c.l.b16 %v1109
        %v1130 = vunpack.c.l.b16 %v1110
        %v1131 = vunpack.c.l.b16 %v1111
        %v1132 = vpack.c.b16 %v1129, %v1128
        %v1133 = vpack.c.b16 %v1131, %v1130
        %v1137 = vsel %vm259, %v1120, 0
        %v1140 = vsel %vm259, %v1121, 0
        %v1143 = vsel %vm259, %v1122, 0
        %v1146 = vsel %vm259, %v1123, 0
        %1148 = vmatprep.subr.bf16.mxu0 0
        %1149 = vmatpush1.bf16.msra.mxu0 0
        %1150 = vmatprep.subr.bf16.mxu0 0
        %1151 = vmatpush1.bf16.msra.mxu0 0
        %1152 = vmatprep.subr.bf16.mxu0 0
        %1153 = vmatpush1.bf16.msra.mxu0 0
        %1154 = vmatprep.subr.bf16.mxu0 0
        %1155 = vmatpush1.bf16.msra.mxu0 0
        %1156 = vmatprep.subr.bf16.mxu0 0
        %1157 = vmatpush1.bf16.msra.mxu0 0
        %1158 = vmatprep.subr.bf16.mxu0 0
        %1159 = vmatpush1.bf16.msra.mxu0 0
        %1160 = vmatprep.subr.bf16.mxu0 0
        %1161 = vmatpush1.bf16.msra.mxu0 %v1133
        %1162 = vmatprep.subr.bf16.mxu0 0
        %1163 = vmatpush1.bf16.msra.mxu0 %v1132
        %1164 = vmatprep.subr.bf16.mxu0 0
        %1165 = vmatpush2.bf16.msra.mxu0 0
        %1166 = vmatprep.subr.bf16.mxu0 0
        %1167 = vmatpush2.bf16.msra.mxu0 0
        %1168 = vmatprep.subr.bf16.mxu0 0
        %1169 = vmatpush2.bf16.msra.mxu0 0
        %1170 = vmatprep.subr.bf16.mxu0 0
        %1171 = vmatpush2.bf16.msra.mxu0 0
        %1172 = vmatprep.subr.bf16.mxu0 0
        %1173 = vmatpush2.bf16.msra.mxu0 0
        %1174 = vmatprep.subr.bf16.mxu0 0
        %1175 = vmatpush2.bf16.msra.mxu0 0
        %1176 = vmatprep.subr.bf16.mxu0 0
        %1177 = vmatpush2.bf16.msra.mxu0 0
        %1178 = vmatprep.subr.bf16.mxu0 0
        %1179 = vmatpush2.bf16.msra.mxu0 0
        %1180 = vmatprep.mubr.bf16.mxu0 0
        %1181 = vmatmul.mubr.bf16.gmra.mxu0 %v1137
        %v1182 = vpop.f32.mrf.mxu0
        %v1183 = vadd.f32 0.0, %v1182
        %v1184 = vpop.f32.mrf.mxu0
        %v1185 = vpop.f32.mrf.mxu0
        %v1186 = vadd.f32 0.0, %v1185
        %v1187 = vpop.f32.mrf.mxu0
        %1188 = vmatprep.mubr.bf16.mxu0 0
        %1189 = vmatmul.mubr.bf16.gmra.mxu0 %v1140
        %v1190 = vpop.f32.mrf.mxu0
        %v1191 = vadd.f32 0.0, %v1190
        %v1192 = vpop.f32.mrf.mxu0
        %v1193 = vpop.f32.mrf.mxu0
        %v1194 = vadd.f32 0.0, %v1193
        %v1195 = vpop.f32.mrf.mxu0
        %1196 = vmatprep.mubr.bf16.mxu0 0
        %1197 = vmatmul.mubr.bf16.gmra.mxu0 %v1143
        %v1198 = vpop.f32.mrf.mxu0
        %v1199 = vadd.f32 0.0, %v1198
        %v1200 = vpop.f32.mrf.mxu0
        %v1201 = vpop.f32.mrf.mxu0
        %v1202 = vadd.f32 0.0, %v1201
        %v1203 = vpop.f32.mrf.mxu0
        %1204 = vmatprep.mubr.bf16.mxu0 0
        %1205 = vmatmul.mubr.bf16.gmra.mxu0 %v1146
        %v1206 = vpop.f32.mrf.mxu0
        %v1207 = vadd.f32 0.0, %v1206
        %v1208 = vpop.f32.mrf.mxu0
        %v1209 = vpop.f32.mrf.mxu0
        %v1210 = vadd.f32 0.0, %v1209
        %v1211 = vpop.f32.mrf.mxu0
        %1212 = vdwg.mxu0
        %v1213 = vadd.f32 %v1041, %v1183
        %v1214 = vadd.f32 %v1042, %v1186
        %v1215 = vadd.f32 %v1043, %v1191
        %v1216 = vadd.f32 %v1044, %v1194
        %v1217 = vadd.f32 %v1045, %v1199
        %v1218 = vadd.f32 %v1046, %v1202
        %v1219 = vadd.f32 %v1047, %v1207
        %v1220 = vadd.f32 %v1048, %v1210
        %v1221 = vld [vmem:[#allocation2 + $0x4] sm:$0x3]
        %v1222 = vld [vmem:[#allocation2 + $0xc] sm:$0x3]
        %v1223 = vld [vmem:[#allocation2 + $0x14] sm:$0x3]
        %v1224 = vld [vmem:[#allocation2 + $0x1c] sm:$0x3]
        %v1225 = vld [vmem:[#allocation2 + $0x24] sm:$0x3]
        %v1226 = vld [vmem:[#allocation2 + $0x2c] sm:$0x3]
        %v1227 = vld [vmem:[#allocation2 + $0x34] sm:$0x3]
        %v1228 = vld [vmem:[#allocation2 + $0x3c] sm:$0x3]
        %vm1229 = vsmask.f32 2304
        %vm1230 = vsmask.f32 6416
        %vm1231 = vmor %vm1229, %vm1230
        %v1233 = vshrl.u32 %v1049, 16
        %v1235 = vrot.slane %v1233, 5
        %v1236 = vshll.u32 %v1049, 16
        %v1238 = vrot.slane %v1236, 6
        %v1239 = vor.u32 %v1235, %v1238
        %v1240 = vrot.slane %v1239, 4
        %v1242 = vshrl.u32 %v1221, 16
        %v1244 = vrot.slane %v1242, 5
        %v1245 = vshll.u32 %v1221, 16
        %v1247 = vrot.slane %v1245, 6
        %v1248 = vor.u32 %v1244, %v1247
        %v1249 = vsel %vm1231, %v1240, %v1248
        %v1251 = vshrl.u32 %v1050, 16
        %v1253 = vrot.slane %v1251, 5
        %v1254 = vshll.u32 %v1050, 16
        %v1256 = vrot.slane %v1254, 6
        %v1257 = vor.u32 %v1253, %v1256
        %v1258 = vrot.slane %v1257, 4
        %v1260 = vshrl.u32 %v1222, 16
        %v1262 = vrot.slane %v1260, 5
        %v1263 = vshll.u32 %v1222, 16
        %v1265 = vrot.slane %v1263, 6
        %v1266 = vor.u32 %v1262, %v1265
        %v1267 = vsel %vm1231, %v1258, %v1266
        %v1269 = vshrl.u32 %v1051, 16
        %v1271 = vrot.slane %v1269, 5
        %v1272 = vshll.u32 %v1051, 16
        %v1274 = vrot.slane %v1272, 6
        %v1275 = vor.u32 %v1271, %v1274
        %v1276 = vrot.slane %v1275, 4
        %v1278 = vshrl.u32 %v1223, 16
        %v1280 = vrot.slane %v1278, 5
        %v1281 = vshll.u32 %v1223, 16
        %v1283 = vrot.slane %v1281, 6
        %v1284 = vor.u32 %v1280, %v1283
        %v1285 = vsel %vm1231, %v1276, %v1284
        %v1287 = vshrl.u32 %v1052, 16
        %v1289 = vrot.slane %v1287, 5
        %v1290 = vshll.u32 %v1052, 16
        %v1292 = vrot.slane %v1290, 6
        %v1293 = vor.u32 %v1289, %v1292
        %v1294 = vrot.slane %v1293, 4
        %v1296 = vshrl.u32 %v1224, 16
        %v1298 = vrot.slane %v1296, 5
        %v1299 = vshll.u32 %v1224, 16
        %v1301 = vrot.slane %v1299, 6
        %v1302 = vor.u32 %v1298, %v1301
        %v1303 = vsel %vm1231, %v1294, %v1302
        %v1305 = vshrl.u32 %v1053, 16
        %v1307 = vrot.slane %v1305, 5
        %v1308 = vshll.u32 %v1053, 16
        %v1310 = vrot.slane %v1308, 6
        %v1311 = vor.u32 %v1307, %v1310
        %v1312 = vrot.slane %v1311, 4
        %v1314 = vshrl.u32 %v1225, 16
        %v1316 = vrot.slane %v1314, 5
        %v1317 = vshll.u32 %v1225, 16
        %v1319 = vrot.slane %v1317, 6
        %v1320 = vor.u32 %v1316, %v1319
        %v1321 = vsel %vm1231, %v1312, %v1320
        %v1323 = vshrl.u32 %v1054, 16
        %v1325 = vrot.slane %v1323, 5
        %v1326 = vshll.u32 %v1054, 16
        %v1328 = vrot.slane %v1326, 6
        %v1329 = vor.u32 %v1325, %v1328
        %v1330 = vrot.slane %v1329, 4
        %v1332 = vshrl.u32 %v1226, 16
        %v1334 = vrot.slane %v1332, 5
        %v1335 = vshll.u32 %v1226, 16
        %v1337 = vrot.slane %v1335, 6
        %v1338 = vor.u32 %v1334, %v1337
        %v1339 = vsel %vm1231, %v1330, %v1338
        %v1341 = vshrl.u32 %v1055, 16
        %v1343 = vrot.slane %v1341, 5
        %v1344 = vshll.u32 %v1055, 16
        %v1346 = vrot.slane %v1344, 6
        %v1347 = vor.u32 %v1343, %v1346
        %v1348 = vrot.slane %v1347, 4
        %v1350 = vshrl.u32 %v1227, 16
        %v1352 = vrot.slane %v1350, 5
        %v1353 = vshll.u32 %v1227, 16
        %v1355 = vrot.slane %v1353, 6
        %v1356 = vor.u32 %v1352, %v1355
        %v1357 = vsel %vm1231, %v1348, %v1356
        %v1359 = vshrl.u32 %v1056, 16
        %v1361 = vrot.slane %v1359, 5
        %v1362 = vshll.u32 %v1056, 16
        %v1364 = vrot.slane %v1362, 6
        %v1365 = vor.u32 %v1361, %v1364
        %v1366 = vrot.slane %v1365, 4
        %v1368 = vshrl.u32 %v1228, 16
        %v1370 = vrot.slane %v1368, 5
        %v1371 = vshll.u32 %v1228, 16
        %v1373 = vrot.slane %v1371, 6
        %v1374 = vor.u32 %v1370, %v1373
        %v1375 = vsel %vm1231, %v1366, %v1374
        %v1376 = vld [vmem:[%s4 + $0x30] sm:$0xf]
        %v1377 = vld [vmem:[%s4 + $0x34] sm:$0xf]
        %v1378 = vld [vmem:[%s4 + $0x38] sm:$0xf]
        %v1379 = vld [vmem:[%s4 + $0x3c] sm:$0xf]
        %v1380 = vunpack.c.l.b16 %v1249
        %v1381 = vunpack.c.l.b16 %v1267
        %v1382 = vunpack.c.l.b16 %v1285
        %v1383 = vunpack.c.l.b16 %v1303
        %v1384 = vunpack.c.l.b16 %v1321
        %v1385 = vunpack.c.l.b16 %v1339
        %v1386 = vunpack.c.l.b16 %v1357
        %v1387 = vunpack.c.l.b16 %v1375
        %v1388 = vpack.c.b16 %v1381, %v1380
        %v1389 = vpack.c.b16 %v1383, %v1382
        %v1390 = vpack.c.b16 %v1385, %v1384
        %v1391 = vpack.c.b16 %v1387, %v1386
        %v1396 = vunpack.c.l.b16 %v1376
        %v1397 = vunpack.c.l.b16 %v1377
        %v1398 = vunpack.c.l.b16 %v1378
        %v1399 = vunpack.c.l.b16 %v1379
        %v1400 = vpack.c.b16 %v1397, %v1396
        %v1401 = vpack.c.b16 %v1399, %v1398
        %v1405 = vsel %vm259, %v1388, 0
        %v1408 = vsel %vm259, %v1389, 0
        %v1411 = vsel %vm259, %v1390, 0
        %v1414 = vsel %vm259, %v1391, 0
        %1416 = vmatprep.subr.bf16.mxu0 0
        %1417 = vmatpush1.bf16.msra.mxu0 0
        %1418 = vmatprep.subr.bf16.mxu0 0
        %1419 = vmatpush1.bf16.msra.mxu0 0
        %1420 = vmatprep.subr.bf16.mxu0 0
        %1421 = vmatpush1.bf16.msra.mxu0 0
        %1422 = vmatprep.subr.bf16.mxu0 0
        %1423 = vmatpush1.bf16.msra.mxu0 0
        %1424 = vmatprep.subr.bf16.mxu0 0
        %1425 = vmatpush1.bf16.msra.mxu0 0
        %1426 = vmatprep.subr.bf16.mxu0 0
        %1427 = vmatpush1.bf16.msra.mxu0 0
        %1428 = vmatprep.subr.bf16.mxu0 0
        %1429 = vmatpush1.bf16.msra.mxu0 %v1401
        %1430 = vmatprep.subr.bf16.mxu0 0
        %1431 = vmatpush1.bf16.msra.mxu0 %v1400
        %1432 = vmatprep.subr.bf16.mxu0 0
        %1433 = vmatpush2.bf16.msra.mxu0 0
        %1434 = vmatprep.subr.bf16.mxu0 0
        %1435 = vmatpush2.bf16.msra.mxu0 0
        %1436 = vmatprep.subr.bf16.mxu0 0
        %1437 = vmatpush2.bf16.msra.mxu0 0
        %1438 = vmatprep.subr.bf16.mxu0 0
        %1439 = vmatpush2.bf16.msra.mxu0 0
        %1440 = vmatprep.subr.bf16.mxu0 0
        %1441 = vmatpush2.bf16.msra.mxu0 0
        %1442 = vmatprep.subr.bf16.mxu0 0
        %1443 = vmatpush2.bf16.msra.mxu0 0
        %1444 = vmatprep.subr.bf16.mxu0 0
        %1445 = vmatpush2.bf16.msra.mxu0 0
        %1446 = vmatprep.subr.bf16.mxu0 0
        %1447 = vmatpush2.bf16.msra.mxu0 0
        %1448 = vmatprep.mubr.bf16.mxu0 0
        %1449 = vmatmul.mubr.bf16.gmra.mxu0 %v1405
        %v1450 = vpop.f32.mrf.mxu0
        %v1451 = vadd.f32 0.0, %v1450
        %v1452 = vpop.f32.mrf.mxu0
        %v1453 = vpop.f32.mrf.mxu0
        %v1454 = vadd.f32 0.0, %v1453
        %v1455 = vpop.f32.mrf.mxu0
        %1456 = vmatprep.mubr.bf16.mxu0 0
        %1457 = vmatmul.mubr.bf16.gmra.mxu0 %v1408
        %v1458 = vpop.f32.mrf.mxu0
        %v1459 = vadd.f32 0.0, %v1458
        %v1460 = vpop.f32.mrf.mxu0
        %v1461 = vpop.f32.mrf.mxu0
        %v1462 = vadd.f32 0.0, %v1461
        %v1463 = vpop.f32.mrf.mxu0
        %1464 = vmatprep.mubr.bf16.mxu0 0
        %1465 = vmatmul.mubr.bf16.gmra.mxu0 %v1411
        %v1466 = vpop.f32.mrf.mxu0
        %v1467 = vadd.f32 0.0, %v1466
        %v1468 = vpop.f32.mrf.mxu0
        %v1469 = vpop.f32.mrf.mxu0
        %v1470 = vadd.f32 0.0, %v1469
        %v1471 = vpop.f32.mrf.mxu0
        %1472 = vmatprep.mubr.bf16.mxu0 0
        %1473 = vmatmul.mubr.bf16.gmra.mxu0 %v1414
        %v1474 = vpop.f32.mrf.mxu0
        %v1475 = vadd.f32 0.0, %v1474
        %v1476 = vpop.f32.mrf.mxu0
        %v1477 = vpop.f32.mrf.mxu0
        %v1478 = vadd.f32 0.0, %v1477
        %v1479 = vpop.f32.mrf.mxu0
        %1480 = vdwg.mxu0
        %v1481 = vadd.f32 %v1213, %v1451
        %v1482 = vadd.f32 %v1214, %v1454
        %v1483 = vadd.f32 %v1215, %v1459
        %v1484 = vadd.f32 %v1216, %v1462
        %v1485 = vadd.f32 %v1217, %v1467
        %v1486 = vadd.f32 %v1218, %v1470
        %v1487 = vadd.f32 %v1219, %v1475
        %v1488 = vadd.f32 %v1220, %v1478
        %v1489 = vld [vmem:[#allocation2] sm:$0xc]
        %v1490 = vld [vmem:[#allocation2 + $0x8] sm:$0xc]
        %v1491 = vld [vmem:[#allocation2 + $0x10] sm:$0xc]
        %v1492 = vld [vmem:[#allocation2 + $0x18] sm:$0xc]
        %v1493 = vld [vmem:[#allocation2 + $0x20] sm:$0xc]
        %v1494 = vld [vmem:[#allocation2 + $0x28] sm:$0xc]
        %v1495 = vld [vmem:[#allocation2 + $0x30] sm:$0xc]
        %v1496 = vld [vmem:[#allocation2 + $0x38] sm:$0xc]
        %vm1513 = vcmask 1041408
        %vm1514 = vcmask 1045508
        %vm1515 = vmor %vm1513, %vm1514
        %v1516 = vrot.slane %v1489, 6
        %v1517 = vrot.slane %v1516, 4
        %v1518 = vrot.slane %v1221, 6
        %v1519 = vsel %vm1515, %v1517, %v1518
        %v1520 = vrot.slane %v1490, 6
        %v1521 = vrot.slane %v1520, 4
        %v1522 = vrot.slane %v1222, 6
        %v1523 = vsel %vm1515, %v1521, %v1522
        %v1524 = vrot.slane %v1491, 6
        %v1525 = vrot.slane %v1524, 4
        %v1526 = vrot.slane %v1223, 6
        %v1527 = vsel %vm1515, %v1525, %v1526
        %v1528 = vrot.slane %v1492, 6
        %v1529 = vrot.slane %v1528, 4
        %v1530 = vrot.slane %v1224, 6
        %v1531 = vsel %vm1515, %v1529, %v1530
        %v1532 = vrot.slane %v1493, 6
        %v1533 = vrot.slane %v1532, 4
        %v1534 = vrot.slane %v1225, 6
        %v1535 = vsel %vm1515, %v1533, %v1534
        %v1536 = vrot.slane %v1494, 6
        %v1537 = vrot.slane %v1536, 4
        %v1538 = vrot.slane %v1226, 6
        %v1539 = vsel %vm1515, %v1537, %v1538
        %v1540 = vrot.slane %v1495, 6
        %v1541 = vrot.slane %v1540, 4
        %v1542 = vrot.slane %v1227, 6
        %v1543 = vsel %vm1515, %v1541, %v1542
        %v1544 = vrot.slane %v1496, 6
        %v1545 = vrot.slane %v1544, 4
        %v1546 = vrot.slane %v1228, 6
        %v1547 = vsel %vm1515, %v1545, %v1546
        %v1548 = vld [vmem:[%s4 + $0x40] sm:$0xf]
        %v1549 = vld [vmem:[%s4 + $0x44] sm:$0xf]
        %v1550 = vld [vmem:[%s4 + $0x48] sm:$0xf]
        %v1551 = vld [vmem:[%s4 + $0x4c] sm:$0xf]
        %v1552 = vunpack.c.l.b16 %v1519
        %v1553 = vunpack.c.l.b16 %v1523
        %v1554 = vunpack.c.l.b16 %v1527
        %v1555 = vunpack.c.l.b16 %v1531
        %v1556 = vunpack.c.l.b16 %v1535
        %v1557 = vunpack.c.l.b16 %v1539
        %v1558 = vunpack.c.l.b16 %v1543
        %v1559 = vunpack.c.l.b16 %v1547
        %v1560 = vpack.c.b16 %v1553, %v1552
        %v1561 = vpack.c.b16 %v1555, %v1554
        %v1562 = vpack.c.b16 %v1557, %v1556
        %v1563 = vpack.c.b16 %v1559, %v1558
        %v1568 = vunpack.c.l.b16 %v1548
        %v1569 = vunpack.c.l.b16 %v1549
        %v1570 = vunpack.c.l.b16 %v1550
        %v1571 = vunpack.c.l.b16 %v1551
        %v1572 = vpack.c.b16 %v1569, %v1568
        %v1573 = vpack.c.b16 %v1571, %v1570
        %v1577 = vsel %vm259, %v1560, 0
        %v1580 = vsel %vm259, %v1561, 0
        %v1583 = vsel %vm259, %v1562, 0
        %v1586 = vsel %vm259, %v1563, 0
        %1588 = vmatprep.subr.bf16.mxu0 0
        %1589 = vmatpush1.bf16.msra.mxu0 0
        %1590 = vmatprep.subr.bf16.mxu0 0
        %1591 = vmatpush1.bf16.msra.mxu0 0
        %1592 = vmatprep.subr.bf16.mxu0 0
        %1593 = vmatpush1.bf16.msra.mxu0 0
        %1594 = vmatprep.subr.bf16.mxu0 0
        %1595 = vmatpush1.bf16.msra.mxu0 0
        %1596 = vmatprep.subr.bf16.mxu0 0
        %1597 = vmatpush1.bf16.msra.mxu0 0
        %1598 = vmatprep.subr.bf16.mxu0 0
        %1599 = vmatpush1.bf16.msra.mxu0 0
        %1600 = vmatprep.subr.bf16.mxu0 0
        %1601 = vmatpush1.bf16.msra.mxu0 %v1573
        %1602 = vmatprep.subr.bf16.mxu0 0
        %1603 = vmatpush1.bf16.msra.mxu0 %v1572
        %1604 = vmatprep.subr.bf16.mxu0 0
        %1605 = vmatpush2.bf16.msra.mxu0 0
        %1606 = vmatprep.subr.bf16.mxu0 0
        %1607 = vmatpush2.bf16.msra.mxu0 0
        %1608 = vmatprep.subr.bf16.mxu0 0
        %1609 = vmatpush2.bf16.msra.mxu0 0
        %1610 = vmatprep.subr.bf16.mxu0 0
        %1611 = vmatpush2.bf16.msra.mxu0 0
        %1612 = vmatprep.subr.bf16.mxu0 0
        %1613 = vmatpush2.bf16.msra.mxu0 0
        %1614 = vmatprep.subr.bf16.mxu0 0
        %1615 = vmatpush2.bf16.msra.mxu0 0
        %1616 = vmatprep.subr.bf16.mxu0 0
        %1617 = vmatpush2.bf16.msra.mxu0 0
        %1618 = vmatprep.subr.bf16.mxu0 0
        %1619 = vmatpush2.bf16.msra.mxu0 0
        %1620 = vmatprep.mubr.bf16.mxu0 0
        %1621 = vmatmul.mubr.bf16.gmra.mxu0 %v1577
        %v1622 = vpop.f32.mrf.mxu0
        %v1623 = vadd.f32 0.0, %v1622
        %v1624 = vpop.f32.mrf.mxu0
        %v1625 = vpop.f32.mrf.mxu0
        %v1626 = vadd.f32 0.0, %v1625
        %v1627 = vpop.f32.mrf.mxu0
        %1628 = vmatprep.mubr.bf16.mxu0 0
        %1629 = vmatmul.mubr.bf16.gmra.mxu0 %v1580
        %v1630 = vpop.f32.mrf.mxu0
        %v1631 = vadd.f32 0.0, %v1630
        %v1632 = vpop.f32.mrf.mxu0
        %v1633 = vpop.f32.mrf.mxu0
        %v1634 = vadd.f32 0.0, %v1633
        %v1635 = vpop.f32.mrf.mxu0
        %1636 = vmatprep.mubr.bf16.mxu0 0
        %1637 = vmatmul.mubr.bf16.gmra.mxu0 %v1583
        %v1638 = vpop.f32.mrf.mxu0
        %v1639 = vadd.f32 0.0, %v1638
        %v1640 = vpop.f32.mrf.mxu0
        %v1641 = vpop.f32.mrf.mxu0
        %v1642 = vadd.f32 0.0, %v1641
        %v1643 = vpop.f32.mrf.mxu0
        %1644 = vmatprep.mubr.bf16.mxu0 0
        %1645 = vmatmul.mubr.bf16.gmra.mxu0 %v1586
        %v1646 = vpop.f32.mrf.mxu0
        %v1647 = vadd.f32 0.0, %v1646
        %v1648 = vpop.f32.mrf.mxu0
        %v1649 = vpop.f32.mrf.mxu0
        %v1650 = vadd.f32 0.0, %v1649
        %v1651 = vpop.f32.mrf.mxu0
        %1652 = vdwg.mxu0
        %v1653 = vadd.f32 %v1481, %v1623
        %v1654 = vadd.f32 %v1482, %v1626
        %v1655 = vadd.f32 %v1483, %v1631
        %v1656 = vadd.f32 %v1484, %v1634
        %v1657 = vadd.f32 %v1485, %v1639
        %v1658 = vadd.f32 %v1486, %v1642
        %v1659 = vadd.f32 %v1487, %v1647
        %v1660 = vadd.f32 %v1488, %v1650
        %s1661 = scalar_lea.vmem [#allocation2], 8
        %v1662 = vld [vmem:[%s1661] sm:$0xf]
        %v1663 = vld [vmem:[%s1661 + $0x8] sm:$0xf]
        %v1664 = vld [vmem:[%s1661 + $0x10] sm:$0xf]
        %v1665 = vld [vmem:[%s1661 + $0x18] sm:$0xf]
        %v1666 = vld [vmem:[%s1661 + $0x20] sm:$0xf]
        %v1667 = vld [vmem:[%s1661 + $0x28] sm:$0xf]
        %v1668 = vld [vmem:[%s1661 + $0x30] sm:$0xf]
        %v1669 = vld [vmem:[%s1661 + $0x38] sm:$0xf]
        %v1670 = vld [vmem:[%s4 + $0x50] sm:$0xf]
        %v1671 = vld [vmem:[%s4 + $0x54] sm:$0xf]
        %v1672 = vld [vmem:[%s4 + $0x58] sm:$0xf]
        %v1673 = vld [vmem:[%s4 + $0x5c] sm:$0xf]
        %v1682 = vunpack.c.l.b16 %v1662
        %v1683 = vunpack.c.l.b16 %v1663
        %v1684 = vunpack.c.l.b16 %v1664
        %v1685 = vunpack.c.l.b16 %v1665
        %v1686 = vunpack.c.l.b16 %v1666
        %v1687 = vunpack.c.l.b16 %v1667
        %v1688 = vunpack.c.l.b16 %v1668
        %v1689 = vunpack.c.l.b16 %v1669
        %v1690 = vpack.c.b16 %v1683, %v1682
        %v1691 = vpack.c.b16 %v1685, %v1684
        %v1692 = vpack.c.b16 %v1687, %v1686
        %v1693 = vpack.c.b16 %v1689, %v1688
        %v1698 = vunpack.c.l.b16 %v1670
        %v1699 = vunpack.c.l.b16 %v1671
        %v1700 = vunpack.c.l.b16 %v1672
        %v1701 = vunpack.c.l.b16 %v1673
        %v1702 = vpack.c.b16 %v1699, %v1698
        %v1703 = vpack.c.b16 %v1701, %v1700
        %v1707 = vsel %vm259, %v1690, 0
        %v1710 = vsel %vm259, %v1691, 0
        %v1713 = vsel %vm259, %v1692, 0
        %v1716 = vsel %vm259, %v1693, 0
        %1718 = vmatprep.subr.bf16.mxu0 0
        %1719 = vmatpush1.bf16.msra.mxu0 0
        %1720 = vmatprep.subr.bf16.mxu0 0
        %1721 = vmatpush1.bf16.msra.mxu0 0
        %1722 = vmatprep.subr.bf16.mxu0 0
        %1723 = vmatpush1.bf16.msra.mxu0 0
        %1724 = vmatprep.subr.bf16.mxu0 0
        %1725 = vmatpush1.bf16.msra.mxu0 0
        %1726 = vmatprep.subr.bf16.mxu0 0
        %1727 = vmatpush1.bf16.msra.mxu0 0
        %1728 = vmatprep.subr.bf16.mxu0 0
        %1729 = vmatpush1.bf16.msra.mxu0 0
        %1730 = vmatprep.subr.bf16.mxu0 0
        %1731 = vmatpush1.bf16.msra.mxu0 %v1703
        %1732 = vmatprep.subr.bf16.mxu0 0
        %1733 = vmatpush1.bf16.msra.mxu0 %v1702
        %1734 = vmatprep.subr.bf16.mxu0 0
        %1735 = vmatpush2.bf16.msra.mxu0 0
        %1736 = vmatprep.subr.bf16.mxu0 0
        %1737 = vmatpush2.bf16.msra.mxu0 0
        %1738 = vmatprep.subr.bf16.mxu0 0
        %1739 = vmatpush2.bf16.msra.mxu0 0
        %1740 = vmatprep.subr.bf16.mxu0 0
        %1741 = vmatpush2.bf16.msra.mxu0 0
        %1742 = vmatprep.subr.bf16.mxu0 0
        %1743 = vmatpush2.bf16.msra.mxu0 0
        %1744 = vmatprep.subr.bf16.mxu0 0
        %1745 = vmatpush2.bf16.msra.mxu0 0
        %1746 = vmatprep.subr.bf16.mxu0 0
        %1747 = vmatpush2.bf16.msra.mxu0 0
        %1748 = vmatprep.subr.bf16.mxu0 0
        %1749 = vmatpush2.bf16.msra.mxu0 0
        %1750 = vmatprep.mubr.bf16.mxu0 0
        %1751 = vmatmul.mubr.bf16.gmra.mxu0 %v1707
        %v1752 = vpop.f32.mrf.mxu0
        %v1753 = vadd.f32 0.0, %v1752
        %v1754 = vpop.f32.mrf.mxu0
        %v1755 = vpop.f32.mrf.mxu0
        %v1756 = vadd.f32 0.0, %v1755
        %v1757 = vpop.f32.mrf.mxu0
        %1758 = vmatprep.mubr.bf16.mxu0 0
        %1759 = vmatmul.mubr.bf16.gmra.mxu0 %v1710
        %v1760 = vpop.f32.mrf.mxu0
        %v1761 = vadd.f32 0.0, %v1760
        %v1762 = vpop.f32.mrf.mxu0
        %v1763 = vpop.f32.mrf.mxu0
        %v1764 = vadd.f32 0.0, %v1763
        %v1765 = vpop.f32.mrf.mxu0
        %1766 = vmatprep.mubr.bf16.mxu0 0
        %1767 = vmatmul.mubr.bf16.gmra.mxu0 %v1713
        %v1768 = vpop.f32.mrf.mxu0
        %v1769 = vadd.f32 0.0, %v1768
        %v1770 = vpop.f32.mrf.mxu0
        %v1771 = vpop.f32.mrf.mxu0
        %v1772 = vadd.f32 0.0, %v1771
        %v1773 = vpop.f32.mrf.mxu0
        %1774 = vmatprep.mubr.bf16.mxu0 0
        %1775 = vmatmul.mubr.bf16.gmra.mxu0 %v1716
        %v1776 = vpop.f32.mrf.mxu0
        %v1777 = vadd.f32 0.0, %v1776
        %v1778 = vpop.f32.mrf.mxu0
        %v1779 = vpop.f32.mrf.mxu0
        %v1780 = vadd.f32 0.0, %v1779
        %v1781 = vpop.f32.mrf.mxu0
        %1782 = vdwg.mxu0
        %v1783 = vadd.f32 %v1653, %v1753
        %v1784 = vadd.f32 %v1654, %v1756
        %v1785 = vadd.f32 %v1655, %v1761
        %v1786 = vadd.f32 %v1656, %v1764
        %v1787 = vadd.f32 %v1657, %v1769
        %v1788 = vadd.f32 %v1658, %v1772
        %v1789 = vadd.f32 %v1659, %v1777
        %v1790 = vadd.f32 %v1660, %v1780
        %v1791 = vld [vmem:[%s1661] sm:$0xf]
        %v1792 = vld [vmem:[%s1661 + $0x4] sm:$0x1]
        %v1793 = vld [vmem:[%s1661 + $0x8] sm:$0xf]
        %v1794 = vld [vmem:[%s1661 + $0xc] sm:$0x1]
        %v1795 = vld [vmem:[%s1661 + $0x10] sm:$0xf]
        %v1796 = vld [vmem:[%s1661 + $0x14] sm:$0x1]
        %v1797 = vld [vmem:[%s1661 + $0x18] sm:$0xf]
        %v1798 = vld [vmem:[%s1661 + $0x1c] sm:$0x1]
        %v1799 = vld [vmem:[%s1661 + $0x20] sm:$0xf]
        %v1800 = vld [vmem:[%s1661 + $0x24] sm:$0x1]
        %v1801 = vld [vmem:[%s1661 + $0x28] sm:$0xf]
        %v1802 = vld [vmem:[%s1661 + $0x2c] sm:$0x1]
        %v1803 = vld [vmem:[%s1661 + $0x30] sm:$0xf]
        %v1804 = vld [vmem:[%s1661 + $0x34] sm:$0x1]
        %v1805 = vld [vmem:[%s1661 + $0x38] sm:$0xf]
        %v1806 = vld [vmem:[%s1661 + $0x3c] sm:$0x1]
        %v1808 = vshrl.u32 %v1791, 16
        %v1810 = vrot.slane %v1808, 4
        %v1811 = vshll.u32 %v1791, 16
        %v1813 = vrot.slane %v1811, 5
        %v1814 = vor.u32 %v1810, %v1813
        %v1815 = vrot.slane %v1814, 4
        %v1817 = vshll.u32 %v1792, 16
        %v1819 = vrot.slane %v1817, 5
        %v1820 = vsel %vm823, %v1815, %v1819
        %v1822 = vshrl.u32 %v1793, 16
        %v1824 = vrot.slane %v1822, 4
        %v1825 = vshll.u32 %v1793, 16
        %v1827 = vrot.slane %v1825, 5
        %v1828 = vor.u32 %v1824, %v1827
        %v1829 = vrot.slane %v1828, 4
        %v1831 = vshll.u32 %v1794, 16
        %v1833 = vrot.slane %v1831, 5
        %v1834 = vsel %vm823, %v1829, %v1833
        %v1836 = vshrl.u32 %v1795, 16
        %v1838 = vrot.slane %v1836, 4
        %v1839 = vshll.u32 %v1795, 16
        %v1841 = vrot.slane %v1839, 5
        %v1842 = vor.u32 %v1838, %v1841
        %v1843 = vrot.slane %v1842, 4
        %v1845 = vshll.u32 %v1796, 16
        %v1847 = vrot.slane %v1845, 5
        %v1848 = vsel %vm823, %v1843, %v1847
        %v1850 = vshrl.u32 %v1797, 16
        %v1852 = vrot.slane %v1850, 4
        %v1853 = vshll.u32 %v1797, 16
        %v1855 = vrot.slane %v1853, 5
        %v1856 = vor.u32 %v1852, %v1855
        %v1857 = vrot.slane %v1856, 4
        %v1859 = vshll.u32 %v1798, 16
        %v1861 = vrot.slane %v1859, 5
        %v1862 = vsel %vm823, %v1857, %v1861
        %v1864 = vshrl.u32 %v1799, 16
        %v1866 = vrot.slane %v1864, 4
        %v1867 = vshll.u32 %v1799, 16
        %v1869 = vrot.slane %v1867, 5
        %v1870 = vor.u32 %v1866, %v1869
        %v1871 = vrot.slane %v1870, 4
        %v1873 = vshll.u32 %v1800, 16
        %v1875 = vrot.slane %v1873, 5
        %v1876 = vsel %vm823, %v1871, %v1875
        %v1878 = vshrl.u32 %v1801, 16
        %v1880 = vrot.slane %v1878, 4
        %v1881 = vshll.u32 %v1801, 16
        %v1883 = vrot.slane %v1881, 5
        %v1884 = vor.u32 %v1880, %v1883
        %v1885 = vrot.slane %v1884, 4
        %v1887 = vshll.u32 %v1802, 16
        %v1889 = vrot.slane %v1887, 5
        %v1890 = vsel %vm823, %v1885, %v1889
        %v1892 = vshrl.u32 %v1803, 16
        %v1894 = vrot.slane %v1892, 4
        %v1895 = vshll.u32 %v1803, 16
        %v1897 = vrot.slane %v1895, 5
        %v1898 = vor.u32 %v1894, %v1897
        %v1899 = vrot.slane %v1898, 4
        %v1901 = vshll.u32 %v1804, 16
        %v1903 = vrot.slane %v1901, 5
        %v1904 = vsel %vm823, %v1899, %v1903
        %v1906 = vshrl.u32 %v1805, 16
        %v1908 = vrot.slane %v1906, 4
        %v1909 = vshll.u32 %v1805, 16
        %v1911 = vrot.slane %v1909, 5
        %v1912 = vor.u32 %v1908, %v1911
        %v1913 = vrot.slane %v1912, 4
        %v1915 = vshll.u32 %v1806, 16
        %v1917 = vrot.slane %v1915, 5
        %v1918 = vsel %vm823, %v1913, %v1917
        %v1919 = vld [vmem:[%s4 + $0x60] sm:$0xf]
        %v1920 = vld [vmem:[%s4 + $0x64] sm:$0xf]
        %v1921 = vld [vmem:[%s4 + $0x68] sm:$0xf]
        %v1922 = vld [vmem:[%s4 + $0x6c] sm:$0xf]
        %v1923 = vunpack.c.l.b16 %v1820
        %v1924 = vunpack.c.l.b16 %v1834
        %v1925 = vunpack.c.l.b16 %v1848
        %v1926 = vunpack.c.l.b16 %v1862
        %v1927 = vunpack.c.l.b16 %v1876
        %v1928 = vunpack.c.l.b16 %v1890
        %v1929 = vunpack.c.l.b16 %v1904
        %v1930 = vunpack.c.l.b16 %v1918
        %v1931 = vpack.c.b16 %v1924, %v1923
        %v1932 = vpack.c.b16 %v1926, %v1925
        %v1933 = vpack.c.b16 %v1928, %v1927
        %v1934 = vpack.c.b16 %v1930, %v1929
        %v1939 = vunpack.c.l.b16 %v1919
        %v1940 = vunpack.c.l.b16 %v1920
        %v1941 = vunpack.c.l.b16 %v1921
        %v1942 = vunpack.c.l.b16 %v1922
        %v1943 = vpack.c.b16 %v1940, %v1939
        %v1944 = vpack.c.b16 %v1942, %v1941
        %v1948 = vsel %vm259, %v1931, 0
        %v1951 = vsel %vm259, %v1932, 0
        %v1954 = vsel %vm259, %v1933, 0
        %v1957 = vsel %vm259, %v1934, 0
        %1959 = vmatprep.subr.bf16.mxu0 0
        %1960 = vmatpush1.bf16.msra.mxu0 0
        %1961 = vmatprep.subr.bf16.mxu0 0
        %1962 = vmatpush1.bf16.msra.mxu0 0
        %1963 = vmatprep.subr.bf16.mxu0 0
        %1964 = vmatpush1.bf16.msra.mxu0 0
        %1965 = vmatprep.subr.bf16.mxu0 0
        %1966 = vmatpush1.bf16.msra.mxu0 0
        %1967 = vmatprep.subr.bf16.mxu0 0
        %1968 = vmatpush1.bf16.msra.mxu0 0
        %1969 = vmatprep.subr.bf16.mxu0 0
        %1970 = vmatpush1.bf16.msra.mxu0 0
        %1971 = vmatprep.subr.bf16.mxu0 0
        %1972 = vmatpush1.bf16.msra.mxu0 %v1944
        %1973 = vmatprep.subr.bf16.mxu0 0
        %1974 = vmatpush1.bf16.msra.mxu0 %v1943
        %1975 = vmatprep.subr.bf16.mxu0 0
        %1976 = vmatpush2.bf16.msra.mxu0 0
        %1977 = vmatprep.subr.bf16.mxu0 0
        %1978 = vmatpush2.bf16.msra.mxu0 0
        %1979 = vmatprep.subr.bf16.mxu0 0
        %1980 = vmatpush2.bf16.msra.mxu0 0
        %1981 = vmatprep.subr.bf16.mxu0 0
        %1982 = vmatpush2.bf16.msra.mxu0 0
        %1983 = vmatprep.subr.bf16.mxu0 0
        %1984 = vmatpush2.bf16.msra.mxu0 0
        %1985 = vmatprep.subr.bf16.mxu0 0
        %1986 = vmatpush2.bf16.msra.mxu0 0
        %1987 = vmatprep.subr.bf16.mxu0 0
        %1988 = vmatpush2.bf16.msra.mxu0 0
        %1989 = vmatprep.subr.bf16.mxu0 0
        %1990 = vmatpush2.bf16.msra.mxu0 0
        %1991 = vmatprep.mubr.bf16.mxu0 0
        %1992 = vmatmul.mubr.bf16.gmra.mxu0 %v1948
        %v1993 = vpop.f32.mrf.mxu0
        %v1994 = vadd.f32 0.0, %v1993
        %v1995 = vpop.f32.mrf.mxu0
        %v1996 = vpop.f32.mrf.mxu0
        %v1997 = vadd.f32 0.0, %v1996
        %v1998 = vpop.f32.mrf.mxu0
        %1999 = vmatprep.mubr.bf16.mxu0 0
        %2000 = vmatmul.mubr.bf16.gmra.mxu0 %v1951
        %v2001 = vpop.f32.mrf.mxu0
        %v2002 = vadd.f32 0.0, %v2001
        %v2003 = vpop.f32.mrf.mxu0
        %v2004 = vpop.f32.mrf.mxu0
        %v2005 = vadd.f32 0.0, %v2004
        %v2006 = vpop.f32.mrf.mxu0
        %2007 = vmatprep.mubr.bf16.mxu0 0
        %2008 = vmatmul.mubr.bf16.gmra.mxu0 %v1954
        %v2009 = vpop.f32.mrf.mxu0
        %v2010 = vadd.f32 0.0, %v2009
        %v2011 = vpop.f32.mrf.mxu0
        %v2012 = vpop.f32.mrf.mxu0
        %v2013 = vadd.f32 0.0, %v2012
        %v2014 = vpop.f32.mrf.mxu0
        %2015 = vmatprep.mubr.bf16.mxu0 0
        %2016 = vmatmul.mubr.bf16.gmra.mxu0 %v1957
        %v2017 = vpop.f32.mrf.mxu0
        %v2018 = vadd.f32 0.0, %v2017
        %v2019 = vpop.f32.mrf.mxu0
        %v2020 = vpop.f32.mrf.mxu0
        %v2021 = vadd.f32 0.0, %v2020
        %v2022 = vpop.f32.mrf.mxu0
        %2023 = vdwg.mxu0
        %v2024 = vadd.f32 %v1783, %v1994
        %v2025 = vadd.f32 %v1784, %v1997
        %v2026 = vadd.f32 %v1785, %v2002
        %v2027 = vadd.f32 %v1786, %v2005
        %v2028 = vadd.f32 %v1787, %v2010
        %v2029 = vadd.f32 %v1788, %v2013
        %v2030 = vadd.f32 %v1789, %v2018
        %v2031 = vadd.f32 %v1790, %v2021
        %v2032 = vld [vmem:[%s1661] sm:$0xe]
        %v2033 = vld [vmem:[%s1661 + $0x8] sm:$0xe]
        %v2034 = vld [vmem:[%s1661 + $0x10] sm:$0xe]
        %v2035 = vld [vmem:[%s1661 + $0x18] sm:$0xe]
        %v2036 = vld [vmem:[%s1661 + $0x20] sm:$0xe]
        %v2037 = vld [vmem:[%s1661 + $0x28] sm:$0xe]
        %v2038 = vld [vmem:[%s1661 + $0x30] sm:$0xe]
        %v2039 = vld [vmem:[%s1661 + $0x38] sm:$0xe]
        %v2056 = vrot.slane %v2032, 5
        %v2057 = vrot.slane %v2056, 4
        %v2058 = vrot.slane %v1792, 5
        %v2059 = vsel %vm1075, %v2057, %v2058
        %v2060 = vrot.slane %v2033, 5
        %v2061 = vrot.slane %v2060, 4
        %v2062 = vrot.slane %v1794, 5
        %v2063 = vsel %vm1075, %v2061, %v2062
        %v2064 = vrot.slane %v2034, 5
        %v2065 = vrot.slane %v2064, 4
        %v2066 = vrot.slane %v1796, 5
        %v2067 = vsel %vm1075, %v2065, %v2066
        %v2068 = vrot.slane %v2035, 5
        %v2069 = vrot.slane %v2068, 4
        %v2070 = vrot.slane %v1798, 5
        %v2071 = vsel %vm1075, %v2069, %v2070
        %v2072 = vrot.slane %v2036, 5
        %v2073 = vrot.slane %v2072, 4
        %v2074 = vrot.slane %v1800, 5
        %v2075 = vsel %vm1075, %v2073, %v2074
        %v2076 = vrot.slane %v2037, 5
        %v2077 = vrot.slane %v2076, 4
        %v2078 = vrot.slane %v1802, 5
        %v2079 = vsel %vm1075, %v2077, %v2078
        %v2080 = vrot.slane %v2038, 5
        %v2081 = vrot.slane %v2080, 4
        %v2082 = vrot.slane %v1804, 5
        %v2083 = vsel %vm1075, %v2081, %v2082
        %v2084 = vrot.slane %v2039, 5
        %v2085 = vrot.slane %v2084, 4
        %v2086 = vrot.slane %v1806, 5
        %v2087 = vsel %vm1075, %v2085, %v2086
        %v2088 = vld [vmem:[%s4 + $0x70] sm:$0xf]
        %v2089 = vld [vmem:[%s4 + $0x74] sm:$0xf]
        %v2090 = vld [vmem:[%s4 + $0x78] sm:$0xf]
        %v2091 = vld [vmem:[%s4 + $0x7c] sm:$0xf]
        %v2092 = vunpack.c.l.b16 %v2059
        %v2093 = vunpack.c.l.b16 %v2063
        %v2094 = vunpack.c.l.b16 %v2067
        %v2095 = vunpack.c.l.b16 %v2071
        %v2096 = vunpack.c.l.b16 %v2075
        %v2097 = vunpack.c.l.b16 %v2079
        %v2098 = vunpack.c.l.b16 %v2083
        %v2099 = vunpack.c.l.b16 %v2087
        %v2100 = vpack.c.b16 %v2093, %v2092
        %v2101 = vpack.c.b16 %v2095, %v2094
        %v2102 = vpack.c.b16 %v2097, %v2096
        %v2103 = vpack.c.b16 %v2099, %v2098
        %v2108 = vunpack.c.l.b16 %v2088
        %v2109 = vunpack.c.l.b16 %v2089
        %v2110 = vunpack.c.l.b16 %v2090
        %v2111 = vunpack.c.l.b16 %v2091
        %v2112 = vpack.c.b16 %v2109, %v2108
        %v2113 = vpack.c.b16 %v2111, %v2110
        %v2117 = vsel %vm259, %v2100, 0
        %v2120 = vsel %vm259, %v2101, 0
        %v2123 = vsel %vm259, %v2102, 0
        %v2126 = vsel %vm259, %v2103, 0
        %2128 = vmatprep.subr.bf16.mxu0 0
        %2129 = vmatpush1.bf16.msra.mxu0 0
        %2130 = vmatprep.subr.bf16.mxu0 0
        %2131 = vmatpush1.bf16.msra.mxu0 0
        %2132 = vmatprep.subr.bf16.mxu0 0
        %2133 = vmatpush1.bf16.msra.mxu0 0
        %2134 = vmatprep.subr.bf16.mxu0 0
        %2135 = vmatpush1.bf16.msra.mxu0 0
        %2136 = vmatprep.subr.bf16.mxu0 0
        %2137 = vmatpush1.bf16.msra.mxu0 0
        %2138 = vmatprep.subr.bf16.mxu0 0
        %2139 = vmatpush1.bf16.msra.mxu0 0
        %2140 = vmatprep.subr.bf16.mxu0 0
        %2141 = vmatpush1.bf16.msra.mxu0 %v2113
        %2142 = vmatprep.subr.bf16.mxu0 0
        %2143 = vmatpush1.bf16.msra.mxu0 %v2112
        %2144 = vmatprep.subr.bf16.mxu0 0
        %2145 = vmatpush2.bf16.msra.mxu0 0
        %2146 = vmatprep.subr.bf16.mxu0 0
        %2147 = vmatpush2.bf16.msra.mxu0 0
        %2148 = vmatprep.subr.bf16.mxu0 0
        %2149 = vmatpush2.bf16.msra.mxu0 0
        %2150 = vmatprep.subr.bf16.mxu0 0
        %2151 = vmatpush2.bf16.msra.mxu0 0
        %2152 = vmatprep.subr.bf16.mxu0 0
        %2153 = vmatpush2.bf16.msra.mxu0 0
        %2154 = vmatprep.subr.bf16.mxu0 0
        %2155 = vmatpush2.bf16.msra.mxu0 0
        %2156 = vmatprep.subr.bf16.mxu0 0
        %2157 = vmatpush2.bf16.msra.mxu0 0
        %2158 = vmatprep.subr.bf16.mxu0 0
        %2159 = vmatpush2.bf16.msra.mxu0 0
        %2160 = vmatprep.mubr.bf16.mxu0 0
        %2161 = vmatmul.mubr.bf16.gmra.mxu0 %v2117
        %v2162 = vpop.f32.mrf.mxu0
        %v2163 = vadd.f32 0.0, %v2162
        %v2164 = vpop.f32.mrf.mxu0
        %v2165 = vpop.f32.mrf.mxu0
        %v2166 = vadd.f32 0.0, %v2165
        %v2167 = vpop.f32.mrf.mxu0
        %2168 = vmatprep.mubr.bf16.mxu0 0
        %2169 = vmatmul.mubr.bf16.gmra.mxu0 %v2120
        %v2170 = vpop.f32.mrf.mxu0
        %v2171 = vadd.f32 0.0, %v2170
        %v2172 = vpop.f32.mrf.mxu0
        %v2173 = vpop.f32.mrf.mxu0
        %v2174 = vadd.f32 0.0, %v2173
        %v2175 = vpop.f32.mrf.mxu0
        %2176 = vmatprep.mubr.bf16.mxu0 0
        %2177 = vmatmul.mubr.bf16.gmra.mxu0 %v2123
        %v2178 = vpop.f32.mrf.mxu0
        %v2179 = vadd.f32 0.0, %v2178
        %v2180 = vpop.f32.mrf.mxu0
        %v2181 = vpop.f32.mrf.mxu0
        %v2182 = vadd.f32 0.0, %v2181
        %v2183 = vpop.f32.mrf.mxu0
        %2184 = vmatprep.mubr.bf16.mxu0 0
        %2185 = vmatmul.mubr.bf16.gmra.mxu0 %v2126
        %v2186 = vpop.f32.mrf.mxu0
        %v2187 = vadd.f32 0.0, %v2186
        %v2188 = vpop.f32.mrf.mxu0
        %v2189 = vpop.f32.mrf.mxu0
        %v2190 = vadd.f32 0.0, %v2189
        %v2191 = vpop.f32.mrf.mxu0
        %2192 = vdwg.mxu0
        %v2193 = vadd.f32 %v2024, %v2163
        %v2194 = vadd.f32 %v2025, %v2166
        %v2195 = vadd.f32 %v2026, %v2171
        %v2196 = vadd.f32 %v2027, %v2174
        %v2197 = vadd.f32 %v2028, %v2179
        %v2198 = vadd.f32 %v2029, %v2182
        %v2199 = vadd.f32 %v2030, %v2187
        %v2200 = vadd.f32 %v2031, %v2190
        %v2201 = vld [vmem:[%s1661 + $0x4] sm:$0x3]
        %v2202 = vld [vmem:[%s1661 + $0xc] sm:$0x3]
        %v2203 = vld [vmem:[%s1661 + $0x14] sm:$0x3]
        %v2204 = vld [vmem:[%s1661 + $0x1c] sm:$0x3]
        %v2205 = vld [vmem:[%s1661 + $0x24] sm:$0x3]
        %v2206 = vld [vmem:[%s1661 + $0x2c] sm:$0x3]
        %v2207 = vld [vmem:[%s1661 + $0x34] sm:$0x3]
        %v2208 = vld [vmem:[%s1661 + $0x3c] sm:$0x3]
        %v2210 = vshrl.u32 %v2032, 16
        %v2212 = vrot.slane %v2210, 5
        %v2213 = vshll.u32 %v2032, 16
        %v2215 = vrot.slane %v2213, 6
        %v2216 = vor.u32 %v2212, %v2215
        %v2217 = vrot.slane %v2216, 4
        %v2219 = vshrl.u32 %v2201, 16
        %v2221 = vrot.slane %v2219, 5
        %v2222 = vshll.u32 %v2201, 16
        %v2224 = vrot.slane %v2222, 6
        %v2225 = vor.u32 %v2221, %v2224
        %v2226 = vsel %vm1231, %v2217, %v2225
        %v2228 = vshrl.u32 %v2033, 16
        %v2230 = vrot.slane %v2228, 5
        %v2231 = vshll.u32 %v2033, 16
        %v2233 = vrot.slane %v2231, 6
        %v2234 = vor.u32 %v2230, %v2233
        %v2235 = vrot.slane %v2234, 4
        %v2237 = vshrl.u32 %v2202, 16
        %v2239 = vrot.slane %v2237, 5
        %v2240 = vshll.u32 %v2202, 16
        %v2242 = vrot.slane %v2240, 6
        %v2243 = vor.u32 %v2239, %v2242
        %v2244 = vsel %vm1231, %v2235, %v2243
        %v2246 = vshrl.u32 %v2034, 16
        %v2248 = vrot.slane %v2246, 5
        %v2249 = vshll.u32 %v2034, 16
        %v2251 = vrot.slane %v2249, 6
        %v2252 = vor.u32 %v2248, %v2251
        %v2253 = vrot.slane %v2252, 4
        %v2255 = vshrl.u32 %v2203, 16
        %v2257 = vrot.slane %v2255, 5
        %v2258 = vshll.u32 %v2203, 16
        %v2260 = vrot.slane %v2258, 6
        %v2261 = vor.u32 %v2257, %v2260
        %v2262 = vsel %vm1231, %v2253, %v2261
        %v2264 = vshrl.u32 %v2035, 16
        %v2266 = vrot.slane %v2264, 5
        %v2267 = vshll.u32 %v2035, 16
        %v2269 = vrot.slane %v2267, 6
        %v2270 = vor.u32 %v2266, %v2269
        %v2271 = vrot.slane %v2270, 4
        %v2273 = vshrl.u32 %v2204, 16
        %v2275 = vrot.slane %v2273, 5
        %v2276 = vshll.u32 %v2204, 16
        %v2278 = vrot.slane %v2276, 6
        %v2279 = vor.u32 %v2275, %v2278
        %v2280 = vsel %vm1231, %v2271, %v2279
        %v2282 = vshrl.u32 %v2036, 16
        %v2284 = vrot.slane %v2282, 5
        %v2285 = vshll.u32 %v2036, 16
        %v2287 = vrot.slane %v2285, 6
        %v2288 = vor.u32 %v2284, %v2287
        %v2289 = vrot.slane %v2288, 4
        %v2291 = vshrl.u32 %v2205, 16
        %v2293 = vrot.slane %v2291, 5
        %v2294 = vshll.u32 %v2205, 16
        %v2296 = vrot.slane %v2294, 6
        %v2297 = vor.u32 %v2293, %v2296
        %v2298 = vsel %vm1231, %v2289, %v2297
        %v2300 = vshrl.u32 %v2037, 16
        %v2302 = vrot.slane %v2300, 5
        %v2303 = vshll.u32 %v2037, 16
        %v2305 = vrot.slane %v2303, 6
        %v2306 = vor.u32 %v2302, %v2305
        %v2307 = vrot.slane %v2306, 4
        %v2309 = vshrl.u32 %v2206, 16
        %v2311 = vrot.slane %v2309, 5
        %v2312 = vshll.u32 %v2206, 16
        %v2314 = vrot.slane %v2312, 6
        %v2315 = vor.u32 %v2311, %v2314
        %v2316 = vsel %vm1231, %v2307, %v2315
        %v2318 = vshrl.u32 %v2038, 16
        %v2320 = vrot.slane %v2318, 5
        %v2321 = vshll.u32 %v2038, 16
        %v2323 = vrot.slane %v2321, 6
        %v2324 = vor.u32 %v2320, %v2323
        %v2325 = vrot.slane %v2324, 4
        %v2327 = vshrl.u32 %v2207, 16
        %v2329 = vrot.slane %v2327, 5
        %v2330 = vshll.u32 %v2207, 16
        %v2332 = vrot.slane %v2330, 6
        %v2333 = vor.u32 %v2329, %v2332
        %v2334 = vsel %vm1231, %v2325, %v2333
        %v2336 = vshrl.u32 %v2039, 16
        %v2338 = vrot.slane %v2336, 5
        %v2339 = vshll.u32 %v2039, 16
        %v2341 = vrot.slane %v2339, 6
        %v2342 = vor.u32 %v2338, %v2341
        %v2343 = vrot.slane %v2342, 4
        %v2345 = vshrl.u32 %v2208, 16
        %v2347 = vrot.slane %v2345, 5
        %v2348 = vshll.u32 %v2208, 16
        %v2350 = vrot.slane %v2348, 6
        %v2351 = vor.u32 %v2347, %v2350
        %v2352 = vsel %vm1231, %v2343, %v2351
        %v2353 = vld [vmem:[%s4 + $0x80] sm:$0xf]
        %v2354 = vld [vmem:[%s4 + $0x84] sm:$0xf]
        %v2355 = vld [vmem:[%s4 + $0x88] sm:$0xf]
        %v2356 = vld [vmem:[%s4 + $0x8c] sm:$0xf]
        %v2357 = vunpack.c.l.b16 %v2226
        %v2358 = vunpack.c.l.b16 %v2244
        %v2359 = vunpack.c.l.b16 %v2262
        %v2360 = vunpack.c.l.b16 %v2280
        %v2361 = vunpack.c.l.b16 %v2298
        %v2362 = vunpack.c.l.b16 %v2316
        %v2363 = vunpack.c.l.b16 %v2334
        %v2364 = vunpack.c.l.b16 %v2352
        %v2365 = vpack.c.b16 %v2358, %v2357
        %v2366 = vpack.c.b16 %v2360, %v2359
        %v2367 = vpack.c.b16 %v2362, %v2361
        %v2368 = vpack.c.b16 %v2364, %v2363
        %v2373 = vunpack.c.l.b16 %v2353
        %v2374 = vunpack.c.l.b16 %v2354
        %v2375 = vunpack.c.l.b16 %v2355
        %v2376 = vunpack.c.l.b16 %v2356
        %v2377 = vpack.c.b16 %v2374, %v2373
        %v2378 = vpack.c.b16 %v2376, %v2375
        %v2382 = vsel %vm259, %v2365, 0
        %v2385 = vsel %vm259, %v2366, 0
        %v2388 = vsel %vm259, %v2367, 0
        %v2391 = vsel %vm259, %v2368, 0
        %2393 = vmatprep.subr.bf16.mxu0 0
        %2394 = vmatpush1.bf16.msra.mxu0 0
        %2395 = vmatprep.subr.bf16.mxu0 0
        %2396 = vmatpush1.bf16.msra.mxu0 0
        %2397 = vmatprep.subr.bf16.mxu0 0
        %2398 = vmatpush1.bf16.msra.mxu0 0
        %2399 = vmatprep.subr.bf16.mxu0 0
        %2400 = vmatpush1.bf16.msra.mxu0 0
        %2401 = vmatprep.subr.bf16.mxu0 0
        %2402 = vmatpush1.bf16.msra.mxu0 0
        %2403 = vmatprep.subr.bf16.mxu0 0
        %2404 = vmatpush1.bf16.msra.mxu0 0
        %2405 = vmatprep.subr.bf16.mxu0 0
        %2406 = vmatpush1.bf16.msra.mxu0 %v2378
        %2407 = vmatprep.subr.bf16.mxu0 0
        %2408 = vmatpush1.bf16.msra.mxu0 %v2377
        %2409 = vmatprep.subr.bf16.mxu0 0
        %2410 = vmatpush2.bf16.msra.mxu0 0
        %2411 = vmatprep.subr.bf16.mxu0 0
        %2412 = vmatpush2.bf16.msra.mxu0 0
        %2413 = vmatprep.subr.bf16.mxu0 0
        %2414 = vmatpush2.bf16.msra.mxu0 0
        %2415 = vmatprep.subr.bf16.mxu0 0
        %2416 = vmatpush2.bf16.msra.mxu0 0
        %2417 = vmatprep.subr.bf16.mxu0 0
        %2418 = vmatpush2.bf16.msra.mxu0 0
        %2419 = vmatprep.subr.bf16.mxu0 0
        %2420 = vmatpush2.bf16.msra.mxu0 0
        %2421 = vmatprep.subr.bf16.mxu0 0
        %2422 = vmatpush2.bf16.msra.mxu0 0
        %2423 = vmatprep.subr.bf16.mxu0 0
        %2424 = vmatpush2.bf16.msra.mxu0 0
        %2425 = vmatprep.mubr.bf16.mxu0 0
        %2426 = vmatmul.mubr.bf16.gmra.mxu0 %v2382
        %v2427 = vpop.f32.mrf.mxu0
        %v2428 = vadd.f32 0.0, %v2427
        %v2429 = vpop.f32.mrf.mxu0
        %v2430 = vpop.f32.mrf.mxu0
        %v2431 = vadd.f32 0.0, %v2430
        %v2432 = vpop.f32.mrf.mxu0
        %2433 = vmatprep.mubr.bf16.mxu0 0
        %2434 = vmatmul.mubr.bf16.gmra.mxu0 %v2385
        %v2435 = vpop.f32.mrf.mxu0
        %v2436 = vadd.f32 0.0, %v2435
        %v2437 = vpop.f32.mrf.mxu0
        %v2438 = vpop.f32.mrf.mxu0
        %v2439 = vadd.f32 0.0, %v2438
        %v2440 = vpop.f32.mrf.mxu0
        %2441 = vmatprep.mubr.bf16.mxu0 0
        %2442 = vmatmul.mubr.bf16.gmra.mxu0 %v2388
        %v2443 = vpop.f32.mrf.mxu0
        %v2444 = vadd.f32 0.0, %v2443
        %v2445 = vpop.f32.mrf.mxu0
        %v2446 = vpop.f32.mrf.mxu0
        %v2447 = vadd.f32 0.0, %v2446
        %v2448 = vpop.f32.mrf.mxu0
        %2449 = vmatprep.mubr.bf16.mxu0 0
        %2450 = vmatmul.mubr.bf16.gmra.mxu0 %v2391
        %v2451 = vpop.f32.mrf.mxu0
        %v2452 = vadd.f32 0.0, %v2451
        %v2453 = vpop.f32.mrf.mxu0
        %v2454 = vpop.f32.mrf.mxu0
        %v2455 = vadd.f32 0.0, %v2454
        %v2456 = vpop.f32.mrf.mxu0
        %2457 = vdwg.mxu0
        %v2458 = vadd.f32 %v2193, %v2428
        %v2459 = vadd.f32 %v2194, %v2431
        %v2460 = vadd.f32 %v2195, %v2436
        %v2461 = vadd.f32 %v2196, %v2439
        %v2462 = vadd.f32 %v2197, %v2444
        %v2463 = vadd.f32 %v2198, %v2447
        %v2464 = vadd.f32 %v2199, %v2452
        %v2465 = vadd.f32 %v2200, %v2455
        %v2466 = vld [vmem:[%s1661] sm:$0xc]
        %v2467 = vld [vmem:[%s1661 + $0x8] sm:$0xc]
        %v2468 = vld [vmem:[%s1661 + $0x10] sm:$0xc]
        %v2469 = vld [vmem:[%s1661 + $0x18] sm:$0xc]
        %v2470 = vld [vmem:[%s1661 + $0x20] sm:$0xc]
        %v2471 = vld [vmem:[%s1661 + $0x28] sm:$0xc]
        %v2472 = vld [vmem:[%s1661 + $0x30] sm:$0xc]
        %v2473 = vld [vmem:[%s1661 + $0x38] sm:$0xc]
        %v2490 = vrot.slane %v2466, 6
        %v2491 = vrot.slane %v2490, 4
        %v2492 = vrot.slane %v2201, 6
        %v2493 = vsel %vm1515, %v2491, %v2492
        %v2494 = vrot.slane %v2467, 6
        %v2495 = vrot.slane %v2494, 4
        %v2496 = vrot.slane %v2202, 6
        %v2497 = vsel %vm1515, %v2495, %v2496
        %v2498 = vrot.slane %v2468, 6
        %v2499 = vrot.slane %v2498, 4
        %v2500 = vrot.slane %v2203, 6
        %v2501 = vsel %vm1515, %v2499, %v2500
        %v2502 = vrot.slane %v2469, 6
        %v2503 = vrot.slane %v2502, 4
        %v2504 = vrot.slane %v2204, 6
        %v2505 = vsel %vm1515, %v2503, %v2504
        %v2506 = vrot.slane %v2470, 6
        %v2507 = vrot.slane %v2506, 4
        %v2508 = vrot.slane %v2205, 6
        %v2509 = vsel %vm1515, %v2507, %v2508
        %v2510 = vrot.slane %v2471, 6
        %v2511 = vrot.slane %v2510, 4
        %v2512 = vrot.slane %v2206, 6
        %v2513 = vsel %vm1515, %v2511, %v2512
        %v2514 = vrot.slane %v2472, 6
        %v2515 = vrot.slane %v2514, 4
        %v2516 = vrot.slane %v2207, 6
        %v2517 = vsel %vm1515, %v2515, %v2516
        %v2518 = vrot.slane %v2473, 6
        %v2519 = vrot.slane %v2518, 4
        %v2520 = vrot.slane %v2208, 6
        %v2521 = vsel %vm1515, %v2519, %v2520
        %v2522 = vld [vmem:[%s4 + $0x90] sm:$0xf]
        %v2523 = vld [vmem:[%s4 + $0x94] sm:$0xf]
        %v2524 = vld [vmem:[%s4 + $0x98] sm:$0xf]
        %v2525 = vld [vmem:[%s4 + $0x9c] sm:$0xf]
        %v2526 = vunpack.c.l.b16 %v2493
        %v2527 = vunpack.c.l.b16 %v2497
        %v2528 = vunpack.c.l.b16 %v2501
        %v2529 = vunpack.c.l.b16 %v2505
        %v2530 = vunpack.c.l.b16 %v2509
        %v2531 = vunpack.c.l.b16 %v2513
        %v2532 = vunpack.c.l.b16 %v2517
        %v2533 = vunpack.c.l.b16 %v2521
        %v2534 = vpack.c.b16 %v2527, %v2526
        %v2535 = vpack.c.b16 %v2529, %v2528
        %v2536 = vpack.c.b16 %v2531, %v2530
        %v2537 = vpack.c.b16 %v2533, %v2532
        %v2542 = vunpack.c.l.b16 %v2522
        %v2543 = vunpack.c.l.b16 %v2523
        %v2544 = vunpack.c.l.b16 %v2524
        %v2545 = vunpack.c.l.b16 %v2525
        %v2546 = vpack.c.b16 %v2543, %v2542
        %v2547 = vpack.c.b16 %v2545, %v2544
        %v2551 = vsel %vm259, %v2534, 0
        %v2554 = vsel %vm259, %v2535, 0
        %v2557 = vsel %vm259, %v2536, 0
        %v2560 = vsel %vm259, %v2537, 0
        %2562 = vmatprep.subr.bf16.mxu0 0
        %2563 = vmatpush1.bf16.msra.mxu0 0
        %2564 = vmatprep.subr.bf16.mxu0 0
        %2565 = vmatpush1.bf16.msra.mxu0 0
        %2566 = vmatprep.subr.bf16.mxu0 0
        %2567 = vmatpush1.bf16.msra.mxu0 0
        %2568 = vmatprep.subr.bf16.mxu0 0
        %2569 = vmatpush1.bf16.msra.mxu0 0
        %2570 = vmatprep.subr.bf16.mxu0 0
        %2571 = vmatpush1.bf16.msra.mxu0 0
        %2572 = vmatprep.subr.bf16.mxu0 0
        %2573 = vmatpush1.bf16.msra.mxu0 0
        %2574 = vmatprep.subr.bf16.mxu0 0
        %2575 = vmatpush1.bf16.msra.mxu0 %v2547
        %2576 = vmatprep.subr.bf16.mxu0 0
        %2577 = vmatpush1.bf16.msra.mxu0 %v2546
        %2578 = vmatprep.subr.bf16.mxu0 0
        %2579 = vmatpush2.bf16.msra.mxu0 0
        %2580 = vmatprep.subr.bf16.mxu0 0
        %2581 = vmatpush2.bf16.msra.mxu0 0
        %2582 = vmatprep.subr.bf16.mxu0 0
        %2583 = vmatpush2.bf16.msra.mxu0 0
        %2584 = vmatprep.subr.bf16.mxu0 0
        %2585 = vmatpush2.bf16.msra.mxu0 0
        %2586 = vmatprep.subr.bf16.mxu0 0
        %2587 = vmatpush2.bf16.msra.mxu0 0
        %2588 = vmatprep.subr.bf16.mxu0 0
        %2589 = vmatpush2.bf16.msra.mxu0 0
        %2590 = vmatprep.subr.bf16.mxu0 0
        %2591 = vmatpush2.bf16.msra.mxu0 0
        %2592 = vmatprep.subr.bf16.mxu0 0
        %2593 = vmatpush2.bf16.msra.mxu0 0
        %2594 = vmatprep.mubr.bf16.mxu0 0
        %2595 = vmatmul.mubr.bf16.gmra.mxu0 %v2551
        %v2596 = vpop.f32.mrf.mxu0
        %v2597 = vadd.f32 0.0, %v2596
        %v2598 = vpop.f32.mrf.mxu0
        %v2599 = vpop.f32.mrf.mxu0
        %v2600 = vadd.f32 0.0, %v2599
        %v2601 = vpop.f32.mrf.mxu0
        %2602 = vmatprep.mubr.bf16.mxu0 0
        %2603 = vmatmul.mubr.bf16.gmra.mxu0 %v2554
        %v2604 = vpop.f32.mrf.mxu0
        %v2605 = vadd.f32 0.0, %v2604
        %v2606 = vpop.f32.mrf.mxu0
        %v2607 = vpop.f32.mrf.mxu0
        %v2608 = vadd.f32 0.0, %v2607
        %v2609 = vpop.f32.mrf.mxu0
        %2610 = vmatprep.mubr.bf16.mxu0 0
        %2611 = vmatmul.mubr.bf16.gmra.mxu0 %v2557
        %v2612 = vpop.f32.mrf.mxu0
        %v2613 = vadd.f32 0.0, %v2612
        %v2614 = vpop.f32.mrf.mxu0
        %v2615 = vpop.f32.mrf.mxu0
        %v2616 = vadd.f32 0.0, %v2615
        %v2617 = vpop.f32.mrf.mxu0
        %2618 = vmatprep.mubr.bf16.mxu0 0
        %2619 = vmatmul.mubr.bf16.gmra.mxu0 %v2560
        %v2620 = vpop.f32.mrf.mxu0
        %v2621 = vadd.f32 0.0, %v2620
        %v2622 = vpop.f32.mrf.mxu0
        %v2623 = vpop.f32.mrf.mxu0
        %v2624 = vadd.f32 0.0, %v2623
        %v2625 = vpop.f32.mrf.mxu0
        %2626 = vdwg.mxu0
        %v2627 = vadd.f32 %v2458, %v2597
        %v2628 = vadd.f32 %v2459, %v2600
        %v2629 = vadd.f32 %v2460, %v2605
        %v2630 = vadd.f32 %v2461, %v2608
        %v2631 = vadd.f32 %v2462, %v2613
        %v2632 = vadd.f32 %v2463, %v2616
        %v2633 = vadd.f32 %v2464, %v2621
        %v2634 = vadd.f32 %v2465, %v2624
        %v2635 = vld [vmem:[%s622] sm:$0xf]
        %v2636 = vld [vmem:[%s622 + $0x8] sm:$0xf]
        %v2637 = vld [vmem:[%s622 + $0x10] sm:$0xf]
        %v2638 = vld [vmem:[%s622 + $0x18] sm:$0xf]
        %v2639 = vld [vmem:[%s622 + $0x20] sm:$0xf]
        %v2640 = vld [vmem:[%s622 + $0x28] sm:$0xf]
        %v2641 = vld [vmem:[%s622 + $0x30] sm:$0xf]
        %v2642 = vld [vmem:[%s622 + $0x38] sm:$0xf]
        %v2643 = vld [vmem:[%s4 + $0xa0] sm:$0xf]
        %v2644 = vld [vmem:[%s4 + $0xa4] sm:$0xf]
        %v2645 = vld [vmem:[%s4 + $0xa8] sm:$0xf]
        %v2646 = vld [vmem:[%s4 + $0xac] sm:$0xf]
        %v2655 = vunpack.c.l.b16 %v2635
        %v2656 = vunpack.c.l.b16 %v2636
        %v2657 = vunpack.c.l.b16 %v2637
        %v2658 = vunpack.c.l.b16 %v2638
        %v2659 = vunpack.c.l.b16 %v2639
        %v2660 = vunpack.c.l.b16 %v2640
        %v2661 = vunpack.c.l.b16 %v2641
        %v2662 = vunpack.c.l.b16 %v2642
        %v2663 = vpack.c.b16 %v2656, %v2655
        %v2664 = vpack.c.b16 %v2658, %v2657
        %v2665 = vpack.c.b16 %v2660, %v2659
        %v2666 = vpack.c.b16 %v2662, %v2661
        %v2671 = vunpack.c.l.b16 %v2643
        %v2672 = vunpack.c.l.b16 %v2644
        %v2673 = vunpack.c.l.b16 %v2645
        %v2674 = vunpack.c.l.b16 %v2646
        %v2675 = vpack.c.b16 %v2672, %v2671
        %v2676 = vpack.c.b16 %v2674, %v2673
        %v2680 = vsel %vm259, %v2663, 0
        %v2683 = vsel %vm259, %v2664, 0
        %v2686 = vsel %vm259, %v2665, 0
        %v2689 = vsel %vm259, %v2666, 0
        %2691 = vmatprep.subr.bf16.mxu0 0
        %2692 = vmatpush1.bf16.msra.mxu0 0
        %2693 = vmatprep.subr.bf16.mxu0 0
        %2694 = vmatpush1.bf16.msra.mxu0 0
        %2695 = vmatprep.subr.bf16.mxu0 0
        %2696 = vmatpush1.bf16.msra.mxu0 0
        %2697 = vmatprep.subr.bf16.mxu0 0
        %2698 = vmatpush1.bf16.msra.mxu0 0
        %2699 = vmatprep.subr.bf16.mxu0 0
        %2700 = vmatpush1.bf16.msra.mxu0 0
        %2701 = vmatprep.subr.bf16.mxu0 0
        %2702 = vmatpush1.bf16.msra.mxu0 0
        %2703 = vmatprep.subr.bf16.mxu0 0
        %2704 = vmatpush1.bf16.msra.mxu0 %v2676
        %2705 = vmatprep.subr.bf16.mxu0 0
        %2706 = vmatpush1.bf16.msra.mxu0 %v2675
        %2707 = vmatprep.subr.bf16.mxu0 0
        %2708 = vmatpush2.bf16.msra.mxu0 0
        %2709 = vmatprep.subr.bf16.mxu0 0
        %2710 = vmatpush2.bf16.msra.mxu0 0
        %2711 = vmatprep.subr.bf16.mxu0 0
        %2712 = vmatpush2.bf16.msra.mxu0 0
        %2713 = vmatprep.subr.bf16.mxu0 0
        %2714 = vmatpush2.bf16.msra.mxu0 0
        %2715 = vmatprep.subr.bf16.mxu0 0
        %2716 = vmatpush2.bf16.msra.mxu0 0
        %2717 = vmatprep.subr.bf16.mxu0 0
        %2718 = vmatpush2.bf16.msra.mxu0 0
        %2719 = vmatprep.subr.bf16.mxu0 0
        %2720 = vmatpush2.bf16.msra.mxu0 0
        %2721 = vmatprep.subr.bf16.mxu0 0
        %2722 = vmatpush2.bf16.msra.mxu0 0
        %2723 = vmatprep.mubr.bf16.mxu0 0
        %2724 = vmatmul.mubr.bf16.gmra.mxu0 %v2680
        %v2725 = vpop.f32.mrf.mxu0
        %v2726 = vadd.f32 0.0, %v2725
        %v2727 = vpop.f32.mrf.mxu0
        %v2728 = vpop.f32.mrf.mxu0
        %v2729 = vadd.f32 0.0, %v2728
        %v2730 = vpop.f32.mrf.mxu0
        %2731 = vmatprep.mubr.bf16.mxu0 0
        %2732 = vmatmul.mubr.bf16.gmra.mxu0 %v2683
        %v2733 = vpop.f32.mrf.mxu0
        %v2734 = vadd.f32 0.0, %v2733
        %v2735 = vpop.f32.mrf.mxu0
        %v2736 = vpop.f32.mrf.mxu0
        %v2737 = vadd.f32 0.0, %v2736
        %v2738 = vpop.f32.mrf.mxu0
        %2739 = vmatprep.mubr.bf16.mxu0 0
        %2740 = vmatmul.mubr.bf16.gmra.mxu0 %v2686
        %v2741 = vpop.f32.mrf.mxu0
        %v2742 = vadd.f32 0.0, %v2741
        %v2743 = vpop.f32.mrf.mxu0
        %v2744 = vpop.f32.mrf.mxu0
        %v2745 = vadd.f32 0.0, %v2744
        %v2746 = vpop.f32.mrf.mxu0
        %2747 = vmatprep.mubr.bf16.mxu0 0
        %2748 = vmatmul.mubr.bf16.gmra.mxu0 %v2689
        %v2749 = vpop.f32.mrf.mxu0
        %v2750 = vadd.f32 0.0, %v2749
        %v2751 = vpop.f32.mrf.mxu0
        %v2752 = vpop.f32.mrf.mxu0
        %v2753 = vadd.f32 0.0, %v2752
        %v2754 = vpop.f32.mrf.mxu0
        %2755 = vdwg.mxu0
        %v2756 = vadd.f32 %v2627, %v2726
        %v2757 = vadd.f32 %v2628, %v2729
        %v2758 = vadd.f32 %v2629, %v2734
        %v2759 = vadd.f32 %v2630, %v2737
        %v2760 = vadd.f32 %v2631, %v2742
        %v2761 = vadd.f32 %v2632, %v2745
        %v2762 = vadd.f32 %v2633, %v2750
        %v2763 = vadd.f32 %v2634, %v2753
        %v2764 = vld [vmem:[%s622] sm:$0xf]
        %v2765 = vld [vmem:[%s622 + $0x4] sm:$0x1]
        %v2766 = vld [vmem:[%s622 + $0x8] sm:$0xf]
        %v2767 = vld [vmem:[%s622 + $0xc] sm:$0x1]
        %v2768 = vld [vmem:[%s622 + $0x10] sm:$0xf]
        %v2769 = vld [vmem:[%s622 + $0x14] sm:$0x1]
        %v2770 = vld [vmem:[%s622 + $0x18] sm:$0xf]
        %v2771 = vld [vmem:[%s622 + $0x1c] sm:$0x1]
        %v2772 = vld [vmem:[%s622 + $0x20] sm:$0xf]
        %v2773 = vld [vmem:[%s622 + $0x24] sm:$0x1]
        %v2774 = vld [vmem:[%s622 + $0x28] sm:$0xf]
        %v2775 = vld [vmem:[%s622 + $0x2c] sm:$0x1]
        %v2776 = vld [vmem:[%s622 + $0x30] sm:$0xf]
        %v2777 = vld [vmem:[%s622 + $0x34] sm:$0x1]
        %v2778 = vld [vmem:[%s622 + $0x38] sm:$0xf]
        %v2779 = vld [vmem:[%s622 + $0x3c] sm:$0x1]
        %v2781 = vshrl.u32 %v2764, 16
        %v2783 = vrot.slane %v2781, 4
        %v2784 = vshll.u32 %v2764, 16
        %v2786 = vrot.slane %v2784, 5
        %v2787 = vor.u32 %v2783, %v2786
        %v2788 = vrot.slane %v2787, 4
        %v2790 = vshll.u32 %v2765, 16
        %v2792 = vrot.slane %v2790, 5
        %v2793 = vsel %vm823, %v2788, %v2792
        %v2795 = vshrl.u32 %v2766, 16
        %v2797 = vrot.slane %v2795, 4
        %v2798 = vshll.u32 %v2766, 16
        %v2800 = vrot.slane %v2798, 5
        %v2801 = vor.u32 %v2797, %v2800
        %v2802 = vrot.slane %v2801, 4
        %v2804 = vshll.u32 %v2767, 16
        %v2806 = vrot.slane %v2804, 5
        %v2807 = vsel %vm823, %v2802, %v2806
        %v2809 = vshrl.u32 %v2768, 16
        %v2811 = vrot.slane %v2809, 4
        %v2812 = vshll.u32 %v2768, 16
        %v2814 = vrot.slane %v2812, 5
        %v2815 = vor.u32 %v2811, %v2814
        %v2816 = vrot.slane %v2815, 4
        %v2818 = vshll.u32 %v2769, 16
        %v2820 = vrot.slane %v2818, 5
        %v2821 = vsel %vm823, %v2816, %v2820
        %v2823 = vshrl.u32 %v2770, 16
        %v2825 = vrot.slane %v2823, 4
        %v2826 = vshll.u32 %v2770, 16
        %v2828 = vrot.slane %v2826, 5
        %v2829 = vor.u32 %v2825, %v2828
        %v2830 = vrot.slane %v2829, 4
        %v2832 = vshll.u32 %v2771, 16
        %v2834 = vrot.slane %v2832, 5
        %v2835 = vsel %vm823, %v2830, %v2834
        %v2837 = vshrl.u32 %v2772, 16
        %v2839 = vrot.slane %v2837, 4
        %v2840 = vshll.u32 %v2772, 16
        %v2842 = vrot.slane %v2840, 5
        %v2843 = vor.u32 %v2839, %v2842
        %v2844 = vrot.slane %v2843, 4
        %v2846 = vshll.u32 %v2773, 16
        %v2848 = vrot.slane %v2846, 5
        %v2849 = vsel %vm823, %v2844, %v2848
        %v2851 = vshrl.u32 %v2774, 16
        %v2853 = vrot.slane %v2851, 4
        %v2854 = vshll.u32 %v2774, 16
        %v2856 = vrot.slane %v2854, 5
        %v2857 = vor.u32 %v2853, %v2856
        %v2858 = vrot.slane %v2857, 4
        %v2860 = vshll.u32 %v2775, 16
        %v2862 = vrot.slane %v2860, 5
        %v2863 = vsel %vm823, %v2858, %v2862
        %v2865 = vshrl.u32 %v2776, 16
        %v2867 = vrot.slane %v2865, 4
        %v2868 = vshll.u32 %v2776, 16
        %v2870 = vrot.slane %v2868, 5
        %v2871 = vor.u32 %v2867, %v2870
        %v2872 = vrot.slane %v2871, 4
        %v2874 = vshll.u32 %v2777, 16
        %v2876 = vrot.slane %v2874, 5
        %v2877 = vsel %vm823, %v2872, %v2876
        %v2879 = vshrl.u32 %v2778, 16
        %v2881 = vrot.slane %v2879, 4
        %v2882 = vshll.u32 %v2778, 16
        %v2884 = vrot.slane %v2882, 5
        %v2885 = vor.u32 %v2881, %v2884
        %v2886 = vrot.slane %v2885, 4
        %v2888 = vshll.u32 %v2779, 16
        %v2890 = vrot.slane %v2888, 5
        %v2891 = vsel %vm823, %v2886, %v2890
        %v2892 = vld [vmem:[%s4 + $0xb0] sm:$0xf]
        %v2893 = vld [vmem:[%s4 + $0xb4] sm:$0xf]
        %v2894 = vld [vmem:[%s4 + $0xb8] sm:$0xf]
        %v2895 = vld [vmem:[%s4 + $0xbc] sm:$0xf]
        %v2896 = vunpack.c.l.b16 %v2793
        %v2897 = vunpack.c.l.b16 %v2807
        %v2898 = vunpack.c.l.b16 %v2821
        %v2899 = vunpack.c.l.b16 %v2835
        %v2900 = vunpack.c.l.b16 %v2849
        %v2901 = vunpack.c.l.b16 %v2863
        %v2902 = vunpack.c.l.b16 %v2877
        %v2903 = vunpack.c.l.b16 %v2891
        %v2904 = vpack.c.b16 %v2897, %v2896
        %v2905 = vpack.c.b16 %v2899, %v2898
        %v2906 = vpack.c.b16 %v2901, %v2900
        %v2907 = vpack.c.b16 %v2903, %v2902
        %v2912 = vunpack.c.l.b16 %v2892
        %v2913 = vunpack.c.l.b16 %v2893
        %v2914 = vunpack.c.l.b16 %v2894
        %v2915 = vunpack.c.l.b16 %v2895
        %v2916 = vpack.c.b16 %v2913, %v2912
        %v2917 = vpack.c.b16 %v2915, %v2914
        %v2921 = vsel %vm259, %v2904, 0
        %v2924 = vsel %vm259, %v2905, 0
        %v2927 = vsel %vm259, %v2906, 0
        %v2930 = vsel %vm259, %v2907, 0
        %2932 = vmatprep.subr.bf16.mxu0 0
        %2933 = vmatpush1.bf16.msra.mxu0 0
        %2934 = vmatprep.subr.bf16.mxu0 0
        %2935 = vmatpush1.bf16.msra.mxu0 0
        %2936 = vmatprep.subr.bf16.mxu0 0
        %2937 = vmatpush1.bf16.msra.mxu0 0
        %2938 = vmatprep.subr.bf16.mxu0 0
        %2939 = vmatpush1.bf16.msra.mxu0 0
        %2940 = vmatprep.subr.bf16.mxu0 0
        %2941 = vmatpush1.bf16.msra.mxu0 0
        %2942 = vmatprep.subr.bf16.mxu0 0
        %2943 = vmatpush1.bf16.msra.mxu0 0
        %2944 = vmatprep.subr.bf16.mxu0 0
        %2945 = vmatpush1.bf16.msra.mxu0 %v2917
        %2946 = vmatprep.subr.bf16.mxu0 0
        %2947 = vmatpush1.bf16.msra.mxu0 %v2916
        %2948 = vmatprep.subr.bf16.mxu0 0
        %2949 = vmatpush2.bf16.msra.mxu0 0
        %2950 = vmatprep.subr.bf16.mxu0 0
        %2951 = vmatpush2.bf16.msra.mxu0 0
        %2952 = vmatprep.subr.bf16.mxu0 0
        %2953 = vmatpush2.bf16.msra.mxu0 0
        %2954 = vmatprep.subr.bf16.mxu0 0
        %2955 = vmatpush2.bf16.msra.mxu0 0
        %2956 = vmatprep.subr.bf16.mxu0 0
        %2957 = vmatpush2.bf16.msra.mxu0 0
        %2958 = vmatprep.subr.bf16.mxu0 0
        %2959 = vmatpush2.bf16.msra.mxu0 0
        %2960 = vmatprep.subr.bf16.mxu0 0
        %2961 = vmatpush2.bf16.msra.mxu0 0
        %2962 = vmatprep.subr.bf16.mxu0 0
        %2963 = vmatpush2.bf16.msra.mxu0 0
        %2964 = vmatprep.mubr.bf16.mxu0 0
        %2965 = vmatmul.mubr.bf16.gmra.mxu0 %v2921
        %v2966 = vpop.f32.mrf.mxu0
        %v2967 = vadd.f32 0.0, %v2966
        %v2968 = vpop.f32.mrf.mxu0
        %v2969 = vpop.f32.mrf.mxu0
        %v2970 = vadd.f32 0.0, %v2969
        %v2971 = vpop.f32.mrf.mxu0
        %2972 = vmatprep.mubr.bf16.mxu0 0
        %2973 = vmatmul.mubr.bf16.gmra.mxu0 %v2924
        %v2974 = vpop.f32.mrf.mxu0
        %v2975 = vadd.f32 0.0, %v2974
        %v2976 = vpop.f32.mrf.mxu0
        %v2977 = vpop.f32.mrf.mxu0
        %v2978 = vadd.f32 0.0, %v2977
        %v2979 = vpop.f32.mrf.mxu0
        %2980 = vmatprep.mubr.bf16.mxu0 0
        %2981 = vmatmul.mubr.bf16.gmra.mxu0 %v2927
        %v2982 = vpop.f32.mrf.mxu0
        %v2983 = vadd.f32 0.0, %v2982
        %v2984 = vpop.f32.mrf.mxu0
        %v2985 = vpop.f32.mrf.mxu0
        %v2986 = vadd.f32 0.0, %v2985
        %v2987 = vpop.f32.mrf.mxu0
        %2988 = vmatprep.mubr.bf16.mxu0 0
        %2989 = vmatmul.mubr.bf16.gmra.mxu0 %v2930
        %v2990 = vpop.f32.mrf.mxu0
        %v2991 = vadd.f32 0.0, %v2990
        %v2992 = vpop.f32.mrf.mxu0
        %v2993 = vpop.f32.mrf.mxu0
        %v2994 = vadd.f32 0.0, %v2993
        %v2995 = vpop.f32.mrf.mxu0
        %2996 = vdwg.mxu0
        %v2997 = vadd.f32 %v2756, %v2967
        %v2998 = vadd.f32 %v2757, %v2970
        %v2999 = vadd.f32 %v2758, %v2975
        %v3000 = vadd.f32 %v2759, %v2978
        %v3001 = vadd.f32 %v2760, %v2983
        %v3002 = vadd.f32 %v2761, %v2986
        %v3003 = vadd.f32 %v2762, %v2991
        %v3004 = vadd.f32 %v2763, %v2994
        %v3005 = vld [vmem:[%s622] sm:$0xe]
        %v3006 = vld [vmem:[%s622 + $0x8] sm:$0xe]
        %v3007 = vld [vmem:[%s622 + $0x10] sm:$0xe]
        %v3008 = vld [vmem:[%s622 + $0x18] sm:$0xe]
        %v3009 = vld [vmem:[%s622 + $0x20] sm:$0xe]
        %v3010 = vld [vmem:[%s622 + $0x28] sm:$0xe]
        %v3011 = vld [vmem:[%s622 + $0x30] sm:$0xe]
        %v3012 = vld [vmem:[%s622 + $0x38] sm:$0xe]
        %v3029 = vrot.slane %v3005, 5
        %v3030 = vrot.slane %v3029, 4
        %v3031 = vrot.slane %v2765, 5
        %v3032 = vsel %vm1075, %v3030, %v3031
        %v3033 = vrot.slane %v3006, 5
        %v3034 = vrot.slane %v3033, 4
        %v3035 = vrot.slane %v2767, 5
        %v3036 = vsel %vm1075, %v3034, %v3035
        %v3037 = vrot.slane %v3007, 5
        %v3038 = vrot.slane %v3037, 4
        %v3039 = vrot.slane %v2769, 5
        %v3040 = vsel %vm1075, %v3038, %v3039
        %v3041 = vrot.slane %v3008, 5
        %v3042 = vrot.slane %v3041, 4
        %v3043 = vrot.slane %v2771, 5
        %v3044 = vsel %vm1075, %v3042, %v3043
        %v3045 = vrot.slane %v3009, 5
        %v3046 = vrot.slane %v3045, 4
        %v3047 = vrot.slane %v2773, 5
        %v3048 = vsel %vm1075, %v3046, %v3047
        %v3049 = vrot.slane %v3010, 5
        %v3050 = vrot.slane %v3049, 4
        %v3051 = vrot.slane %v2775, 5
        %v3052 = vsel %vm1075, %v3050, %v3051
        %v3053 = vrot.slane %v3011, 5
        %v3054 = vrot.slane %v3053, 4
        %v3055 = vrot.slane %v2777, 5
        %v3056 = vsel %vm1075, %v3054, %v3055
        %v3057 = vrot.slane %v3012, 5
        %v3058 = vrot.slane %v3057, 4
        %v3059 = vrot.slane %v2779, 5
        %v3060 = vsel %vm1075, %v3058, %v3059
        %v3061 = vld [vmem:[%s4 + $0xc0] sm:$0xf]
        %v3062 = vld [vmem:[%s4 + $0xc4] sm:$0xf]
        %v3063 = vld [vmem:[%s4 + $0xc8] sm:$0xf]
        %v3064 = vld [vmem:[%s4 + $0xcc] sm:$0xf]
        %v3065 = vunpack.c.l.b16 %v3032
        %v3066 = vunpack.c.l.b16 %v3036
        %v3067 = vunpack.c.l.b16 %v3040
        %v3068 = vunpack.c.l.b16 %v3044
        %v3069 = vunpack.c.l.b16 %v3048
        %v3070 = vunpack.c.l.b16 %v3052
        %v3071 = vunpack.c.l.b16 %v3056
        %v3072 = vunpack.c.l.b16 %v3060
        %v3073 = vpack.c.b16 %v3066, %v3065
        %v3074 = vpack.c.b16 %v3068, %v3067
        %v3075 = vpack.c.b16 %v3070, %v3069
        %v3076 = vpack.c.b16 %v3072, %v3071
        %v3081 = vunpack.c.l.b16 %v3061
        %v3082 = vunpack.c.l.b16 %v3062
        %v3083 = vunpack.c.l.b16 %v3063
        %v3084 = vunpack.c.l.b16 %v3064
        %v3085 = vpack.c.b16 %v3082, %v3081
        %v3086 = vpack.c.b16 %v3084, %v3083
        %v3090 = vsel %vm259, %v3073, 0
        %v3093 = vsel %vm259, %v3074, 0
        %v3096 = vsel %vm259, %v3075, 0
        %v3099 = vsel %vm259, %v3076, 0
        %3101 = vmatprep.subr.bf16.mxu0 0
        %3102 = vmatpush1.bf16.msra.mxu0 0
        %3103 = vmatprep.subr.bf16.mxu0 0
        %3104 = vmatpush1.bf16.msra.mxu0 0
        %3105 = vmatprep.subr.bf16.mxu0 0
        %3106 = vmatpush1.bf16.msra.mxu0 0
        %3107 = vmatprep.subr.bf16.mxu0 0
        %3108 = vmatpush1.bf16.msra.mxu0 0
        %3109 = vmatprep.subr.bf16.mxu0 0
        %3110 = vmatpush1.bf16.msra.mxu0 0
        %3111 = vmatprep.subr.bf16.mxu0 0
        %3112 = vmatpush1.bf16.msra.mxu0 0
        %3113 = vmatprep.subr.bf16.mxu0 0
        %3114 = vmatpush1.bf16.msra.mxu0 %v3086
        %3115 = vmatprep.subr.bf16.mxu0 0
        %3116 = vmatpush1.bf16.msra.mxu0 %v3085
        %3117 = vmatprep.subr.bf16.mxu0 0
        %3118 = vmatpush2.bf16.msra.mxu0 0
        %3119 = vmatprep.subr.bf16.mxu0 0
        %3120 = vmatpush2.bf16.msra.mxu0 0
        %3121 = vmatprep.subr.bf16.mxu0 0
        %3122 = vmatpush2.bf16.msra.mxu0 0
        %3123 = vmatprep.subr.bf16.mxu0 0
        %3124 = vmatpush2.bf16.msra.mxu0 0
        %3125 = vmatprep.subr.bf16.mxu0 0
        %3126 = vmatpush2.bf16.msra.mxu0 0
        %3127 = vmatprep.subr.bf16.mxu0 0
        %3128 = vmatpush2.bf16.msra.mxu0 0
        %3129 = vmatprep.subr.bf16.mxu0 0
        %3130 = vmatpush2.bf16.msra.mxu0 0
        %3131 = vmatprep.subr.bf16.mxu0 0
        %3132 = vmatpush2.bf16.msra.mxu0 0
        %3133 = vmatprep.mubr.bf16.mxu0 0
        %3134 = vmatmul.mubr.bf16.gmra.mxu0 %v3090
        %v3135 = vpop.f32.mrf.mxu0
        %v3136 = vadd.f32 0.0, %v3135
        %v3137 = vpop.f32.mrf.mxu0
        %v3138 = vpop.f32.mrf.mxu0
        %v3139 = vadd.f32 0.0, %v3138
        %v3140 = vpop.f32.mrf.mxu0
        %3141 = vmatprep.mubr.bf16.mxu0 0
        %3142 = vmatmul.mubr.bf16.gmra.mxu0 %v3093
        %v3143 = vpop.f32.mrf.mxu0
        %v3144 = vadd.f32 0.0, %v3143
        %v3145 = vpop.f32.mrf.mxu0
        %v3146 = vpop.f32.mrf.mxu0
        %v3147 = vadd.f32 0.0, %v3146
        %v3148 = vpop.f32.mrf.mxu0
        %3149 = vmatprep.mubr.bf16.mxu0 0
        %3150 = vmatmul.mubr.bf16.gmra.mxu0 %v3096
        %v3151 = vpop.f32.mrf.mxu0
        %v3152 = vadd.f32 0.0, %v3151
        %v3153 = vpop.f32.mrf.mxu0
        %v3154 = vpop.f32.mrf.mxu0
        %v3155 = vadd.f32 0.0, %v3154
        %v3156 = vpop.f32.mrf.mxu0
        %3157 = vmatprep.mubr.bf16.mxu0 0
        %3158 = vmatmul.mubr.bf16.gmra.mxu0 %v3099
        %v3159 = vpop.f32.mrf.mxu0
        %v3160 = vadd.f32 0.0, %v3159
        %v3161 = vpop.f32.mrf.mxu0
        %v3162 = vpop.f32.mrf.mxu0
        %v3163 = vadd.f32 0.0, %v3162
        %v3164 = vpop.f32.mrf.mxu0
        %3165 = vdwg.mxu0
        %v3166 = vadd.f32 %v2997, %v3136
        %v3167 = vadd.f32 %v2998, %v3139
        %v3168 = vadd.f32 %v2999, %v3144
        %v3169 = vadd.f32 %v3000, %v3147
        %v3170 = vadd.f32 %v3001, %v3152
        %v3171 = vadd.f32 %v3002, %v3155
        %v3172 = vadd.f32 %v3003, %v3160
        %v3173 = vadd.f32 %v3004, %v3163
        %v3174 = vld [vmem:[%s622 + $0x4] sm:$0x3]
        %v3175 = vld [vmem:[%s622 + $0xc] sm:$0x3]
        %v3176 = vld [vmem:[%s622 + $0x14] sm:$0x3]
        %v3177 = vld [vmem:[%s622 + $0x1c] sm:$0x3]
        %v3178 = vld [vmem:[%s622 + $0x24] sm:$0x3]
        %v3179 = vld [vmem:[%s622 + $0x2c] sm:$0x3]
        %v3180 = vld [vmem:[%s622 + $0x34] sm:$0x3]
        %v3181 = vld [vmem:[%s622 + $0x3c] sm:$0x3]
        %v3183 = vshrl.u32 %v3005, 16
        %v3185 = vrot.slane %v3183, 5
        %v3186 = vshll.u32 %v3005, 16
        %v3188 = vrot.slane %v3186, 6
        %v3189 = vor.u32 %v3185, %v3188
        %v3190 = vrot.slane %v3189, 4
        %v3192 = vshrl.u32 %v3174, 16
        %v3194 = vrot.slane %v3192, 5
        %v3195 = vshll.u32 %v3174, 16
        %v3197 = vrot.slane %v3195, 6
        %v3198 = vor.u32 %v3194, %v3197
        %v3199 = vsel %vm1231, %v3190, %v3198
        %v3201 = vshrl.u32 %v3006, 16
        %v3203 = vrot.slane %v3201, 5
        %v3204 = vshll.u32 %v3006, 16
        %v3206 = vrot.slane %v3204, 6
        %v3207 = vor.u32 %v3203, %v3206
        %v3208 = vrot.slane %v3207, 4
        %v3210 = vshrl.u32 %v3175, 16
        %v3212 = vrot.slane %v3210, 5
        %v3213 = vshll.u32 %v3175, 16
        %v3215 = vrot.slane %v3213, 6
        %v3216 = vor.u32 %v3212, %v3215
        %v3217 = vsel %vm1231, %v3208, %v3216
        %v3219 = vshrl.u32 %v3007, 16
        %v3221 = vrot.slane %v3219, 5
        %v3222 = vshll.u32 %v3007, 16
        %v3224 = vrot.slane %v3222, 6
        %v3225 = vor.u32 %v3221, %v3224
        %v3226 = vrot.slane %v3225, 4
        %v3228 = vshrl.u32 %v3176, 16
        %v3230 = vrot.slane %v3228, 5
        %v3231 = vshll.u32 %v3176, 16
        %v3233 = vrot.slane %v3231, 6
        %v3234 = vor.u32 %v3230, %v3233
        %v3235 = vsel %vm1231, %v3226, %v3234
        %v3237 = vshrl.u32 %v3008, 16
        %v3239 = vrot.slane %v3237, 5
        %v3240 = vshll.u32 %v3008, 16
        %v3242 = vrot.slane %v3240, 6
        %v3243 = vor.u32 %v3239, %v3242
        %v3244 = vrot.slane %v3243, 4
        %v3246 = vshrl.u32 %v3177, 16
        %v3248 = vrot.slane %v3246, 5
        %v3249 = vshll.u32 %v3177, 16
        %v3251 = vrot.slane %v3249, 6
        %v3252 = vor.u32 %v3248, %v3251
        %v3253 = vsel %vm1231, %v3244, %v3252
        %v3255 = vshrl.u32 %v3009, 16
        %v3257 = vrot.slane %v3255, 5
        %v3258 = vshll.u32 %v3009, 16
        %v3260 = vrot.slane %v3258, 6
        %v3261 = vor.u32 %v3257, %v3260
        %v3262 = vrot.slane %v3261, 4
        %v3264 = vshrl.u32 %v3178, 16
        %v3266 = vrot.slane %v3264, 5
        %v3267 = vshll.u32 %v3178, 16
        %v3269 = vrot.slane %v3267, 6
        %v3270 = vor.u32 %v3266, %v3269
        %v3271 = vsel %vm1231, %v3262, %v3270
        %v3273 = vshrl.u32 %v3010, 16
        %v3275 = vrot.slane %v3273, 5
        %v3276 = vshll.u32 %v3010, 16
        %v3278 = vrot.slane %v3276, 6
        %v3279 = vor.u32 %v3275, %v3278
        %v3280 = vrot.slane %v3279, 4
        %v3282 = vshrl.u32 %v3179, 16
        %v3284 = vrot.slane %v3282, 5
        %v3285 = vshll.u32 %v3179, 16
        %v3287 = vrot.slane %v3285, 6
        %v3288 = vor.u32 %v3284, %v3287
        %v3289 = vsel %vm1231, %v3280, %v3288
        %v3291 = vshrl.u32 %v3011, 16
        %v3293 = vrot.slane %v3291, 5
        %v3294 = vshll.u32 %v3011, 16
        %v3296 = vrot.slane %v3294, 6
        %v3297 = vor.u32 %v3293, %v3296
        %v3298 = vrot.slane %v3297, 4
        %v3300 = vshrl.u32 %v3180, 16
        %v3302 = vrot.slane %v3300, 5
        %v3303 = vshll.u32 %v3180, 16
        %v3305 = vrot.slane %v3303, 6
        %v3306 = vor.u32 %v3302, %v3305
        %v3307 = vsel %vm1231, %v3298, %v3306
        %v3309 = vshrl.u32 %v3012, 16
        %v3311 = vrot.slane %v3309, 5
        %v3312 = vshll.u32 %v3012, 16
        %v3314 = vrot.slane %v3312, 6
        %v3315 = vor.u32 %v3311, %v3314
        %v3316 = vrot.slane %v3315, 4
        %v3318 = vshrl.u32 %v3181, 16
        %v3320 = vrot.slane %v3318, 5
        %v3321 = vshll.u32 %v3181, 16
        %v3323 = vrot.slane %v3321, 6
        %v3324 = vor.u32 %v3320, %v3323
        %v3325 = vsel %vm1231, %v3316, %v3324
        %v3326 = vld [vmem:[%s4 + $0xd0] sm:$0xf]
        %v3327 = vld [vmem:[%s4 + $0xd4] sm:$0xf]
        %v3328 = vld [vmem:[%s4 + $0xd8] sm:$0xf]
        %v3329 = vld [vmem:[%s4 + $0xdc] sm:$0xf]
        %v3330 = vunpack.c.l.b16 %v3199
        %v3331 = vunpack.c.l.b16 %v3217
        %v3332 = vunpack.c.l.b16 %v3235
        %v3333 = vunpack.c.l.b16 %v3253
        %v3334 = vunpack.c.l.b16 %v3271
        %v3335 = vunpack.c.l.b16 %v3289
        %v3336 = vunpack.c.l.b16 %v3307
        %v3337 = vunpack.c.l.b16 %v3325
        %v3338 = vpack.c.b16 %v3331, %v3330
        %v3339 = vpack.c.b16 %v3333, %v3332
        %v3340 = vpack.c.b16 %v3335, %v3334
        %v3341 = vpack.c.b16 %v3337, %v3336
        %v3346 = vunpack.c.l.b16 %v3326
        %v3347 = vunpack.c.l.b16 %v3327
        %v3348 = vunpack.c.l.b16 %v3328
        %v3349 = vunpack.c.l.b16 %v3329
        %v3350 = vpack.c.b16 %v3347, %v3346
        %v3351 = vpack.c.b16 %v3349, %v3348
        %v3355 = vsel %vm259, %v3338, 0
        %v3358 = vsel %vm259, %v3339, 0
        %v3361 = vsel %vm259, %v3340, 0
        %v3364 = vsel %vm259, %v3341, 0
        %3366 = vmatprep.subr.bf16.mxu0 0
        %3367 = vmatpush1.bf16.msra.mxu0 0
        %3368 = vmatprep.subr.bf16.mxu0 0
        %3369 = vmatpush1.bf16.msra.mxu0 0
        %3370 = vmatprep.subr.bf16.mxu0 0
        %3371 = vmatpush1.bf16.msra.mxu0 0
        %3372 = vmatprep.subr.bf16.mxu0 0
        %3373 = vmatpush1.bf16.msra.mxu0 0
        %3374 = vmatprep.subr.bf16.mxu0 0
        %3375 = vmatpush1.bf16.msra.mxu0 0
        %3376 = vmatprep.subr.bf16.mxu0 0
        %3377 = vmatpush1.bf16.msra.mxu0 0
        %3378 = vmatprep.subr.bf16.mxu0 0
        %3379 = vmatpush1.bf16.msra.mxu0 %v3351
        %3380 = vmatprep.subr.bf16.mxu0 0
        %3381 = vmatpush1.bf16.msra.mxu0 %v3350
        %3382 = vmatprep.subr.bf16.mxu0 0
        %3383 = vmatpush2.bf16.msra.mxu0 0
        %3384 = vmatprep.subr.bf16.mxu0 0
        %3385 = vmatpush2.bf16.msra.mxu0 0
        %3386 = vmatprep.subr.bf16.mxu0 0
        %3387 = vmatpush2.bf16.msra.mxu0 0
        %3388 = vmatprep.subr.bf16.mxu0 0
        %3389 = vmatpush2.bf16.msra.mxu0 0
        %3390 = vmatprep.subr.bf16.mxu0 0
        %3391 = vmatpush2.bf16.msra.mxu0 0
        %3392 = vmatprep.subr.bf16.mxu0 0
        %3393 = vmatpush2.bf16.msra.mxu0 0
        %3394 = vmatprep.subr.bf16.mxu0 0
        %3395 = vmatpush2.bf16.msra.mxu0 0
        %3396 = vmatprep.subr.bf16.mxu0 0
        %3397 = vmatpush2.bf16.msra.mxu0 0
        %3398 = vmatprep.mubr.bf16.mxu0 0
        %3399 = vmatmul.mubr.bf16.gmra.mxu0 %v3355
        %v3400 = vpop.f32.mrf.mxu0
        %v3401 = vadd.f32 0.0, %v3400
        %v3402 = vpop.f32.mrf.mxu0
        %v3403 = vpop.f32.mrf.mxu0
        %v3404 = vadd.f32 0.0, %v3403
        %v3405 = vpop.f32.mrf.mxu0
        %3406 = vmatprep.mubr.bf16.mxu0 0
        %3407 = vmatmul.mubr.bf16.gmra.mxu0 %v3358
        %v3408 = vpop.f32.mrf.mxu0
        %v3409 = vadd.f32 0.0, %v3408
        %v3410 = vpop.f32.mrf.mxu0
        %v3411 = vpop.f32.mrf.mxu0
        %v3412 = vadd.f32 0.0, %v3411
        %v3413 = vpop.f32.mrf.mxu0
        %3414 = vmatprep.mubr.bf16.mxu0 0
        %3415 = vmatmul.mubr.bf16.gmra.mxu0 %v3361
        %v3416 = vpop.f32.mrf.mxu0
        %v3417 = vadd.f32 0.0, %v3416
        %v3418 = vpop.f32.mrf.mxu0
        %v3419 = vpop.f32.mrf.mxu0
        %v3420 = vadd.f32 0.0, %v3419
        %v3421 = vpop.f32.mrf.mxu0
        %3422 = vmatprep.mubr.bf16.mxu0 0
        %3423 = vmatmul.mubr.bf16.gmra.mxu0 %v3364
        %v3424 = vpop.f32.mrf.mxu0
        %v3425 = vadd.f32 0.0, %v3424
        %v3426 = vpop.f32.mrf.mxu0
        %v3427 = vpop.f32.mrf.mxu0
        %v3428 = vadd.f32 0.0, %v3427
        %v3429 = vpop.f32.mrf.mxu0
        %3430 = vdwg.mxu0
        %v3431 = vadd.f32 %v3166, %v3401
        %v3432 = vadd.f32 %v3167, %v3404
        %v3433 = vadd.f32 %v3168, %v3409
        %v3434 = vadd.f32 %v3169, %v3412
        %v3435 = vadd.f32 %v3170, %v3417
        %v3436 = vadd.f32 %v3171, %v3420
        %v3437 = vadd.f32 %v3172, %v3425
        %v3438 = vadd.f32 %v3173, %v3428
        %v3439 = vld [vmem:[%s622] sm:$0xc]
        %v3440 = vld [vmem:[%s622 + $0x8] sm:$0xc]
        %v3441 = vld [vmem:[%s622 + $0x10] sm:$0xc]
        %v3442 = vld [vmem:[%s622 + $0x18] sm:$0xc]
        %v3443 = vld [vmem:[%s622 + $0x20] sm:$0xc]
        %v3444 = vld [vmem:[%s622 + $0x28] sm:$0xc]
        %v3445 = vld [vmem:[%s622 + $0x30] sm:$0xc]
        %v3446 = vld [vmem:[%s622 + $0x38] sm:$0xc]
        %v3463 = vrot.slane %v3439, 6
        %v3464 = vrot.slane %v3463, 4
        %v3465 = vrot.slane %v3174, 6
        %v3466 = vsel %vm1515, %v3464, %v3465
        %v3467 = vrot.slane %v3440, 6
        %v3468 = vrot.slane %v3467, 4
        %v3469 = vrot.slane %v3175, 6
        %v3470 = vsel %vm1515, %v3468, %v3469
        %v3471 = vrot.slane %v3441, 6
        %v3472 = vrot.slane %v3471, 4
        %v3473 = vrot.slane %v3176, 6
        %v3474 = vsel %vm1515, %v3472, %v3473
        %v3475 = vrot.slane %v3442, 6
        %v3476 = vrot.slane %v3475, 4
        %v3477 = vrot.slane %v3177, 6
        %v3478 = vsel %vm1515, %v3476, %v3477
        %v3479 = vrot.slane %v3443, 6
        %v3480 = vrot.slane %v3479, 4
        %v3481 = vrot.slane %v3178, 6
        %v3482 = vsel %vm1515, %v3480, %v3481
        %v3483 = vrot.slane %v3444, 6
        %v3484 = vrot.slane %v3483, 4
        %v3485 = vrot.slane %v3179, 6
        %v3486 = vsel %vm1515, %v3484, %v3485
        %v3487 = vrot.slane %v3445, 6
        %v3488 = vrot.slane %v3487, 4
        %v3489 = vrot.slane %v3180, 6
        %v3490 = vsel %vm1515, %v3488, %v3489
        %v3491 = vrot.slane %v3446, 6
        %v3492 = vrot.slane %v3491, 4
        %v3493 = vrot.slane %v3181, 6
        %v3494 = vsel %vm1515, %v3492, %v3493
        %v3495 = vld [vmem:[%s4 + $0xe0] sm:$0xf]
        %v3496 = vld [vmem:[%s4 + $0xe4] sm:$0xf]
        %v3497 = vld [vmem:[%s4 + $0xe8] sm:$0xf]
        %v3498 = vld [vmem:[%s4 + $0xec] sm:$0xf]
        %v3499 = vunpack.c.l.b16 %v3466
        %v3500 = vunpack.c.l.b16 %v3470
        %v3501 = vunpack.c.l.b16 %v3474
        %v3502 = vunpack.c.l.b16 %v3478
        %v3503 = vunpack.c.l.b16 %v3482
        %v3504 = vunpack.c.l.b16 %v3486
        %v3505 = vunpack.c.l.b16 %v3490
        %v3506 = vunpack.c.l.b16 %v3494
        %v3507 = vpack.c.b16 %v3500, %v3499
        %v3508 = vpack.c.b16 %v3502, %v3501
        %v3509 = vpack.c.b16 %v3504, %v3503
        %v3510 = vpack.c.b16 %v3506, %v3505
        %v3515 = vunpack.c.l.b16 %v3495
        %v3516 = vunpack.c.l.b16 %v3496
        %v3517 = vunpack.c.l.b16 %v3497
        %v3518 = vunpack.c.l.b16 %v3498
        %v3519 = vpack.c.b16 %v3516, %v3515
        %v3520 = vpack.c.b16 %v3518, %v3517
        %v3524 = vsel %vm259, %v3507, 0
        %v3527 = vsel %vm259, %v3508, 0
        %v3530 = vsel %vm259, %v3509, 0
        %v3533 = vsel %vm259, %v3510, 0
        %3535 = vmatprep.subr.bf16.mxu0 0
        %3536 = vmatpush1.bf16.msra.mxu0 0
        %3537 = vmatprep.subr.bf16.mxu0 0
        %3538 = vmatpush1.bf16.msra.mxu0 0
        %3539 = vmatprep.subr.bf16.mxu0 0
        %3540 = vmatpush1.bf16.msra.mxu0 0
        %3541 = vmatprep.subr.bf16.mxu0 0
        %3542 = vmatpush1.bf16.msra.mxu0 0
        %3543 = vmatprep.subr.bf16.mxu0 0
        %3544 = vmatpush1.bf16.msra.mxu0 0
        %3545 = vmatprep.subr.bf16.mxu0 0
        %3546 = vmatpush1.bf16.msra.mxu0 0
        %3547 = vmatprep.subr.bf16.mxu0 0
        %3548 = vmatpush1.bf16.msra.mxu0 %v3520
        %3549 = vmatprep.subr.bf16.mxu0 0
        %3550 = vmatpush1.bf16.msra.mxu0 %v3519
        %3551 = vmatprep.subr.bf16.mxu0 0
        %3552 = vmatpush2.bf16.msra.mxu0 0
        %3553 = vmatprep.subr.bf16.mxu0 0
        %3554 = vmatpush2.bf16.msra.mxu0 0
        %3555 = vmatprep.subr.bf16.mxu0 0
        %3556 = vmatpush2.bf16.msra.mxu0 0
        %3557 = vmatprep.subr.bf16.mxu0 0
        %3558 = vmatpush2.bf16.msra.mxu0 0
        %3559 = vmatprep.subr.bf16.mxu0 0
        %3560 = vmatpush2.bf16.msra.mxu0 0
        %3561 = vmatprep.subr.bf16.mxu0 0
        %3562 = vmatpush2.bf16.msra.mxu0 0
        %3563 = vmatprep.subr.bf16.mxu0 0
        %3564 = vmatpush2.bf16.msra.mxu0 0
        %3565 = vmatprep.subr.bf16.mxu0 0
        %3566 = vmatpush2.bf16.msra.mxu0 0
        %3567 = vmatprep.mubr.bf16.mxu0 0
        %3568 = vmatmul.mubr.bf16.gmra.mxu0 %v3524
        %v3569 = vpop.f32.mrf.mxu0
        %v3570 = vadd.f32 0.0, %v3569
        %v3571 = vpop.f32.mrf.mxu0
        %v3572 = vpop.f32.mrf.mxu0
        %v3573 = vadd.f32 0.0, %v3572
        %v3574 = vpop.f32.mrf.mxu0
        %3575 = vmatprep.mubr.bf16.mxu0 0
        %3576 = vmatmul.mubr.bf16.gmra.mxu0 %v3527
        %v3577 = vpop.f32.mrf.mxu0
        %v3578 = vadd.f32 0.0, %v3577
        %v3579 = vpop.f32.mrf.mxu0
        %v3580 = vpop.f32.mrf.mxu0
        %v3581 = vadd.f32 0.0, %v3580
        %v3582 = vpop.f32.mrf.mxu0
        %3583 = vmatprep.mubr.bf16.mxu0 0
        %3584 = vmatmul.mubr.bf16.gmra.mxu0 %v3530
        %v3585 = vpop.f32.mrf.mxu0
        %v3586 = vadd.f32 0.0, %v3585
        %v3587 = vpop.f32.mrf.mxu0
        %v3588 = vpop.f32.mrf.mxu0
        %v3589 = vadd.f32 0.0, %v3588
        %v3590 = vpop.f32.mrf.mxu0
        %3591 = vmatprep.mubr.bf16.mxu0 0
        %3592 = vmatmul.mubr.bf16.gmra.mxu0 %v3533
        %v3593 = vpop.f32.mrf.mxu0
        %v3594 = vadd.f32 0.0, %v3593
        %v3595 = vpop.f32.mrf.mxu0
        %v3596 = vpop.f32.mrf.mxu0
        %v3597 = vadd.f32 0.0, %v3596
        %v3598 = vpop.f32.mrf.mxu0
        %3599 = vdwg.mxu0
        %v3600 = vadd.f32 %v3431, %v3570
        %v3601 = vadd.f32 %v3432, %v3573
        %v3602 = vadd.f32 %v3433, %v3578
        %v3603 = vadd.f32 %v3434, %v3581
        %v3604 = vadd.f32 %v3435, %v3586
        %v3605 = vadd.f32 %v3436, %v3589
        %v3606 = vadd.f32 %v3437, %v3594
        %v3607 = vadd.f32 %v3438, %v3597
        %s3608 = scalar_lea.vmem [#allocation2], 24
        %v3609 = vld [vmem:[%s3608] sm:$0xf]
        %v3610 = vld [vmem:[%s3608 + $0x8] sm:$0xf]
        %v3611 = vld [vmem:[%s3608 + $0x10] sm:$0xf]
        %v3612 = vld [vmem:[%s3608 + $0x18] sm:$0xf]
        %v3613 = vld [vmem:[%s3608 + $0x20] sm:$0xf]
        %v3614 = vld [vmem:[%s3608 + $0x28] sm:$0xf]
        %v3615 = vld [vmem:[%s3608 + $0x30] sm:$0xf]
        %v3616 = vld [vmem:[%s3608 + $0x38] sm:$0xf]
        %v3617 = vld [vmem:[%s4 + $0xf0] sm:$0xf]
        %v3618 = vld [vmem:[%s4 + $0xf4] sm:$0xf]
        %v3619 = vld [vmem:[%s4 + $0xf8] sm:$0xf]
        %v3620 = vld [vmem:[%s4 + $0xfc] sm:$0xf]
        %v3629 = vunpack.c.l.b16 %v3609
        %v3630 = vunpack.c.l.b16 %v3610
        %v3631 = vunpack.c.l.b16 %v3611
        %v3632 = vunpack.c.l.b16 %v3612
        %v3633 = vunpack.c.l.b16 %v3613
        %v3634 = vunpack.c.l.b16 %v3614
        %v3635 = vunpack.c.l.b16 %v3615
        %v3636 = vunpack.c.l.b16 %v3616
        %v3637 = vpack.c.b16 %v3630, %v3629
        %v3638 = vpack.c.b16 %v3632, %v3631
        %v3639 = vpack.c.b16 %v3634, %v3633
        %v3640 = vpack.c.b16 %v3636, %v3635
        %v3645 = vunpack.c.l.b16 %v3617
        %v3646 = vunpack.c.l.b16 %v3618
        %v3647 = vunpack.c.l.b16 %v3619
        %v3648 = vunpack.c.l.b16 %v3620
        %v3649 = vpack.c.b16 %v3646, %v3645
        %v3650 = vpack.c.b16 %v3648, %v3647
        %v3654 = vsel %vm259, %v3637, 0
        %v3657 = vsel %vm259, %v3638, 0
        %v3660 = vsel %vm259, %v3639, 0
        %v3663 = vsel %vm259, %v3640, 0
        %3665 = vmatprep.subr.bf16.mxu0 0
        %3666 = vmatpush1.bf16.msra.mxu0 0
        %3667 = vmatprep.subr.bf16.mxu0 0
        %3668 = vmatpush1.bf16.msra.mxu0 0
        %3669 = vmatprep.subr.bf16.mxu0 0
        %3670 = vmatpush1.bf16.msra.mxu0 0
        %3671 = vmatprep.subr.bf16.mxu0 0
        %3672 = vmatpush1.bf16.msra.mxu0 0
        %3673 = vmatprep.subr.bf16.mxu0 0
        %3674 = vmatpush1.bf16.msra.mxu0 0
        %3675 = vmatprep.subr.bf16.mxu0 0
        %3676 = vmatpush1.bf16.msra.mxu0 0
        %3677 = vmatprep.subr.bf16.mxu0 0
        %3678 = vmatpush1.bf16.msra.mxu0 %v3650
        %3679 = vmatprep.subr.bf16.mxu0 0
        %3680 = vmatpush1.bf16.msra.mxu0 %v3649
        %3681 = vmatprep.subr.bf16.mxu0 0
        %3682 = vmatpush2.bf16.msra.mxu0 0
        %3683 = vmatprep.subr.bf16.mxu0 0
        %3684 = vmatpush2.bf16.msra.mxu0 0
        %3685 = vmatprep.subr.bf16.mxu0 0
        %3686 = vmatpush2.bf16.msra.mxu0 0
        %3687 = vmatprep.subr.bf16.mxu0 0
        %3688 = vmatpush2.bf16.msra.mxu0 0
        %3689 = vmatprep.subr.bf16.mxu0 0
        %3690 = vmatpush2.bf16.msra.mxu0 0
        %3691 = vmatprep.subr.bf16.mxu0 0
        %3692 = vmatpush2.bf16.msra.mxu0 0
        %3693 = vmatprep.subr.bf16.mxu0 0
        %3694 = vmatpush2.bf16.msra.mxu0 0
        %3695 = vmatprep.subr.bf16.mxu0 0
        %3696 = vmatpush2.bf16.msra.mxu0 0
        %3697 = vmatprep.mubr.bf16.mxu0 0
        %3698 = vmatmul.mubr.bf16.gmra.mxu0 %v3654
        %v3699 = vpop.f32.mrf.mxu0
        %v3700 = vadd.f32 0.0, %v3699
        %v3701 = vpop.f32.mrf.mxu0
        %v3702 = vpop.f32.mrf.mxu0
        %v3703 = vadd.f32 0.0, %v3702
        %v3704 = vpop.f32.mrf.mxu0
        %3705 = vmatprep.mubr.bf16.mxu0 0
        %3706 = vmatmul.mubr.bf16.gmra.mxu0 %v3657
        %v3707 = vpop.f32.mrf.mxu0
        %v3708 = vadd.f32 0.0, %v3707
        %v3709 = vpop.f32.mrf.mxu0
        %v3710 = vpop.f32.mrf.mxu0
        %v3711 = vadd.f32 0.0, %v3710
        %v3712 = vpop.f32.mrf.mxu0
        %3713 = vmatprep.mubr.bf16.mxu0 0
        %3714 = vmatmul.mubr.bf16.gmra.mxu0 %v3660
        %v3715 = vpop.f32.mrf.mxu0
        %v3716 = vadd.f32 0.0, %v3715
        %v3717 = vpop.f32.mrf.mxu0
        %v3718 = vpop.f32.mrf.mxu0
        %v3719 = vadd.f32 0.0, %v3718
        %v3720 = vpop.f32.mrf.mxu0
        %3721 = vmatprep.mubr.bf16.mxu0 0
        %3722 = vmatmul.mubr.bf16.gmra.mxu0 %v3663
        %v3723 = vpop.f32.mrf.mxu0
        %v3724 = vadd.f32 0.0, %v3723
        %v3725 = vpop.f32.mrf.mxu0
        %v3726 = vpop.f32.mrf.mxu0
        %v3727 = vadd.f32 0.0, %v3726
        %v3728 = vpop.f32.mrf.mxu0
        %3729 = vdwg.mxu0
        %v3730 = vadd.f32 %v3600, %v3700
        %v3731 = vadd.f32 %v3601, %v3703
        %v3732 = vadd.f32 %v3602, %v3708
        %v3733 = vadd.f32 %v3603, %v3711
        %v3734 = vadd.f32 %v3604, %v3716
        %v3735 = vadd.f32 %v3605, %v3719
        %v3736 = vadd.f32 %v3606, %v3724
        %v3737 = vadd.f32 %v3607, %v3727
        %v3738 = vld [vmem:[%s3608] sm:$0xf]
        %v3739 = vld [vmem:[%s3608 + $0x4] sm:$0x1]
        %v3740 = vld [vmem:[%s3608 + $0x8] sm:$0xf]
        %v3741 = vld [vmem:[%s3608 + $0xc] sm:$0x1]
        %v3742 = vld [vmem:[%s3608 + $0x10] sm:$0xf]
        %v3743 = vld [vmem:[%s3608 + $0x14] sm:$0x1]
        %v3744 = vld [vmem:[%s3608 + $0x18] sm:$0xf]
        %v3745 = vld [vmem:[%s3608 + $0x1c] sm:$0x1]
        %v3746 = vld [vmem:[%s3608 + $0x20] sm:$0xf]
        %v3747 = vld [vmem:[%s3608 + $0x24] sm:$0x1]
        %v3748 = vld [vmem:[%s3608 + $0x28] sm:$0xf]
        %v3749 = vld [vmem:[%s3608 + $0x2c] sm:$0x1]
        %v3750 = vld [vmem:[%s3608 + $0x30] sm:$0xf]
        %v3751 = vld [vmem:[%s3608 + $0x34] sm:$0x1]
        %v3752 = vld [vmem:[%s3608 + $0x38] sm:$0xf]
        %v3753 = vld [vmem:[%s3608 + $0x3c] sm:$0x1]
        %v3755 = vshrl.u32 %v3738, 16
        %v3757 = vrot.slane %v3755, 4
        %v3758 = vshll.u32 %v3738, 16
        %v3760 = vrot.slane %v3758, 5
        %v3761 = vor.u32 %v3757, %v3760
        %v3762 = vrot.slane %v3761, 4
        %v3764 = vshll.u32 %v3739, 16
        %v3766 = vrot.slane %v3764, 5
        %v3767 = vsel %vm823, %v3762, %v3766
        %v3769 = vshrl.u32 %v3740, 16
        %v3771 = vrot.slane %v3769, 4
        %v3772 = vshll.u32 %v3740, 16
        %v3774 = vrot.slane %v3772, 5
        %v3775 = vor.u32 %v3771, %v3774
        %v3776 = vrot.slane %v3775, 4
        %v3778 = vshll.u32 %v3741, 16
        %v3780 = vrot.slane %v3778, 5
        %v3781 = vsel %vm823, %v3776, %v3780
        %v3783 = vshrl.u32 %v3742, 16
        %v3785 = vrot.slane %v3783, 4
        %v3786 = vshll.u32 %v3742, 16
        %v3788 = vrot.slane %v3786, 5
        %v3789 = vor.u32 %v3785, %v3788
        %v3790 = vrot.slane %v3789, 4
        %v3792 = vshll.u32 %v3743, 16
        %v3794 = vrot.slane %v3792, 5
        %v3795 = vsel %vm823, %v3790, %v3794
        %v3797 = vshrl.u32 %v3744, 16
        %v3799 = vrot.slane %v3797, 4
        %v3800 = vshll.u32 %v3744, 16
        %v3802 = vrot.slane %v3800, 5
        %v3803 = vor.u32 %v3799, %v3802
        %v3804 = vrot.slane %v3803, 4
        %v3806 = vshll.u32 %v3745, 16
        %v3808 = vrot.slane %v3806, 5
        %v3809 = vsel %vm823, %v3804, %v3808
        %v3811 = vshrl.u32 %v3746, 16
        %v3813 = vrot.slane %v3811, 4
        %v3814 = vshll.u32 %v3746, 16
        %v3816 = vrot.slane %v3814, 5
        %v3817 = vor.u32 %v3813, %v3816
        %v3818 = vrot.slane %v3817, 4
        %v3820 = vshll.u32 %v3747, 16
        %v3822 = vrot.slane %v3820, 5
        %v3823 = vsel %vm823, %v3818, %v3822
        %v3825 = vshrl.u32 %v3748, 16
        %v3827 = vrot.slane %v3825, 4
        %v3828 = vshll.u32 %v3748, 16
        %v3830 = vrot.slane %v3828, 5
        %v3831 = vor.u32 %v3827, %v3830
        %v3832 = vrot.slane %v3831, 4
        %v3834 = vshll.u32 %v3749, 16
        %v3836 = vrot.slane %v3834, 5
        %v3837 = vsel %vm823, %v3832, %v3836
        %v3839 = vshrl.u32 %v3750, 16
        %v3841 = vrot.slane %v3839, 4
        %v3842 = vshll.u32 %v3750, 16
        %v3844 = vrot.slane %v3842, 5
        %v3845 = vor.u32 %v3841, %v3844
        %v3846 = vrot.slane %v3845, 4
        %v3848 = vshll.u32 %v3751, 16
        %v3850 = vrot.slane %v3848, 5
        %v3851 = vsel %vm823, %v3846, %v3850
        %v3853 = vshrl.u32 %v3752, 16
        %v3855 = vrot.slane %v3853, 4
        %v3856 = vshll.u32 %v3752, 16
        %v3858 = vrot.slane %v3856, 5
        %v3859 = vor.u32 %v3855, %v3858
        %v3860 = vrot.slane %v3859, 4
        %v3862 = vshll.u32 %v3753, 16
        %v3864 = vrot.slane %v3862, 5
        %v3865 = vsel %vm823, %v3860, %v3864
        %v3866 = vld [vmem:[%s4 + $0x100] sm:$0xf]
        %v3867 = vld [vmem:[%s4 + $0x104] sm:$0xf]
        %v3868 = vld [vmem:[%s4 + $0x108] sm:$0xf]
        %v3869 = vld [vmem:[%s4 + $0x10c] sm:$0xf]
        %v3870 = vunpack.c.l.b16 %v3767
        %v3871 = vunpack.c.l.b16 %v3781
        %v3872 = vunpack.c.l.b16 %v3795
        %v3873 = vunpack.c.l.b16 %v3809
        %v3874 = vunpack.c.l.b16 %v3823
        %v3875 = vunpack.c.l.b16 %v3837
        %v3876 = vunpack.c.l.b16 %v3851
        %v3877 = vunpack.c.l.b16 %v3865
        %v3878 = vpack.c.b16 %v3871, %v3870
        %v3879 = vpack.c.b16 %v3873, %v3872
        %v3880 = vpack.c.b16 %v3875, %v3874
        %v3881 = vpack.c.b16 %v3877, %v3876
        %v3886 = vunpack.c.l.b16 %v3866
        %v3887 = vunpack.c.l.b16 %v3867
        %v3888 = vunpack.c.l.b16 %v3868
        %v3889 = vunpack.c.l.b16 %v3869
        %v3890 = vpack.c.b16 %v3887, %v3886
        %v3891 = vpack.c.b16 %v3889, %v3888
        %v3895 = vsel %vm259, %v3878, 0
        %v3898 = vsel %vm259, %v3879, 0
        %v3901 = vsel %vm259, %v3880, 0
        %v3904 = vsel %vm259, %v3881, 0
        %3906 = vmatprep.subr.bf16.mxu0 0
        %3907 = vmatpush1.bf16.msra.mxu0 0
        %3908 = vmatprep.subr.bf16.mxu0 0
        %3909 = vmatpush1.bf16.msra.mxu0 0
        %3910 = vmatprep.subr.bf16.mxu0 0
        %3911 = vmatpush1.bf16.msra.mxu0 0
        %3912 = vmatprep.subr.bf16.mxu0 0
        %3913 = vmatpush1.bf16.msra.mxu0 0
        %3914 = vmatprep.subr.bf16.mxu0 0
        %3915 = vmatpush1.bf16.msra.mxu0 0
        %3916 = vmatprep.subr.bf16.mxu0 0
        %3917 = vmatpush1.bf16.msra.mxu0 0
        %3918 = vmatprep.subr.bf16.mxu0 0
        %3919 = vmatpush1.bf16.msra.mxu0 %v3891
        %3920 = vmatprep.subr.bf16.mxu0 0
        %3921 = vmatpush1.bf16.msra.mxu0 %v3890
        %3922 = vmatprep.subr.bf16.mxu0 0
        %3923 = vmatpush2.bf16.msra.mxu0 0
        %3924 = vmatprep.subr.bf16.mxu0 0
        %3925 = vmatpush2.bf16.msra.mxu0 0
        %3926 = vmatprep.subr.bf16.mxu0 0
        %3927 = vmatpush2.bf16.msra.mxu0 0
        %3928 = vmatprep.subr.bf16.mxu0 0
        %3929 = vmatpush2.bf16.msra.mxu0 0
        %3930 = vmatprep.subr.bf16.mxu0 0
        %3931 = vmatpush2.bf16.msra.mxu0 0
        %3932 = vmatprep.subr.bf16.mxu0 0
        %3933 = vmatpush2.bf16.msra.mxu0 0
        %3934 = vmatprep.subr.bf16.mxu0 0
        %3935 = vmatpush2.bf16.msra.mxu0 0
        %3936 = vmatprep.subr.bf16.mxu0 0
        %3937 = vmatpush2.bf16.msra.mxu0 0
        %3938 = vmatprep.mubr.bf16.mxu0 0
        %3939 = vmatmul.mubr.bf16.gmra.mxu0 %v3895
        %v3940 = vpop.f32.mrf.mxu0
        %v3941 = vadd.f32 0.0, %v3940
        %v3942 = vpop.f32.mrf.mxu0
        %v3943 = vpop.f32.mrf.mxu0
        %v3944 = vadd.f32 0.0, %v3943
        %v3945 = vpop.f32.mrf.mxu0
        %3946 = vmatprep.mubr.bf16.mxu0 0
        %3947 = vmatmul.mubr.bf16.gmra.mxu0 %v3898
        %v3948 = vpop.f32.mrf.mxu0
        %v3949 = vadd.f32 0.0, %v3948
        %v3950 = vpop.f32.mrf.mxu0
        %v3951 = vpop.f32.mrf.mxu0
        %v3952 = vadd.f32 0.0, %v3951
        %v3953 = vpop.f32.mrf.mxu0
        %3954 = vmatprep.mubr.bf16.mxu0 0
        %3955 = vmatmul.mubr.bf16.gmra.mxu0 %v3901
        %v3956 = vpop.f32.mrf.mxu0
        %v3957 = vadd.f32 0.0, %v3956
        %v3958 = vpop.f32.mrf.mxu0
        %v3959 = vpop.f32.mrf.mxu0
        %v3960 = vadd.f32 0.0, %v3959
        %v3961 = vpop.f32.mrf.mxu0
        %3962 = vmatprep.mubr.bf16.mxu0 0
        %3963 = vmatmul.mubr.bf16.gmra.mxu0 %v3904
        %v3964 = vpop.f32.mrf.mxu0
        %v3965 = vadd.f32 0.0, %v3964
        %v3966 = vpop.f32.mrf.mxu0
        %v3967 = vpop.f32.mrf.mxu0
        %v3968 = vadd.f32 0.0, %v3967
        %v3969 = vpop.f32.mrf.mxu0
        %3970 = vdwg.mxu0
        %v3971 = vadd.f32 %v3730, %v3941
        %v3972 = vadd.f32 %v3731, %v3944
        %v3973 = vadd.f32 %v3732, %v3949
        %v3974 = vadd.f32 %v3733, %v3952
        %v3975 = vadd.f32 %v3734, %v3957
        %v3976 = vadd.f32 %v3735, %v3960
        %v3977 = vadd.f32 %v3736, %v3965
        %v3978 = vadd.f32 %v3737, %v3968
        %v3979 = vld [vmem:[%s3608] sm:$0xe]
        %v3980 = vld [vmem:[%s3608 + $0x8] sm:$0xe]
        %v3981 = vld [vmem:[%s3608 + $0x10] sm:$0xe]
        %v3982 = vld [vmem:[%s3608 + $0x18] sm:$0xe]
        %v3983 = vld [vmem:[%s3608 + $0x20] sm:$0xe]
        %v3984 = vld [vmem:[%s3608 + $0x28] sm:$0xe]
        %v3985 = vld [vmem:[%s3608 + $0x30] sm:$0xe]
        %v3986 = vld [vmem:[%s3608 + $0x38] sm:$0xe]
        %v4003 = vrot.slane %v3979, 5
        %v4004 = vrot.slane %v4003, 4
        %v4005 = vrot.slane %v3739, 5
        %v4006 = vsel %vm1075, %v4004, %v4005
        %v4007 = vrot.slane %v3980, 5
        %v4008 = vrot.slane %v4007, 4
        %v4009 = vrot.slane %v3741, 5
        %v4010 = vsel %vm1075, %v4008, %v4009
        %v4011 = vrot.slane %v3981, 5
        %v4012 = vrot.slane %v4011, 4
        %v4013 = vrot.slane %v3743, 5
        %v4014 = vsel %vm1075, %v4012, %v4013
        %v4015 = vrot.slane %v3982, 5
        %v4016 = vrot.slane %v4015, 4
        %v4017 = vrot.slane %v3745, 5
        %v4018 = vsel %vm1075, %v4016, %v4017
        %v4019 = vrot.slane %v3983, 5
        %v4020 = vrot.slane %v4019, 4
        %v4021 = vrot.slane %v3747, 5
        %v4022 = vsel %vm1075, %v4020, %v4021
        %v4023 = vrot.slane %v3984, 5
        %v4024 = vrot.slane %v4023, 4
        %v4025 = vrot.slane %v3749, 5
        %v4026 = vsel %vm1075, %v4024, %v4025
        %v4027 = vrot.slane %v3985, 5
        %v4028 = vrot.slane %v4027, 4
        %v4029 = vrot.slane %v3751, 5
        %v4030 = vsel %vm1075, %v4028, %v4029
        %v4031 = vrot.slane %v3986, 5
        %v4032 = vrot.slane %v4031, 4
        %v4033 = vrot.slane %v3753, 5
        %v4034 = vsel %vm1075, %v4032, %v4033
        %v4035 = vld [vmem:[%s4 + $0x110] sm:$0xf]
        %v4036 = vld [vmem:[%s4 + $0x114] sm:$0xf]
        %v4037 = vld [vmem:[%s4 + $0x118] sm:$0xf]
        %v4038 = vld [vmem:[%s4 + $0x11c] sm:$0xf]
        %v4039 = vunpack.c.l.b16 %v4006
        %v4040 = vunpack.c.l.b16 %v4010
        %v4041 = vunpack.c.l.b16 %v4014
        %v4042 = vunpack.c.l.b16 %v4018
        %v4043 = vunpack.c.l.b16 %v4022
        %v4044 = vunpack.c.l.b16 %v4026
        %v4045 = vunpack.c.l.b16 %v4030
        %v4046 = vunpack.c.l.b16 %v4034
        %v4047 = vpack.c.b16 %v4040, %v4039
        %v4048 = vpack.c.b16 %v4042, %v4041
        %v4049 = vpack.c.b16 %v4044, %v4043
        %v4050 = vpack.c.b16 %v4046, %v4045
        %v4055 = vunpack.c.l.b16 %v4035
        %v4056 = vunpack.c.l.b16 %v4036
        %v4057 = vunpack.c.l.b16 %v4037
        %v4058 = vunpack.c.l.b16 %v4038
        %v4059 = vpack.c.b16 %v4056, %v4055
        %v4060 = vpack.c.b16 %v4058, %v4057
        %v4064 = vsel %vm259, %v4047, 0
        %v4067 = vsel %vm259, %v4048, 0
        %v4070 = vsel %vm259, %v4049, 0
        %v4073 = vsel %vm259, %v4050, 0
        %4075 = vmatprep.subr.bf16.mxu0 0
        %4076 = vmatpush1.bf16.msra.mxu0 0
        %4077 = vmatprep.subr.bf16.mxu0 0
        %4078 = vmatpush1.bf16.msra.mxu0 0
        %4079 = vmatprep.subr.bf16.mxu0 0
        %4080 = vmatpush1.bf16.msra.mxu0 0
        %4081 = vmatprep.subr.bf16.mxu0 0
        %4082 = vmatpush1.bf16.msra.mxu0 0
        %4083 = vmatprep.subr.bf16.mxu0 0
        %4084 = vmatpush1.bf16.msra.mxu0 0
        %4085 = vmatprep.subr.bf16.mxu0 0
        %4086 = vmatpush1.bf16.msra.mxu0 0
        %4087 = vmatprep.subr.bf16.mxu0 0
        %4088 = vmatpush1.bf16.msra.mxu0 %v4060
        %4089 = vmatprep.subr.bf16.mxu0 0
        %4090 = vmatpush1.bf16.msra.mxu0 %v4059
        %4091 = vmatprep.subr.bf16.mxu0 0
        %4092 = vmatpush2.bf16.msra.mxu0 0
        %4093 = vmatprep.subr.bf16.mxu0 0
        %4094 = vmatpush2.bf16.msra.mxu0 0
        %4095 = vmatprep.subr.bf16.mxu0 0
        %4096 = vmatpush2.bf16.msra.mxu0 0
        %4097 = vmatprep.subr.bf16.mxu0 0
        %4098 = vmatpush2.bf16.msra.mxu0 0
        %4099 = vmatprep.subr.bf16.mxu0 0
        %4100 = vmatpush2.bf16.msra.mxu0 0
        %4101 = vmatprep.subr.bf16.mxu0 0
        %4102 = vmatpush2.bf16.msra.mxu0 0
        %4103 = vmatprep.subr.bf16.mxu0 0
        %4104 = vmatpush2.bf16.msra.mxu0 0
        %4105 = vmatprep.subr.bf16.mxu0 0
        %4106 = vmatpush2.bf16.msra.mxu0 0
        %4107 = vmatprep.mubr.bf16.mxu0 0
        %4108 = vmatmul.mubr.bf16.gmra.mxu0 %v4064
        %v4109 = vpop.f32.mrf.mxu0
        %v4110 = vadd.f32 0.0, %v4109
        %v4111 = vpop.f32.mrf.mxu0
        %v4112 = vpop.f32.mrf.mxu0
        %v4113 = vadd.f32 0.0, %v4112
        %v4114 = vpop.f32.mrf.mxu0
        %4115 = vmatprep.mubr.bf16.mxu0 0
        %4116 = vmatmul.mubr.bf16.gmra.mxu0 %v4067
        %v4117 = vpop.f32.mrf.mxu0
        %v4118 = vadd.f32 0.0, %v4117
        %v4119 = vpop.f32.mrf.mxu0
        %v4120 = vpop.f32.mrf.mxu0
        %v4121 = vadd.f32 0.0, %v4120
        %v4122 = vpop.f32.mrf.mxu0
        %4123 = vmatprep.mubr.bf16.mxu0 0
        %4124 = vmatmul.mubr.bf16.gmra.mxu0 %v4070
        %v4125 = vpop.f32.mrf.mxu0
        %v4126 = vadd.f32 0.0, %v4125
        %v4127 = vpop.f32.mrf.mxu0
        %v4128 = vpop.f32.mrf.mxu0
        %v4129 = vadd.f32 0.0, %v4128
        %v4130 = vpop.f32.mrf.mxu0
        %4131 = vmatprep.mubr.bf16.mxu0 0
        %4132 = vmatmul.mubr.bf16.gmra.mxu0 %v4073
        %v4133 = vpop.f32.mrf.mxu0
        %v4134 = vadd.f32 0.0, %v4133
        %v4135 = vpop.f32.mrf.mxu0
        %v4136 = vpop.f32.mrf.mxu0
        %v4137 = vadd.f32 0.0, %v4136
        %v4138 = vpop.f32.mrf.mxu0
        %4139 = vdwg.mxu0
        %v4140 = vadd.f32 %v3971, %v4110
        %v4141 = vadd.f32 %v3972, %v4113
        %v4142 = vadd.f32 %v3973, %v4118
        %v4143 = vadd.f32 %v3974, %v4121
        %v4144 = vadd.f32 %v3975, %v4126
        %v4145 = vadd.f32 %v3976, %v4129
        %v4146 = vadd.f32 %v3977, %v4134
        %v4147 = vadd.f32 %v3978, %v4137
        %v4148 = vld [vmem:[%s3608 + $0x4] sm:$0x3]
        %v4149 = vld [vmem:[%s3608 + $0xc] sm:$0x3]
        %v4150 = vld [vmem:[%s3608 + $0x14] sm:$0x3]
        %v4151 = vld [vmem:[%s3608 + $0x1c] sm:$0x3]
        %v4152 = vld [vmem:[%s3608 + $0x24] sm:$0x3]
        %v4153 = vld [vmem:[%s3608 + $0x2c] sm:$0x3]
        %v4154 = vld [vmem:[%s3608 + $0x34] sm:$0x3]
        %v4155 = vld [vmem:[%s3608 + $0x3c] sm:$0x3]
        %v4157 = vshrl.u32 %v3979, 16
        %v4159 = vrot.slane %v4157, 5
        %v4160 = vshll.u32 %v3979, 16
        %v4162 = vrot.slane %v4160, 6
        %v4163 = vor.u32 %v4159, %v4162
        %v4164 = vrot.slane %v4163, 4
        %v4166 = vshrl.u32 %v4148, 16
        %v4168 = vrot.slane %v4166, 5
        %v4169 = vshll.u32 %v4148, 16
        %v4171 = vrot.slane %v4169, 6
        %v4172 = vor.u32 %v4168, %v4171
        %v4173 = vsel %vm1231, %v4164, %v4172
        %v4175 = vshrl.u32 %v3980, 16
        %v4177 = vrot.slane %v4175, 5
        %v4178 = vshll.u32 %v3980, 16
        %v4180 = vrot.slane %v4178, 6
        %v4181 = vor.u32 %v4177, %v4180
        %v4182 = vrot.slane %v4181, 4
        %v4184 = vshrl.u32 %v4149, 16
        %v4186 = vrot.slane %v4184, 5
        %v4187 = vshll.u32 %v4149, 16
        %v4189 = vrot.slane %v4187, 6
        %v4190 = vor.u32 %v4186, %v4189
        %v4191 = vsel %vm1231, %v4182, %v4190
        %v4193 = vshrl.u32 %v3981, 16
        %v4195 = vrot.slane %v4193, 5
        %v4196 = vshll.u32 %v3981, 16
        %v4198 = vrot.slane %v4196, 6
        %v4199 = vor.u32 %v4195, %v4198
        %v4200 = vrot.slane %v4199, 4
        %v4202 = vshrl.u32 %v4150, 16
        %v4204 = vrot.slane %v4202, 5
        %v4205 = vshll.u32 %v4150, 16
        %v4207 = vrot.slane %v4205, 6
        %v4208 = vor.u32 %v4204, %v4207
        %v4209 = vsel %vm1231, %v4200, %v4208
        %v4211 = vshrl.u32 %v3982, 16
        %v4213 = vrot.slane %v4211, 5
        %v4214 = vshll.u32 %v3982, 16
        %v4216 = vrot.slane %v4214, 6
        %v4217 = vor.u32 %v4213, %v4216
        %v4218 = vrot.slane %v4217, 4
        %v4220 = vshrl.u32 %v4151, 16
        %v4222 = vrot.slane %v4220, 5
        %v4223 = vshll.u32 %v4151, 16
        %v4225 = vrot.slane %v4223, 6
        %v4226 = vor.u32 %v4222, %v4225
        %v4227 = vsel %vm1231, %v4218, %v4226
        %v4229 = vshrl.u32 %v3983, 16
        %v4231 = vrot.slane %v4229, 5
        %v4232 = vshll.u32 %v3983, 16
        %v4234 = vrot.slane %v4232, 6
        %v4235 = vor.u32 %v4231, %v4234
        %v4236 = vrot.slane %v4235, 4
        %v4238 = vshrl.u32 %v4152, 16
        %v4240 = vrot.slane %v4238, 5
        %v4241 = vshll.u32 %v4152, 16
        %v4243 = vrot.slane %v4241, 6
        %v4244 = vor.u32 %v4240, %v4243
        %v4245 = vsel %vm1231, %v4236, %v4244
        %v4247 = vshrl.u32 %v3984, 16
        %v4249 = vrot.slane %v4247, 5
        %v4250 = vshll.u32 %v3984, 16
        %v4252 = vrot.slane %v4250, 6
        %v4253 = vor.u32 %v4249, %v4252
        %v4254 = vrot.slane %v4253, 4
        %v4256 = vshrl.u32 %v4153, 16
        %v4258 = vrot.slane %v4256, 5
        %v4259 = vshll.u32 %v4153, 16
        %v4261 = vrot.slane %v4259, 6
        %v4262 = vor.u32 %v4258, %v4261
        %v4263 = vsel %vm1231, %v4254, %v4262
        %v4265 = vshrl.u32 %v3985, 16
        %v4267 = vrot.slane %v4265, 5
        %v4268 = vshll.u32 %v3985, 16
        %v4270 = vrot.slane %v4268, 6
        %v4271 = vor.u32 %v4267, %v4270
        %v4272 = vrot.slane %v4271, 4
        %v4274 = vshrl.u32 %v4154, 16
        %v4276 = vrot.slane %v4274, 5
        %v4277 = vshll.u32 %v4154, 16
        %v4279 = vrot.slane %v4277, 6
        %v4280 = vor.u32 %v4276, %v4279
        %v4281 = vsel %vm1231, %v4272, %v4280
        %v4283 = vshrl.u32 %v3986, 16
        %v4285 = vrot.slane %v4283, 5
        %v4286 = vshll.u32 %v3986, 16
        %v4288 = vrot.slane %v4286, 6
        %v4289 = vor.u32 %v4285, %v4288
        %v4290 = vrot.slane %v4289, 4
        %v4292 = vshrl.u32 %v4155, 16
        %v4294 = vrot.slane %v4292, 5
        %v4295 = vshll.u32 %v4155, 16
        %v4297 = vrot.slane %v4295, 6
        %v4298 = vor.u32 %v4294, %v4297
        %v4299 = vsel %vm1231, %v4290, %v4298
        %v4300 = vld [vmem:[%s4 + $0x120] sm:$0xf]
        %v4301 = vld [vmem:[%s4 + $0x124] sm:$0xf]
        %v4302 = vld [vmem:[%s4 + $0x128] sm:$0xf]
        %v4303 = vld [vmem:[%s4 + $0x12c] sm:$0xf]
        %v4304 = vunpack.c.l.b16 %v4173
        %v4305 = vunpack.c.l.b16 %v4191
        %v4306 = vunpack.c.l.b16 %v4209
        %v4307 = vunpack.c.l.b16 %v4227
        %v4308 = vunpack.c.l.b16 %v4245
        %v4309 = vunpack.c.l.b16 %v4263
        %v4310 = vunpack.c.l.b16 %v4281
        %v4311 = vunpack.c.l.b16 %v4299
        %v4312 = vpack.c.b16 %v4305, %v4304
        %v4313 = vpack.c.b16 %v4307, %v4306
        %v4314 = vpack.c.b16 %v4309, %v4308
        %v4315 = vpack.c.b16 %v4311, %v4310
        %v4320 = vunpack.c.l.b16 %v4300
        %v4321 = vunpack.c.l.b16 %v4301
        %v4322 = vunpack.c.l.b16 %v4302
        %v4323 = vunpack.c.l.b16 %v4303
        %v4324 = vpack.c.b16 %v4321, %v4320
        %v4325 = vpack.c.b16 %v4323, %v4322
        %v4329 = vsel %vm259, %v4312, 0
        %v4332 = vsel %vm259, %v4313, 0
        %v4335 = vsel %vm259, %v4314, 0
        %v4338 = vsel %vm259, %v4315, 0
        %4340 = vmatprep.subr.bf16.mxu0 0
        %4341 = vmatpush1.bf16.msra.mxu0 0
        %4342 = vmatprep.subr.bf16.mxu0 0
        %4343 = vmatpush1.bf16.msra.mxu0 0
        %4344 = vmatprep.subr.bf16.mxu0 0
        %4345 = vmatpush1.bf16.msra.mxu0 0
        %4346 = vmatprep.subr.bf16.mxu0 0
        %4347 = vmatpush1.bf16.msra.mxu0 0
        %4348 = vmatprep.subr.bf16.mxu0 0
        %4349 = vmatpush1.bf16.msra.mxu0 0
        %4350 = vmatprep.subr.bf16.mxu0 0
        %4351 = vmatpush1.bf16.msra.mxu0 0
        %4352 = vmatprep.subr.bf16.mxu0 0
        %4353 = vmatpush1.bf16.msra.mxu0 %v4325
        %4354 = vmatprep.subr.bf16.mxu0 0
        %4355 = vmatpush1.bf16.msra.mxu0 %v4324
        %4356 = vmatprep.subr.bf16.mxu0 0
        %4357 = vmatpush2.bf16.msra.mxu0 0
        %4358 = vmatprep.subr.bf16.mxu0 0
        %4359 = vmatpush2.bf16.msra.mxu0 0
        %4360 = vmatprep.subr.bf16.mxu0 0
        %4361 = vmatpush2.bf16.msra.mxu0 0
        %4362 = vmatprep.subr.bf16.mxu0 0
        %4363 = vmatpush2.bf16.msra.mxu0 0
        %4364 = vmatprep.subr.bf16.mxu0 0
        %4365 = vmatpush2.bf16.msra.mxu0 0
        %4366 = vmatprep.subr.bf16.mxu0 0
        %4367 = vmatpush2.bf16.msra.mxu0 0
        %4368 = vmatprep.subr.bf16.mxu0 0
        %4369 = vmatpush2.bf16.msra.mxu0 0
        %4370 = vmatprep.subr.bf16.mxu0 0
        %4371 = vmatpush2.bf16.msra.mxu0 0
        %4372 = vmatprep.mubr.bf16.mxu0 0
        %4373 = vmatmul.mubr.bf16.gmra.mxu0 %v4329
        %v4374 = vpop.f32.mrf.mxu0
        %v4375 = vadd.f32 0.0, %v4374
        %v4376 = vpop.f32.mrf.mxu0
        %v4377 = vpop.f32.mrf.mxu0
        %v4378 = vadd.f32 0.0, %v4377
        %v4379 = vpop.f32.mrf.mxu0
        %4380 = vmatprep.mubr.bf16.mxu0 0
        %4381 = vmatmul.mubr.bf16.gmra.mxu0 %v4332
        %v4382 = vpop.f32.mrf.mxu0
        %v4383 = vadd.f32 0.0, %v4382
        %v4384 = vpop.f32.mrf.mxu0
        %v4385 = vpop.f32.mrf.mxu0
        %v4386 = vadd.f32 0.0, %v4385
        %v4387 = vpop.f32.mrf.mxu0
        %4388 = vmatprep.mubr.bf16.mxu0 0
        %4389 = vmatmul.mubr.bf16.gmra.mxu0 %v4335
        %v4390 = vpop.f32.mrf.mxu0
        %v4391 = vadd.f32 0.0, %v4390
        %v4392 = vpop.f32.mrf.mxu0
        %v4393 = vpop.f32.mrf.mxu0
        %v4394 = vadd.f32 0.0, %v4393
        %v4395 = vpop.f32.mrf.mxu0
        %4396 = vmatprep.mubr.bf16.mxu0 0
        %4397 = vmatmul.mubr.bf16.gmra.mxu0 %v4338
        %v4398 = vpop.f32.mrf.mxu0
        %v4399 = vadd.f32 0.0, %v4398
        %v4400 = vpop.f32.mrf.mxu0
        %v4401 = vpop.f32.mrf.mxu0
        %v4402 = vadd.f32 0.0, %v4401
        %v4403 = vpop.f32.mrf.mxu0
        %4404 = vdwg.mxu0
        %v4405 = vadd.f32 %v4140, %v4375
        %v4406 = vadd.f32 %v4141, %v4378
        %v4407 = vadd.f32 %v4142, %v4383
        %v4408 = vadd.f32 %v4143, %v4386
        %v4409 = vadd.f32 %v4144, %v4391
        %v4410 = vadd.f32 %v4145, %v4394
        %v4411 = vadd.f32 %v4146, %v4399
        %v4412 = vadd.f32 %v4147, %v4402
        %v4413 = vld [vmem:[%s3608] sm:$0xc]
        %v4414 = vld [vmem:[%s3608 + $0x8] sm:$0xc]
        %v4415 = vld [vmem:[%s3608 + $0x10] sm:$0xc]
        %v4416 = vld [vmem:[%s3608 + $0x18] sm:$0xc]
        %v4417 = vld [vmem:[%s3608 + $0x20] sm:$0xc]
        %v4418 = vld [vmem:[%s3608 + $0x28] sm:$0xc]
        %v4419 = vld [vmem:[%s3608 + $0x30] sm:$0xc]
        %v4420 = vld [vmem:[%s3608 + $0x38] sm:$0xc]
        %v4437 = vrot.slane %v4413, 6
        %v4438 = vrot.slane %v4437, 4
        %v4439 = vrot.slane %v4148, 6
        %v4440 = vsel %vm1515, %v4438, %v4439
        %v4441 = vrot.slane %v4414, 6
        %v4442 = vrot.slane %v4441, 4
        %v4443 = vrot.slane %v4149, 6
        %v4444 = vsel %vm1515, %v4442, %v4443
        %v4445 = vrot.slane %v4415, 6
        %v4446 = vrot.slane %v4445, 4
        %v4447 = vrot.slane %v4150, 6
        %v4448 = vsel %vm1515, %v4446, %v4447
        %v4449 = vrot.slane %v4416, 6
        %v4450 = vrot.slane %v4449, 4
        %v4451 = vrot.slane %v4151, 6
        %v4452 = vsel %vm1515, %v4450, %v4451
        %v4453 = vrot.slane %v4417, 6
        %v4454 = vrot.slane %v4453, 4
        %v4455 = vrot.slane %v4152, 6
        %v4456 = vsel %vm1515, %v4454, %v4455
        %v4457 = vrot.slane %v4418, 6
        %v4458 = vrot.slane %v4457, 4
        %v4459 = vrot.slane %v4153, 6
        %v4460 = vsel %vm1515, %v4458, %v4459
        %v4461 = vrot.slane %v4419, 6
        %v4462 = vrot.slane %v4461, 4
        %v4463 = vrot.slane %v4154, 6
        %v4464 = vsel %vm1515, %v4462, %v4463
        %v4465 = vrot.slane %v4420, 6
        %v4466 = vrot.slane %v4465, 4
        %v4467 = vrot.slane %v4155, 6
        %v4468 = vsel %vm1515, %v4466, %v4467
        %v4469 = vld [vmem:[%s4 + $0x130] sm:$0xf]
        %v4470 = vld [vmem:[%s4 + $0x134] sm:$0xf]
        %v4471 = vld [vmem:[%s4 + $0x138] sm:$0xf]
        %v4472 = vld [vmem:[%s4 + $0x13c] sm:$0xf]
        %v4473 = vunpack.c.l.b16 %v4440
        %v4474 = vunpack.c.l.b16 %v4444
        %v4475 = vunpack.c.l.b16 %v4448
        %v4476 = vunpack.c.l.b16 %v4452
        %v4477 = vunpack.c.l.b16 %v4456
        %v4478 = vunpack.c.l.b16 %v4460
        %v4479 = vunpack.c.l.b16 %v4464
        %v4480 = vunpack.c.l.b16 %v4468
        %v4481 = vpack.c.b16 %v4474, %v4473
        %v4482 = vpack.c.b16 %v4476, %v4475
        %v4483 = vpack.c.b16 %v4478, %v4477
        %v4484 = vpack.c.b16 %v4480, %v4479
        %v4489 = vunpack.c.l.b16 %v4469
        %v4490 = vunpack.c.l.b16 %v4470
        %v4491 = vunpack.c.l.b16 %v4471
        %v4492 = vunpack.c.l.b16 %v4472
        %v4493 = vpack.c.b16 %v4490, %v4489
        %v4494 = vpack.c.b16 %v4492, %v4491
        %v4498 = vsel %vm259, %v4481, 0
        %v4501 = vsel %vm259, %v4482, 0
        %v4504 = vsel %vm259, %v4483, 0
        %v4507 = vsel %vm259, %v4484, 0
        %4509 = vmatprep.subr.bf16.mxu0 0
        %4510 = vmatpush1.bf16.msra.mxu0 0
        %4511 = vmatprep.subr.bf16.mxu0 0
        %4512 = vmatpush1.bf16.msra.mxu0 0
        %4513 = vmatprep.subr.bf16.mxu0 0
        %4514 = vmatpush1.bf16.msra.mxu0 0
        %4515 = vmatprep.subr.bf16.mxu0 0
        %4516 = vmatpush1.bf16.msra.mxu0 0
        %4517 = vmatprep.subr.bf16.mxu0 0
        %4518 = vmatpush1.bf16.msra.mxu0 0
        %4519 = vmatprep.subr.bf16.mxu0 0
        %4520 = vmatpush1.bf16.msra.mxu0 0
        %4521 = vmatprep.subr.bf16.mxu0 0
        %4522 = vmatpush1.bf16.msra.mxu0 %v4494
        %4523 = vmatprep.subr.bf16.mxu0 0
        %4524 = vmatpush1.bf16.msra.mxu0 %v4493
        %4525 = vmatprep.subr.bf16.mxu0 0
        %4526 = vmatpush2.bf16.msra.mxu0 0
        %4527 = vmatprep.subr.bf16.mxu0 0
        %4528 = vmatpush2.bf16.msra.mxu0 0
        %4529 = vmatprep.subr.bf16.mxu0 0
        %4530 = vmatpush2.bf16.msra.mxu0 0
        %4531 = vmatprep.subr.bf16.mxu0 0
        %4532 = vmatpush2.bf16.msra.mxu0 0
        %4533 = vmatprep.subr.bf16.mxu0 0
        %4534 = vmatpush2.bf16.msra.mxu0 0
        %4535 = vmatprep.subr.bf16.mxu0 0
        %4536 = vmatpush2.bf16.msra.mxu0 0
        %4537 = vmatprep.subr.bf16.mxu0 0
        %4538 = vmatpush2.bf16.msra.mxu0 0
        %4539 = vmatprep.subr.bf16.mxu0 0
        %4540 = vmatpush2.bf16.msra.mxu0 0
        %4541 = vmatprep.mubr.bf16.mxu0 0
        %4542 = vmatmul.mubr.bf16.gmra.mxu0 %v4498
        %v4543 = vpop.f32.mrf.mxu0
        %v4544 = vadd.f32 0.0, %v4543
        %v4545 = vpop.f32.mrf.mxu0
        %v4546 = vpop.f32.mrf.mxu0
        %v4547 = vadd.f32 0.0, %v4546
        %v4548 = vpop.f32.mrf.mxu0
        %4549 = vmatprep.mubr.bf16.mxu0 0
        %4550 = vmatmul.mubr.bf16.gmra.mxu0 %v4501
        %v4551 = vpop.f32.mrf.mxu0
        %v4552 = vadd.f32 0.0, %v4551
        %v4553 = vpop.f32.mrf.mxu0
        %v4554 = vpop.f32.mrf.mxu0
        %v4555 = vadd.f32 0.0, %v4554
        %v4556 = vpop.f32.mrf.mxu0
        %4557 = vmatprep.mubr.bf16.mxu0 0
        %4558 = vmatmul.mubr.bf16.gmra.mxu0 %v4504
        %v4559 = vpop.f32.mrf.mxu0
        %v4560 = vadd.f32 0.0, %v4559
        %v4561 = vpop.f32.mrf.mxu0
        %v4562 = vpop.f32.mrf.mxu0
        %v4563 = vadd.f32 0.0, %v4562
        %v4564 = vpop.f32.mrf.mxu0
        %4565 = vmatprep.mubr.bf16.mxu0 0
        %4566 = vmatmul.mubr.bf16.gmra.mxu0 %v4507
        %v4567 = vpop.f32.mrf.mxu0
        %v4568 = vadd.f32 0.0, %v4567
        %v4569 = vpop.f32.mrf.mxu0
        %v4570 = vpop.f32.mrf.mxu0
        %v4571 = vadd.f32 0.0, %v4570
        %v4572 = vpop.f32.mrf.mxu0
        %4573 = vdwg.mxu0
        %v4574 = vadd.f32 %v4405, %v4544
        %v4575 = vadd.f32 %v4406, %v4547
        %v4576 = vadd.f32 %v4407, %v4552
        %v4577 = vadd.f32 %v4408, %v4555
        %v4578 = vadd.f32 %v4409, %v4560
        %v4579 = vadd.f32 %v4410, %v4563
        %v4580 = vadd.f32 %v4411, %v4568
        %v4581 = vadd.f32 %v4412, %v4571
        %s4582 = scalar_lea.vmem [#allocation2], 32
        %v4583 = vld [vmem:[%s4582] sm:$0xf]
        %v4584 = vld [vmem:[%s4582 + $0x8] sm:$0xf]
        %v4585 = vld [vmem:[%s4582 + $0x10] sm:$0xf]
        %v4586 = vld [vmem:[%s4582 + $0x18] sm:$0xf]
        %v4587 = vld [vmem:[%s4582 + $0x20] sm:$0xf]
        %v4588 = vld [vmem:[%s4582 + $0x28] sm:$0xf]
        %v4589 = vld [vmem:[%s4582 + $0x30] sm:$0xf]
        %v4590 = vld [vmem:[%s4582 + $0x38] sm:$0xf]
        %v4591 = vld [vmem:[%s4 + $0x140] sm:$0xf]
        %v4592 = vld [vmem:[%s4 + $0x144] sm:$0xf]
        %v4593 = vld [vmem:[%s4 + $0x148] sm:$0xf]
        %v4594 = vld [vmem:[%s4 + $0x14c] sm:$0xf]
        %v4603 = vunpack.c.l.b16 %v4583
        %v4604 = vunpack.c.l.b16 %v4584
        %v4605 = vunpack.c.l.b16 %v4585
        %v4606 = vunpack.c.l.b16 %v4586
        %v4607 = vunpack.c.l.b16 %v4587
        %v4608 = vunpack.c.l.b16 %v4588
        %v4609 = vunpack.c.l.b16 %v4589
        %v4610 = vunpack.c.l.b16 %v4590
        %v4611 = vpack.c.b16 %v4604, %v4603
        %v4612 = vpack.c.b16 %v4606, %v4605
        %v4613 = vpack.c.b16 %v4608, %v4607
        %v4614 = vpack.c.b16 %v4610, %v4609
        %v4619 = vunpack.c.l.b16 %v4591
        %v4620 = vunpack.c.l.b16 %v4592
        %v4621 = vunpack.c.l.b16 %v4593
        %v4622 = vunpack.c.l.b16 %v4594
        %v4623 = vpack.c.b16 %v4620, %v4619
        %v4624 = vpack.c.b16 %v4622, %v4621
        %v4628 = vsel %vm259, %v4611, 0
        %v4631 = vsel %vm259, %v4612, 0
        %v4634 = vsel %vm259, %v4613, 0
        %v4637 = vsel %vm259, %v4614, 0
        %4639 = vmatprep.subr.bf16.mxu0 0
        %4640 = vmatpush1.bf16.msra.mxu0 0
        %4641 = vmatprep.subr.bf16.mxu0 0
        %4642 = vmatpush1.bf16.msra.mxu0 0
        %4643 = vmatprep.subr.bf16.mxu0 0
        %4644 = vmatpush1.bf16.msra.mxu0 0
        %4645 = vmatprep.subr.bf16.mxu0 0
        %4646 = vmatpush1.bf16.msra.mxu0 0
        %4647 = vmatprep.subr.bf16.mxu0 0
        %4648 = vmatpush1.bf16.msra.mxu0 0
        %4649 = vmatprep.subr.bf16.mxu0 0
        %4650 = vmatpush1.bf16.msra.mxu0 0
        %4651 = vmatprep.subr.bf16.mxu0 0
        %4652 = vmatpush1.bf16.msra.mxu0 %v4624
        %4653 = vmatprep.subr.bf16.mxu0 0
        %4654 = vmatpush1.bf16.msra.mxu0 %v4623
        %4655 = vmatprep.subr.bf16.mxu0 0
        %4656 = vmatpush2.bf16.msra.mxu0 0
        %4657 = vmatprep.subr.bf16.mxu0 0
        %4658 = vmatpush2.bf16.msra.mxu0 0
        %4659 = vmatprep.subr.bf16.mxu0 0
        %4660 = vmatpush2.bf16.msra.mxu0 0
        %4661 = vmatprep.subr.bf16.mxu0 0
        %4662 = vmatpush2.bf16.msra.mxu0 0
        %4663 = vmatprep.subr.bf16.mxu0 0
        %4664 = vmatpush2.bf16.msra.mxu0 0
        %4665 = vmatprep.subr.bf16.mxu0 0
        %4666 = vmatpush2.bf16.msra.mxu0 0
        %4667 = vmatprep.subr.bf16.mxu0 0
        %4668 = vmatpush2.bf16.msra.mxu0 0
        %4669 = vmatprep.subr.bf16.mxu0 0
        %4670 = vmatpush2.bf16.msra.mxu0 0
        %4671 = vmatprep.mubr.bf16.mxu0 0
        %4672 = vmatmul.mubr.bf16.gmra.mxu0 %v4628
        %v4673 = vpop.f32.mrf.mxu0
        %v4674 = vadd.f32 0.0, %v4673
        %v4675 = vpop.f32.mrf.mxu0
        %v4676 = vpop.f32.mrf.mxu0
        %v4677 = vadd.f32 0.0, %v4676
        %v4678 = vpop.f32.mrf.mxu0
        %4679 = vmatprep.mubr.bf16.mxu0 0
        %4680 = vmatmul.mubr.bf16.gmra.mxu0 %v4631
        %v4681 = vpop.f32.mrf.mxu0
        %v4682 = vadd.f32 0.0, %v4681
        %v4683 = vpop.f32.mrf.mxu0
        %v4684 = vpop.f32.mrf.mxu0
        %v4685 = vadd.f32 0.0, %v4684
        %v4686 = vpop.f32.mrf.mxu0
        %4687 = vmatprep.mubr.bf16.mxu0 0
        %4688 = vmatmul.mubr.bf16.gmra.mxu0 %v4634
        %v4689 = vpop.f32.mrf.mxu0
        %v4690 = vadd.f32 0.0, %v4689
        %v4691 = vpop.f32.mrf.mxu0
        %v4692 = vpop.f32.mrf.mxu0
        %v4693 = vadd.f32 0.0, %v4692
        %v4694 = vpop.f32.mrf.mxu0
        %4695 = vmatprep.mubr.bf16.mxu0 0
        %4696 = vmatmul.mubr.bf16.gmra.mxu0 %v4637
        %v4697 = vpop.f32.mrf.mxu0
        %v4698 = vadd.f32 0.0, %v4697
        %v4699 = vpop.f32.mrf.mxu0
        %v4700 = vpop.f32.mrf.mxu0
        %v4701 = vadd.f32 0.0, %v4700
        %v4702 = vpop.f32.mrf.mxu0
        %4703 = vdwg.mxu0
        %v4704 = vadd.f32 %v4574, %v4674
        %v4705 = vadd.f32 %v4575, %v4677
        %v4706 = vadd.f32 %v4576, %v4682
        %v4707 = vadd.f32 %v4577, %v4685
        %v4708 = vadd.f32 %v4578, %v4690
        %v4709 = vadd.f32 %v4579, %v4693
        %v4710 = vadd.f32 %v4580, %v4698
        %v4711 = vadd.f32 %v4581, %v4701
        %v4712 = vld [vmem:[%s4582] sm:$0xf]
        %v4713 = vld [vmem:[%s4582 + $0x4] sm:$0x1]
        %v4714 = vld [vmem:[%s4582 + $0x8] sm:$0xf]
        %v4715 = vld [vmem:[%s4582 + $0xc] sm:$0x1]
        %v4716 = vld [vmem:[%s4582 + $0x10] sm:$0xf]
        %v4717 = vld [vmem:[%s4582 + $0x14] sm:$0x1]
        %v4718 = vld [vmem:[%s4582 + $0x18] sm:$0xf]
        %v4719 = vld [vmem:[%s4582 + $0x1c] sm:$0x1]
        %v4720 = vld [vmem:[%s4582 + $0x20] sm:$0xf]
        %v4721 = vld [vmem:[%s4582 + $0x24] sm:$0x1]
        %v4722 = vld [vmem:[%s4582 + $0x28] sm:$0xf]
        %v4723 = vld [vmem:[%s4582 + $0x2c] sm:$0x1]
        %v4724 = vld [vmem:[%s4582 + $0x30] sm:$0xf]
        %v4725 = vld [vmem:[%s4582 + $0x34] sm:$0x1]
        %v4726 = vld [vmem:[%s4582 + $0x38] sm:$0xf]
        %v4727 = vld [vmem:[%s4582 + $0x3c] sm:$0x1]
        %v4729 = vshrl.u32 %v4712, 16
        %v4731 = vrot.slane %v4729, 4
        %v4732 = vshll.u32 %v4712, 16
        %v4734 = vrot.slane %v4732, 5
        %v4735 = vor.u32 %v4731, %v4734
        %v4736 = vrot.slane %v4735, 4
        %v4738 = vshll.u32 %v4713, 16
        %v4740 = vrot.slane %v4738, 5
        %v4741 = vsel %vm823, %v4736, %v4740
        %v4743 = vshrl.u32 %v4714, 16
        %v4745 = vrot.slane %v4743, 4
        %v4746 = vshll.u32 %v4714, 16
        %v4748 = vrot.slane %v4746, 5
        %v4749 = vor.u32 %v4745, %v4748
        %v4750 = vrot.slane %v4749, 4
        %v4752 = vshll.u32 %v4715, 16
        %v4754 = vrot.slane %v4752, 5
        %v4755 = vsel %vm823, %v4750, %v4754
        %v4757 = vshrl.u32 %v4716, 16
        %v4759 = vrot.slane %v4757, 4
        %v4760 = vshll.u32 %v4716, 16
        %v4762 = vrot.slane %v4760, 5
        %v4763 = vor.u32 %v4759, %v4762
        %v4764 = vrot.slane %v4763, 4
        %v4766 = vshll.u32 %v4717, 16
        %v4768 = vrot.slane %v4766, 5
        %v4769 = vsel %vm823, %v4764, %v4768
        %v4771 = vshrl.u32 %v4718, 16
        %v4773 = vrot.slane %v4771, 4
        %v4774 = vshll.u32 %v4718, 16
        %v4776 = vrot.slane %v4774, 5
        %v4777 = vor.u32 %v4773, %v4776
        %v4778 = vrot.slane %v4777, 4
        %v4780 = vshll.u32 %v4719, 16
        %v4782 = vrot.slane %v4780, 5
        %v4783 = vsel %vm823, %v4778, %v4782
        %v4785 = vshrl.u32 %v4720, 16
        %v4787 = vrot.slane %v4785, 4
        %v4788 = vshll.u32 %v4720, 16
        %v4790 = vrot.slane %v4788, 5
        %v4791 = vor.u32 %v4787, %v4790
        %v4792 = vrot.slane %v4791, 4
        %v4794 = vshll.u32 %v4721, 16
        %v4796 = vrot.slane %v4794, 5
        %v4797 = vsel %vm823, %v4792, %v4796
        %v4799 = vshrl.u32 %v4722, 16
        %v4801 = vrot.slane %v4799, 4
        %v4802 = vshll.u32 %v4722, 16
        %v4804 = vrot.slane %v4802, 5
        %v4805 = vor.u32 %v4801, %v4804
        %v4806 = vrot.slane %v4805, 4
        %v4808 = vshll.u32 %v4723, 16
        %v4810 = vrot.slane %v4808, 5
        %v4811 = vsel %vm823, %v4806, %v4810
        %v4813 = vshrl.u32 %v4724, 16
        %v4815 = vrot.slane %v4813, 4
        %v4816 = vshll.u32 %v4724, 16
        %v4818 = vrot.slane %v4816, 5
        %v4819 = vor.u32 %v4815, %v4818
        %v4820 = vrot.slane %v4819, 4
        %v4822 = vshll.u32 %v4725, 16
        %v4824 = vrot.slane %v4822, 5
        %v4825 = vsel %vm823, %v4820, %v4824
        %v4827 = vshrl.u32 %v4726, 16
        %v4829 = vrot.slane %v4827, 4
        %v4830 = vshll.u32 %v4726, 16
        %v4832 = vrot.slane %v4830, 5
        %v4833 = vor.u32 %v4829, %v4832
        %v4834 = vrot.slane %v4833, 4
        %v4836 = vshll.u32 %v4727, 16
        %v4838 = vrot.slane %v4836, 5
        %v4839 = vsel %vm823, %v4834, %v4838
        %v4840 = vld [vmem:[%s4 + $0x150] sm:$0xf]
        %v4841 = vld [vmem:[%s4 + $0x154] sm:$0xf]
        %v4842 = vld [vmem:[%s4 + $0x158] sm:$0xf]
        %v4843 = vld [vmem:[%s4 + $0x15c] sm:$0xf]
        %v4844 = vunpack.c.l.b16 %v4741
        %v4845 = vunpack.c.l.b16 %v4755
        %v4846 = vunpack.c.l.b16 %v4769
        %v4847 = vunpack.c.l.b16 %v4783
        %v4848 = vunpack.c.l.b16 %v4797
        %v4849 = vunpack.c.l.b16 %v4811
        %v4850 = vunpack.c.l.b16 %v4825
        %v4851 = vunpack.c.l.b16 %v4839
        %v4852 = vpack.c.b16 %v4845, %v4844
        %v4853 = vpack.c.b16 %v4847, %v4846
        %v4854 = vpack.c.b16 %v4849, %v4848
        %v4855 = vpack.c.b16 %v4851, %v4850
        %v4860 = vunpack.c.l.b16 %v4840
        %v4861 = vunpack.c.l.b16 %v4841
        %v4862 = vunpack.c.l.b16 %v4842
        %v4863 = vunpack.c.l.b16 %v4843
        %v4864 = vpack.c.b16 %v4861, %v4860
        %v4865 = vpack.c.b16 %v4863, %v4862
        %v4869 = vsel %vm259, %v4852, 0
        %v4872 = vsel %vm259, %v4853, 0
        %v4875 = vsel %vm259, %v4854, 0
        %v4878 = vsel %vm259, %v4855, 0
        %4880 = vmatprep.subr.bf16.mxu0 0
        %4881 = vmatpush1.bf16.msra.mxu0 0
        %4882 = vmatprep.subr.bf16.mxu0 0
        %4883 = vmatpush1.bf16.msra.mxu0 0
        %4884 = vmatprep.subr.bf16.mxu0 0
        %4885 = vmatpush1.bf16.msra.mxu0 0
        %4886 = vmatprep.subr.bf16.mxu0 0
        %4887 = vmatpush1.bf16.msra.mxu0 0
        %4888 = vmatprep.subr.bf16.mxu0 0
        %4889 = vmatpush1.bf16.msra.mxu0 0
        %4890 = vmatprep.subr.bf16.mxu0 0
        %4891 = vmatpush1.bf16.msra.mxu0 0
        %4892 = vmatprep.subr.bf16.mxu0 0
        %4893 = vmatpush1.bf16.msra.mxu0 %v4865
        %4894 = vmatprep.subr.bf16.mxu0 0
        %4895 = vmatpush1.bf16.msra.mxu0 %v4864
        %4896 = vmatprep.subr.bf16.mxu0 0
        %4897 = vmatpush2.bf16.msra.mxu0 0
        %4898 = vmatprep.subr.bf16.mxu0 0
        %4899 = vmatpush2.bf16.msra.mxu0 0
        %4900 = vmatprep.subr.bf16.mxu0 0
        %4901 = vmatpush2.bf16.msra.mxu0 0
        %4902 = vmatprep.subr.bf16.mxu0 0
        %4903 = vmatpush2.bf16.msra.mxu0 0
        %4904 = vmatprep.subr.bf16.mxu0 0
        %4905 = vmatpush2.bf16.msra.mxu0 0
        %4906 = vmatprep.subr.bf16.mxu0 0
        %4907 = vmatpush2.bf16.msra.mxu0 0
        %4908 = vmatprep.subr.bf16.mxu0 0
        %4909 = vmatpush2.bf16.msra.mxu0 0
        %4910 = vmatprep.subr.bf16.mxu0 0
        %4911 = vmatpush2.bf16.msra.mxu0 0
        %4912 = vmatprep.mubr.bf16.mxu0 0
        %4913 = vmatmul.mubr.bf16.gmra.mxu0 %v4869
        %v4914 = vpop.f32.mrf.mxu0
        %v4915 = vadd.f32 0.0, %v4914
        %v4916 = vpop.f32.mrf.mxu0
        %v4917 = vpop.f32.mrf.mxu0
        %v4918 = vadd.f32 0.0, %v4917
        %v4919 = vpop.f32.mrf.mxu0
        %4920 = vmatprep.mubr.bf16.mxu0 0
        %4921 = vmatmul.mubr.bf16.gmra.mxu0 %v4872
        %v4922 = vpop.f32.mrf.mxu0
        %v4923 = vadd.f32 0.0, %v4922
        %v4924 = vpop.f32.mrf.mxu0
        %v4925 = vpop.f32.mrf.mxu0
        %v4926 = vadd.f32 0.0, %v4925
        %v4927 = vpop.f32.mrf.mxu0
        %4928 = vmatprep.mubr.bf16.mxu0 0
        %4929 = vmatmul.mubr.bf16.gmra.mxu0 %v4875
        %v4930 = vpop.f32.mrf.mxu0
        %v4931 = vadd.f32 0.0, %v4930
        %v4932 = vpop.f32.mrf.mxu0
        %v4933 = vpop.f32.mrf.mxu0
        %v4934 = vadd.f32 0.0, %v4933
        %v4935 = vpop.f32.mrf.mxu0
        %4936 = vmatprep.mubr.bf16.mxu0 0
        %4937 = vmatmul.mubr.bf16.gmra.mxu0 %v4878
        %v4938 = vpop.f32.mrf.mxu0
        %v4939 = vadd.f32 0.0, %v4938
        %v4940 = vpop.f32.mrf.mxu0
        %v4941 = vpop.f32.mrf.mxu0
        %v4942 = vadd.f32 0.0, %v4941
        %v4943 = vpop.f32.mrf.mxu0
        %4944 = vdwg.mxu0
        %v4945 = vadd.f32 %v4704, %v4915
        %v4946 = vadd.f32 %v4705, %v4918
        %v4947 = vadd.f32 %v4706, %v4923
        %v4948 = vadd.f32 %v4707, %v4926
        %v4949 = vadd.f32 %v4708, %v4931
        %v4950 = vadd.f32 %v4709, %v4934
        %v4951 = vadd.f32 %v4710, %v4939
        %v4952 = vadd.f32 %v4711, %v4942
        %v4953 = vld [vmem:[%s4582] sm:$0xe]
        %v4954 = vld [vmem:[%s4582 + $0x8] sm:$0xe]
        %v4955 = vld [vmem:[%s4582 + $0x10] sm:$0xe]
        %v4956 = vld [vmem:[%s4582 + $0x18] sm:$0xe]
        %v4957 = vld [vmem:[%s4582 + $0x20] sm:$0xe]
        %v4958 = vld [vmem:[%s4582 + $0x28] sm:$0xe]
        %v4959 = vld [vmem:[%s4582 + $0x30] sm:$0xe]
        %v4960 = vld [vmem:[%s4582 + $0x38] sm:$0xe]
        %v4977 = vrot.slane %v4953, 5
        %v4978 = vrot.slane %v4977, 4
        %v4979 = vrot.slane %v4713, 5
        %v4980 = vsel %vm1075, %v4978, %v4979
        %v4981 = vrot.slane %v4954, 5
        %v4982 = vrot.slane %v4981, 4
        %v4983 = vrot.slane %v4715, 5
        %v4984 = vsel %vm1075, %v4982, %v4983
        %v4985 = vrot.slane %v4955, 5
        %v4986 = vrot.slane %v4985, 4
        %v4987 = vrot.slane %v4717, 5
        %v4988 = vsel %vm1075, %v4986, %v4987
        %v4989 = vrot.slane %v4956, 5
        %v4990 = vrot.slane %v4989, 4
        %v4991 = vrot.slane %v4719, 5
        %v4992 = vsel %vm1075, %v4990, %v4991
        %v4993 = vrot.slane %v4957, 5
        %v4994 = vrot.slane %v4993, 4
        %v4995 = vrot.slane %v4721, 5
        %v4996 = vsel %vm1075, %v4994, %v4995
        %v4997 = vrot.slane %v4958, 5
        %v4998 = vrot.slane %v4997, 4
        %v4999 = vrot.slane %v4723, 5
        %v5000 = vsel %vm1075, %v4998, %v4999
        %v5001 = vrot.slane %v4959, 5
        %v5002 = vrot.slane %v5001, 4
        %v5003 = vrot.slane %v4725, 5
        %v5004 = vsel %vm1075, %v5002, %v5003
        %v5005 = vrot.slane %v4960, 5
        %v5006 = vrot.slane %v5005, 4
        %v5007 = vrot.slane %v4727, 5
        %v5008 = vsel %vm1075, %v5006, %v5007
        %v5009 = vld [vmem:[%s4 + $0x160] sm:$0xf]
        %v5010 = vld [vmem:[%s4 + $0x164] sm:$0xf]
        %v5011 = vld [vmem:[%s4 + $0x168] sm:$0xf]
        %v5012 = vld [vmem:[%s4 + $0x16c] sm:$0xf]
        %v5013 = vunpack.c.l.b16 %v4980
        %v5014 = vunpack.c.l.b16 %v4984
        %v5015 = vunpack.c.l.b16 %v4988
        %v5016 = vunpack.c.l.b16 %v4992
        %v5017 = vunpack.c.l.b16 %v4996
        %v5018 = vunpack.c.l.b16 %v5000
        %v5019 = vunpack.c.l.b16 %v5004
        %v5020 = vunpack.c.l.b16 %v5008
        %v5021 = vpack.c.b16 %v5014, %v5013
        %v5022 = vpack.c.b16 %v5016, %v5015
        %v5023 = vpack.c.b16 %v5018, %v5017
        %v5024 = vpack.c.b16 %v5020, %v5019
        %v5029 = vunpack.c.l.b16 %v5009
        %v5030 = vunpack.c.l.b16 %v5010
        %v5031 = vunpack.c.l.b16 %v5011
        %v5032 = vunpack.c.l.b16 %v5012
        %v5033 = vpack.c.b16 %v5030, %v5029
        %v5034 = vpack.c.b16 %v5032, %v5031
        %v5038 = vsel %vm259, %v5021, 0
        %v5041 = vsel %vm259, %v5022, 0
        %v5044 = vsel %vm259, %v5023, 0
        %v5047 = vsel %vm259, %v5024, 0
        %5049 = vmatprep.subr.bf16.mxu0 0
        %5050 = vmatpush1.bf16.msra.mxu0 0
        %5051 = vmatprep.subr.bf16.mxu0 0
        %5052 = vmatpush1.bf16.msra.mxu0 0
        %5053 = vmatprep.subr.bf16.mxu0 0
        %5054 = vmatpush1.bf16.msra.mxu0 0
        %5055 = vmatprep.subr.bf16.mxu0 0
        %5056 = vmatpush1.bf16.msra.mxu0 0
        %5057 = vmatprep.subr.bf16.mxu0 0
        %5058 = vmatpush1.bf16.msra.mxu0 0
        %5059 = vmatprep.subr.bf16.mxu0 0
        %5060 = vmatpush1.bf16.msra.mxu0 0
        %5061 = vmatprep.subr.bf16.mxu0 0
        %5062 = vmatpush1.bf16.msra.mxu0 %v5034
        %5063 = vmatprep.subr.bf16.mxu0 0
        %5064 = vmatpush1.bf16.msra.mxu0 %v5033
        %5065 = vmatprep.subr.bf16.mxu0 0
        %5066 = vmatpush2.bf16.msra.mxu0 0
        %5067 = vmatprep.subr.bf16.mxu0 0
        %5068 = vmatpush2.bf16.msra.mxu0 0
        %5069 = vmatprep.subr.bf16.mxu0 0
        %5070 = vmatpush2.bf16.msra.mxu0 0
        %5071 = vmatprep.subr.bf16.mxu0 0
        %5072 = vmatpush2.bf16.msra.mxu0 0
        %5073 = vmatprep.subr.bf16.mxu0 0
        %5074 = vmatpush2.bf16.msra.mxu0 0
        %5075 = vmatprep.subr.bf16.mxu0 0
        %5076 = vmatpush2.bf16.msra.mxu0 0
        %5077 = vmatprep.subr.bf16.mxu0 0
        %5078 = vmatpush2.bf16.msra.mxu0 0
        %5079 = vmatprep.subr.bf16.mxu0 0
        %5080 = vmatpush2.bf16.msra.mxu0 0
        %5081 = vmatprep.mubr.bf16.mxu0 0
        %5082 = vmatmul.mubr.bf16.gmra.mxu0 %v5038
        %v5083 = vpop.f32.mrf.mxu0
        %v5084 = vadd.f32 0.0, %v5083
        %v5085 = vpop.f32.mrf.mxu0
        %v5086 = vpop.f32.mrf.mxu0
        %v5087 = vadd.f32 0.0, %v5086
        %v5088 = vpop.f32.mrf.mxu0
        %5089 = vmatprep.mubr.bf16.mxu0 0
        %5090 = vmatmul.mubr.bf16.gmra.mxu0 %v5041
        %v5091 = vpop.f32.mrf.mxu0
        %v5092 = vadd.f32 0.0, %v5091
        %v5093 = vpop.f32.mrf.mxu0
        %v5094 = vpop.f32.mrf.mxu0
        %v5095 = vadd.f32 0.0, %v5094
        %v5096 = vpop.f32.mrf.mxu0
        %5097 = vmatprep.mubr.bf16.mxu0 0
        %5098 = vmatmul.mubr.bf16.gmra.mxu0 %v5044
        %v5099 = vpop.f32.mrf.mxu0
        %v5100 = vadd.f32 0.0, %v5099
        %v5101 = vpop.f32.mrf.mxu0
        %v5102 = vpop.f32.mrf.mxu0
        %v5103 = vadd.f32 0.0, %v5102
        %v5104 = vpop.f32.mrf.mxu0
        %5105 = vmatprep.mubr.bf16.mxu0 0
        %5106 = vmatmul.mubr.bf16.gmra.mxu0 %v5047
        %v5107 = vpop.f32.mrf.mxu0
        %v5108 = vadd.f32 0.0, %v5107
        %v5109 = vpop.f32.mrf.mxu0
        %v5110 = vpop.f32.mrf.mxu0
        %v5111 = vadd.f32 0.0, %v5110
        %v5112 = vpop.f32.mrf.mxu0
        %5113 = vdwg.mxu0
        %v5114 = vadd.f32 %v4945, %v5084
        %v5115 = vadd.f32 %v4946, %v5087
        %v5116 = vadd.f32 %v4947, %v5092
        %v5117 = vadd.f32 %v4948, %v5095
        %v5118 = vadd.f32 %v4949, %v5100
        %v5119 = vadd.f32 %v4950, %v5103
        %v5120 = vadd.f32 %v4951, %v5108
        %v5121 = vadd.f32 %v4952, %v5111
        %v5122 = vld [vmem:[%s4582 + $0x4] sm:$0x3]
        %v5123 = vld [vmem:[%s4582 + $0xc] sm:$0x3]
        %v5124 = vld [vmem:[%s4582 + $0x14] sm:$0x3]
        %v5125 = vld [vmem:[%s4582 + $0x1c] sm:$0x3]
        %v5126 = vld [vmem:[%s4582 + $0x24] sm:$0x3]
        %v5127 = vld [vmem:[%s4582 + $0x2c] sm:$0x3]
        %v5128 = vld [vmem:[%s4582 + $0x34] sm:$0x3]
        %v5129 = vld [vmem:[%s4582 + $0x3c] sm:$0x3]
        %v5131 = vshrl.u32 %v4953, 16
        %v5133 = vrot.slane %v5131, 5
        %v5134 = vshll.u32 %v4953, 16
        %v5136 = vrot.slane %v5134, 6
        %v5137 = vor.u32 %v5133, %v5136
        %v5138 = vrot.slane %v5137, 4
        %v5140 = vshrl.u32 %v5122, 16
        %v5142 = vrot.slane %v5140, 5
        %v5143 = vshll.u32 %v5122, 16
        %v5145 = vrot.slane %v5143, 6
        %v5146 = vor.u32 %v5142, %v5145
        %v5147 = vsel %vm1231, %v5138, %v5146
        %v5149 = vshrl.u32 %v4954, 16
        %v5151 = vrot.slane %v5149, 5
        %v5152 = vshll.u32 %v4954, 16
        %v5154 = vrot.slane %v5152, 6
        %v5155 = vor.u32 %v5151, %v5154
        %v5156 = vrot.slane %v5155, 4
        %v5158 = vshrl.u32 %v5123, 16
        %v5160 = vrot.slane %v5158, 5
        %v5161 = vshll.u32 %v5123, 16
        %v5163 = vrot.slane %v5161, 6
        %v5164 = vor.u32 %v5160, %v5163
        %v5165 = vsel %vm1231, %v5156, %v5164
        %v5167 = vshrl.u32 %v4955, 16
        %v5169 = vrot.slane %v5167, 5
        %v5170 = vshll.u32 %v4955, 16
        %v5172 = vrot.slane %v5170, 6
        %v5173 = vor.u32 %v5169, %v5172
        %v5174 = vrot.slane %v5173, 4
        %v5176 = vshrl.u32 %v5124, 16
        %v5178 = vrot.slane %v5176, 5
        %v5179 = vshll.u32 %v5124, 16
        %v5181 = vrot.slane %v5179, 6
        %v5182 = vor.u32 %v5178, %v5181
        %v5183 = vsel %vm1231, %v5174, %v5182
        %v5185 = vshrl.u32 %v4956, 16
        %v5187 = vrot.slane %v5185, 5
        %v5188 = vshll.u32 %v4956, 16
        %v5190 = vrot.slane %v5188, 6
        %v5191 = vor.u32 %v5187, %v5190
        %v5192 = vrot.slane %v5191, 4
        %v5194 = vshrl.u32 %v5125, 16
        %v5196 = vrot.slane %v5194, 5
        %v5197 = vshll.u32 %v5125, 16
        %v5199 = vrot.slane %v5197, 6
        %v5200 = vor.u32 %v5196, %v5199
        %v5201 = vsel %vm1231, %v5192, %v5200
        %v5203 = vshrl.u32 %v4957, 16
        %v5205 = vrot.slane %v5203, 5
        %v5206 = vshll.u32 %v4957, 16
        %v5208 = vrot.slane %v5206, 6
        %v5209 = vor.u32 %v5205, %v5208
        %v5210 = vrot.slane %v5209, 4
        %v5212 = vshrl.u32 %v5126, 16
        %v5214 = vrot.slane %v5212, 5
        %v5215 = vshll.u32 %v5126, 16
        %v5217 = vrot.slane %v5215, 6
        %v5218 = vor.u32 %v5214, %v5217
        %v5219 = vsel %vm1231, %v5210, %v5218
        %v5221 = vshrl.u32 %v4958, 16
        %v5223 = vrot.slane %v5221, 5
        %v5224 = vshll.u32 %v4958, 16
        %v5226 = vrot.slane %v5224, 6
        %v5227 = vor.u32 %v5223, %v5226
        %v5228 = vrot.slane %v5227, 4
        %v5230 = vshrl.u32 %v5127, 16
        %v5232 = vrot.slane %v5230, 5
        %v5233 = vshll.u32 %v5127, 16
        %v5235 = vrot.slane %v5233, 6
        %v5236 = vor.u32 %v5232, %v5235
        %v5237 = vsel %vm1231, %v5228, %v5236
        %v5239 = vshrl.u32 %v4959, 16
        %v5241 = vrot.slane %v5239, 5
        %v5242 = vshll.u32 %v4959, 16
        %v5244 = vrot.slane %v5242, 6
        %v5245 = vor.u32 %v5241, %v5244
        %v5246 = vrot.slane %v5245, 4
        %v5248 = vshrl.u32 %v5128, 16
        %v5250 = vrot.slane %v5248, 5
        %v5251 = vshll.u32 %v5128, 16
        %v5253 = vrot.slane %v5251, 6
        %v5254 = vor.u32 %v5250, %v5253
        %v5255 = vsel %vm1231, %v5246, %v5254
        %v5257 = vshrl.u32 %v4960, 16
        %v5259 = vrot.slane %v5257, 5
        %v5260 = vshll.u32 %v4960, 16
        %v5262 = vrot.slane %v5260, 6
        %v5263 = vor.u32 %v5259, %v5262
        %v5264 = vrot.slane %v5263, 4
        %v5266 = vshrl.u32 %v5129, 16
        %v5268 = vrot.slane %v5266, 5
        %v5269 = vshll.u32 %v5129, 16
        %v5271 = vrot.slane %v5269, 6
        %v5272 = vor.u32 %v5268, %v5271
        %v5273 = vsel %vm1231, %v5264, %v5272
        %v5274 = vld [vmem:[%s4 + $0x170] sm:$0xf]
        %v5275 = vld [vmem:[%s4 + $0x174] sm:$0xf]
        %v5276 = vld [vmem:[%s4 + $0x178] sm:$0xf]
        %v5277 = vld [vmem:[%s4 + $0x17c] sm:$0xf]
        %v5278 = vunpack.c.l.b16 %v5147
        %v5279 = vunpack.c.l.b16 %v5165
        %v5280 = vunpack.c.l.b16 %v5183
        %v5281 = vunpack.c.l.b16 %v5201
        %v5282 = vunpack.c.l.b16 %v5219
        %v5283 = vunpack.c.l.b16 %v5237
        %v5284 = vunpack.c.l.b16 %v5255
        %v5285 = vunpack.c.l.b16 %v5273
        %v5286 = vpack.c.b16 %v5279, %v5278
        %v5287 = vpack.c.b16 %v5281, %v5280
        %v5288 = vpack.c.b16 %v5283, %v5282
        %v5289 = vpack.c.b16 %v5285, %v5284
        %v5294 = vunpack.c.l.b16 %v5274
        %v5295 = vunpack.c.l.b16 %v5275
        %v5296 = vunpack.c.l.b16 %v5276
        %v5297 = vunpack.c.l.b16 %v5277
        %v5298 = vpack.c.b16 %v5295, %v5294
        %v5299 = vpack.c.b16 %v5297, %v5296
        %v5303 = vsel %vm259, %v5286, 0
        %v5306 = vsel %vm259, %v5287, 0
        %v5309 = vsel %vm259, %v5288, 0
        %v5312 = vsel %vm259, %v5289, 0
        %5314 = vmatprep.subr.bf16.mxu0 0
        %5315 = vmatpush1.bf16.msra.mxu0 0
        %5316 = vmatprep.subr.bf16.mxu0 0
        %5317 = vmatpush1.bf16.msra.mxu0 0
        %5318 = vmatprep.subr.bf16.mxu0 0
        %5319 = vmatpush1.bf16.msra.mxu0 0
        %5320 = vmatprep.subr.bf16.mxu0 0
        %5321 = vmatpush1.bf16.msra.mxu0 0
        %5322 = vmatprep.subr.bf16.mxu0 0
        %5323 = vmatpush1.bf16.msra.mxu0 0
        %5324 = vmatprep.subr.bf16.mxu0 0
        %5325 = vmatpush1.bf16.msra.mxu0 0
        %5326 = vmatprep.subr.bf16.mxu0 0
        %5327 = vmatpush1.bf16.msra.mxu0 %v5299
        %5328 = vmatprep.subr.bf16.mxu0 0
        %5329 = vmatpush1.bf16.msra.mxu0 %v5298
        %5330 = vmatprep.subr.bf16.mxu0 0
        %5331 = vmatpush2.bf16.msra.mxu0 0
        %5332 = vmatprep.subr.bf16.mxu0 0
        %5333 = vmatpush2.bf16.msra.mxu0 0
        %5334 = vmatprep.subr.bf16.mxu0 0
        %5335 = vmatpush2.bf16.msra.mxu0 0
        %5336 = vmatprep.subr.bf16.mxu0 0
        %5337 = vmatpush2.bf16.msra.mxu0 0
        %5338 = vmatprep.subr.bf16.mxu0 0
        %5339 = vmatpush2.bf16.msra.mxu0 0
        %5340 = vmatprep.subr.bf16.mxu0 0
        %5341 = vmatpush2.bf16.msra.mxu0 0
        %5342 = vmatprep.subr.bf16.mxu0 0
        %5343 = vmatpush2.bf16.msra.mxu0 0
        %5344 = vmatprep.subr.bf16.mxu0 0
        %5345 = vmatpush2.bf16.msra.mxu0 0
        %5346 = vmatprep.mubr.bf16.mxu0 0
        %5347 = vmatmul.mubr.bf16.gmra.mxu0 %v5303
        %v5348 = vpop.f32.mrf.mxu0
        %v5349 = vadd.f32 0.0, %v5348
        %v5350 = vpop.f32.mrf.mxu0
        %v5351 = vpop.f32.mrf.mxu0
        %v5352 = vadd.f32 0.0, %v5351
        %v5353 = vpop.f32.mrf.mxu0
        %5354 = vmatprep.mubr.bf16.mxu0 0
        %5355 = vmatmul.mubr.bf16.gmra.mxu0 %v5306
        %v5356 = vpop.f32.mrf.mxu0
        %v5357 = vadd.f32 0.0, %v5356
        %v5358 = vpop.f32.mrf.mxu0
        %v5359 = vpop.f32.mrf.mxu0
        %v5360 = vadd.f32 0.0, %v5359
        %v5361 = vpop.f32.mrf.mxu0
        %5362 = vmatprep.mubr.bf16.mxu0 0
        %5363 = vmatmul.mubr.bf16.gmra.mxu0 %v5309
        %v5364 = vpop.f32.mrf.mxu0
        %v5365 = vadd.f32 0.0, %v5364
        %v5366 = vpop.f32.mrf.mxu0
        %v5367 = vpop.f32.mrf.mxu0
        %v5368 = vadd.f32 0.0, %v5367
        %v5369 = vpop.f32.mrf.mxu0
        %5370 = vmatprep.mubr.bf16.mxu0 0
        %5371 = vmatmul.mubr.bf16.gmra.mxu0 %v5312
        %v5372 = vpop.f32.mrf.mxu0
        %v5373 = vadd.f32 0.0, %v5372
        %v5374 = vpop.f32.mrf.mxu0
        %v5375 = vpop.f32.mrf.mxu0
        %v5376 = vadd.f32 0.0, %v5375
        %v5377 = vpop.f32.mrf.mxu0
        %5378 = vdwg.mxu0
        %v5379 = vadd.f32 %v5114, %v5349
        %v5380 = vadd.f32 %v5115, %v5352
        %v5381 = vadd.f32 %v5116, %v5357
        %v5382 = vadd.f32 %v5117, %v5360
        %v5383 = vadd.f32 %v5118, %v5365
        %v5384 = vadd.f32 %v5119, %v5368
        %v5385 = vadd.f32 %v5120, %v5373
        %v5386 = vadd.f32 %v5121, %v5376
        %v5387 = vld [vmem:[%s4582] sm:$0xc]
        %v5388 = vld [vmem:[%s4582 + $0x8] sm:$0xc]
        %v5389 = vld [vmem:[%s4582 + $0x10] sm:$0xc]
        %v5390 = vld [vmem:[%s4582 + $0x18] sm:$0xc]
        %v5391 = vld [vmem:[%s4582 + $0x20] sm:$0xc]
        %v5392 = vld [vmem:[%s4582 + $0x28] sm:$0xc]
        %v5393 = vld [vmem:[%s4582 + $0x30] sm:$0xc]
        %v5394 = vld [vmem:[%s4582 + $0x38] sm:$0xc]
        %v5411 = vrot.slane %v5387, 6
        %v5412 = vrot.slane %v5411, 4
        %v5413 = vrot.slane %v5122, 6
        %v5414 = vsel %vm1515, %v5412, %v5413
        %v5415 = vrot.slane %v5388, 6
        %v5416 = vrot.slane %v5415, 4
        %v5417 = vrot.slane %v5123, 6
        %v5418 = vsel %vm1515, %v5416, %v5417
        %v5419 = vrot.slane %v5389, 6
        %v5420 = vrot.slane %v5419, 4
        %v5421 = vrot.slane %v5124, 6
        %v5422 = vsel %vm1515, %v5420, %v5421
        %v5423 = vrot.slane %v5390, 6
        %v5424 = vrot.slane %v5423, 4
        %v5425 = vrot.slane %v5125, 6
        %v5426 = vsel %vm1515, %v5424, %v5425
        %v5427 = vrot.slane %v5391, 6
        %v5428 = vrot.slane %v5427, 4
        %v5429 = vrot.slane %v5126, 6
        %v5430 = vsel %vm1515, %v5428, %v5429
        %v5431 = vrot.slane %v5392, 6
        %v5432 = vrot.slane %v5431, 4
        %v5433 = vrot.slane %v5127, 6
        %v5434 = vsel %vm1515, %v5432, %v5433
        %v5435 = vrot.slane %v5393, 6
        %v5436 = vrot.slane %v5435, 4
        %v5437 = vrot.slane %v5128, 6
        %v5438 = vsel %vm1515, %v5436, %v5437
        %v5439 = vrot.slane %v5394, 6
        %v5440 = vrot.slane %v5439, 4
        %v5441 = vrot.slane %v5129, 6
        %v5442 = vsel %vm1515, %v5440, %v5441
        %v5443 = vld [vmem:[%s4 + $0x180] sm:$0xf]
        %v5444 = vld [vmem:[%s4 + $0x184] sm:$0xf]
        %v5445 = vld [vmem:[%s4 + $0x188] sm:$0xf]
        %v5446 = vld [vmem:[%s4 + $0x18c] sm:$0xf]
        %v5447 = vunpack.c.l.b16 %v5414
        %v5448 = vunpack.c.l.b16 %v5418
        %v5449 = vunpack.c.l.b16 %v5422
        %v5450 = vunpack.c.l.b16 %v5426
        %v5451 = vunpack.c.l.b16 %v5430
        %v5452 = vunpack.c.l.b16 %v5434
        %v5453 = vunpack.c.l.b16 %v5438
        %v5454 = vunpack.c.l.b16 %v5442
        %v5455 = vpack.c.b16 %v5448, %v5447
        %v5456 = vpack.c.b16 %v5450, %v5449
        %v5457 = vpack.c.b16 %v5452, %v5451
        %v5458 = vpack.c.b16 %v5454, %v5453
        %v5463 = vunpack.c.l.b16 %v5443
        %v5464 = vunpack.c.l.b16 %v5444
        %v5465 = vunpack.c.l.b16 %v5445
        %v5466 = vunpack.c.l.b16 %v5446
        %v5467 = vpack.c.b16 %v5464, %v5463
        %v5468 = vpack.c.b16 %v5466, %v5465
        %v5472 = vsel %vm259, %v5455, 0
        %v5475 = vsel %vm259, %v5456, 0
        %v5478 = vsel %vm259, %v5457, 0
        %v5481 = vsel %vm259, %v5458, 0
        %5483 = vmatprep.subr.bf16.mxu0 0
        %5484 = vmatpush1.bf16.msra.mxu0 0
        %5485 = vmatprep.subr.bf16.mxu0 0
        %5486 = vmatpush1.bf16.msra.mxu0 0
        %5487 = vmatprep.subr.bf16.mxu0 0
        %5488 = vmatpush1.bf16.msra.mxu0 0
        %5489 = vmatprep.subr.bf16.mxu0 0
        %5490 = vmatpush1.bf16.msra.mxu0 0
        %5491 = vmatprep.subr.bf16.mxu0 0
        %5492 = vmatpush1.bf16.msra.mxu0 0
        %5493 = vmatprep.subr.bf16.mxu0 0
        %5494 = vmatpush1.bf16.msra.mxu0 0
        %5495 = vmatprep.subr.bf16.mxu0 0
        %5496 = vmatpush1.bf16.msra.mxu0 %v5468
        %5497 = vmatprep.subr.bf16.mxu0 0
        %5498 = vmatpush1.bf16.msra.mxu0 %v5467
        %5499 = vmatprep.subr.bf16.mxu0 0
        %5500 = vmatpush2.bf16.msra.mxu0 0
        %5501 = vmatprep.subr.bf16.mxu0 0
        %5502 = vmatpush2.bf16.msra.mxu0 0
        %5503 = vmatprep.subr.bf16.mxu0 0
        %5504 = vmatpush2.bf16.msra.mxu0 0
        %5505 = vmatprep.subr.bf16.mxu0 0
        %5506 = vmatpush2.bf16.msra.mxu0 0
        %5507 = vmatprep.subr.bf16.mxu0 0
        %5508 = vmatpush2.bf16.msra.mxu0 0
        %5509 = vmatprep.subr.bf16.mxu0 0
        %5510 = vmatpush2.bf16.msra.mxu0 0
        %5511 = vmatprep.subr.bf16.mxu0 0
        %5512 = vmatpush2.bf16.msra.mxu0 0
        %5513 = vmatprep.subr.bf16.mxu0 0
        %5514 = vmatpush2.bf16.msra.mxu0 0
        %5515 = vmatprep.mubr.bf16.mxu0 0
        %5516 = vmatmul.mubr.bf16.gmra.mxu0 %v5472
        %v5517 = vpop.f32.mrf.mxu0
        %v5518 = vadd.f32 0.0, %v5517
        %v5519 = vpop.f32.mrf.mxu0
        %v5520 = vpop.f32.mrf.mxu0
        %v5521 = vadd.f32 0.0, %v5520
        %v5522 = vpop.f32.mrf.mxu0
        %5523 = vmatprep.mubr.bf16.mxu0 0
        %5524 = vmatmul.mubr.bf16.gmra.mxu0 %v5475
        %v5525 = vpop.f32.mrf.mxu0
        %v5526 = vadd.f32 0.0, %v5525
        %v5527 = vpop.f32.mrf.mxu0
        %v5528 = vpop.f32.mrf.mxu0
        %v5529 = vadd.f32 0.0, %v5528
        %v5530 = vpop.f32.mrf.mxu0
        %5531 = vmatprep.mubr.bf16.mxu0 0
        %5532 = vmatmul.mubr.bf16.gmra.mxu0 %v5478
        %v5533 = vpop.f32.mrf.mxu0
        %v5534 = vadd.f32 0.0, %v5533
        %v5535 = vpop.f32.mrf.mxu0
        %v5536 = vpop.f32.mrf.mxu0
        %v5537 = vadd.f32 0.0, %v5536
        %v5538 = vpop.f32.mrf.mxu0
        %5539 = vmatprep.mubr.bf16.mxu0 0
        %5540 = vmatmul.mubr.bf16.gmra.mxu0 %v5481
        %v5541 = vpop.f32.mrf.mxu0
        %v5542 = vadd.f32 0.0, %v5541
        %v5543 = vpop.f32.mrf.mxu0
        %v5544 = vpop.f32.mrf.mxu0
        %v5545 = vadd.f32 0.0, %v5544
        %v5546 = vpop.f32.mrf.mxu0
        %5547 = vdwg.mxu0
        %v5548 = vadd.f32 %v5379, %v5518
        %v5549 = vadd.f32 %v5380, %v5521
        %v5550 = vadd.f32 %v5381, %v5526
        %v5551 = vadd.f32 %v5382, %v5529
        %v5552 = vadd.f32 %v5383, %v5534
        %v5553 = vadd.f32 %v5384, %v5537
        %v5554 = vadd.f32 %v5385, %v5542
        %v5555 = vadd.f32 %v5386, %v5545
        %v5556 = vpack.c.bf16 %v5549, %v5548
        %v5557 = vpack.c.bf16 %v5551, %v5550
        %v5558 = vpack.c.bf16 %v5553, %v5552
        %v5559 = vpack.c.bf16 %v5555, %v5554
        %v5564 = vunpack.c.l.b16 %v5556
        %v5565 = vunpack.c.h.b16 %v5556
        %v5566 = vunpack.c.l.b16 %v5557
        %v5567 = vunpack.c.h.b16 %v5557
        %v5568 = vunpack.c.l.b16 %v5558
        %v5569 = vunpack.c.h.b16 %v5558
        %v5570 = vunpack.c.l.b16 %v5559
        %v5571 = vunpack.c.h.b16 %v5559
        %v5572 = vpack.c.b16 %v5564, %v5564
        %v5573 = vpack.c.b16 %v5565, %v5565
        %v5574 = vpack.c.b16 %v5566, %v5566
        %v5575 = vpack.c.b16 %v5567, %v5567
        %v5576 = vpack.c.b16 %v5568, %v5568
        %v5577 = vpack.c.b16 %v5569, %v5569
        %v5578 = vpack.c.b16 %v5570, %v5570
        %v5579 = vpack.c.b16 %v5571, %v5571
        %vm5588 = vcmask 519168
        %5589 = vst.msk [vmem:[%s244] sm:$0xf] %vm5588, %v5572
        %5590 = vst.msk [vmem:[%s244 + $0x4] sm:$0xf] %vm5588, %v5573
        %5591 = vst.msk [vmem:[%s244 + $0x8] sm:$0xf] %vm5588, %v5574
        %5592 = vst.msk [vmem:[%s244 + $0xc] sm:$0xf] %vm5588, %v5575
        %5593 = vst.msk [vmem:[%s244 + $0x10] sm:$0xf] %vm5588, %v5576
        %5594 = vst.msk [vmem:[%s244 + $0x14] sm:$0xf] %vm5588, %v5577
        %5595 = vst.msk [vmem:[%s244 + $0x18] sm:$0xf] %vm5588, %v5578
        %5596 = vst.msk [vmem:[%s244 + $0x1c] sm:$0xf] %vm5588, %v5579
        %s5597 = sand.u32 %s159, 1
        %s5598 = scalar_lea.sflag [#allocation4], %s5597
        %s5599 = sand.u32 %s159, 1
        %s5600 = smul.addr %s5599, 32
        %s5601 = scalar_lea.vmem [#allocation3], %s5600
        // Predicated region
        $region45: #{tpu_custom_call.1} parent=43 // pred_check
          %p5602 = pneg %p169
        $region46: #{tpu_custom_call.1} parent=43 // pred_check_branch
          %5604 = sbr.rel (%p5602) target = $region48
        $region47: #{tpu_custom_call.1} parent=43 // pred_region
          %s5606 = ssub.s32 512, 512
          %5607 = vsyncadd %s5598, %s5606
          %s5608 = smul.addr %s20, 8
          %s5609 = smul.addr %s5608, 64
          %s5610 = scalar_lea.hbm %s6, %s5609
          %s5611 = sshll.u32 %s5601, 4
          %s5612 = int_to_ptr.vmem [resolvable:$true] %s5611
          %5617 = dma.vmem_to_hbm [thread:$0]  %s5612, 512, %s5610, %s5598, 64, 64, 4
        $region48: #{tpu_custom_call.1} parent=43 // pred_fallthru
          _
      $region44: #{tpu_custom_call.1} parent=5 // pred_fallthru
        _
      %p5618 = scmp.le.s32.totalorder 2, %s15
      // Predicated region
      $region49: #{tpu_custom_call.1} parent=5 // pred_check
        %p5619 = pneg %p5618
      $region50: #{tpu_custom_call.1} parent=5 // pred_check_branch
        %5621 = sbr.rel (%p5619) target = $region52
      $region51: #{tpu_custom_call.1} parent=5 // pred_region
        %s5622 = ssub.s32 %s15, 2
        // Predicated region
        $region53: #{tpu_custom_call.1} parent=51 // pred_check
          %p5623 = pneg %p175
        $region54: #{tpu_custom_call.1} parent=51 // pred_check_branch
          %5625 = sbr.rel (%p5623) target = $region56
        $region55: #{tpu_custom_call.1} parent=51 // pred_region
          %s5626 = sand.u32 %s160, 1
          %s5627 = scalar_lea.sflag [#allocation4], %s5626
          %s5628 = sand.u32 %s160, 1
          %s5629 = smul.addr %s5628, 32
          %s5630 = scalar_lea.vmem [#allocation3], %s5629
          %5631 = dma.done %s5627, 512
        $region56: #{tpu_custom_call.1} parent=51 // pred_fallthru
          _
      $region52: #{tpu_custom_call.1} parent=5 // pred_fallthru
        _
    $region6: #{tpu_custom_call.1} parent=1 // loop_footer
      %s19 = sadd.s32 1, %s15
    $region7: #{tpu_custom_call.1} parent=1 // loop_footer_branch
      %14 = sbr.rel target = $region3
    $region8: #{tpu_custom_call.1} parent=1 // loop_exit
      _
    %5632 = vsyncpa [#allocation4], 1
    %s5633 = scalar_lea.sflag [#allocation4], 1
    %5634 = vsyncpa %s5633, 1

</llo_original>
